<compile_context>
chip_gen: v7x
topology: tpu7x:2x2x1
jax: 0.10.0
libtpu: 0.0.40
codegen_flags: <defaults>
</compile_context>

<pallas_src>
import jax
import jax.numpy as jnp
from jax.experimental import pallas as pl
from jax.experimental.pallas import tpu as pltpu

LANE = 128


def _round8(x):
    return ((x + 7) // 8) * 8


def _weight_slab(params, hy, d, o):
    """Pack all weights/biases into one (rows, >=128) f32 slab; rows are 8-aligned."""
    r_wq = 0
    r_wc = r_wq + _round8(hy)          # linear_context.weight^T
    r_woih = r_wc + _round8(d)         # linear_out columns for [input | h1]
    r_woc = r_woih + _round8(hy + d)   # linear_out columns for c
    r_bq = r_woc + _round8(d)
    r_v = r_bq + 8
    r_bo = r_v + 8
    rows = r_bo + 8
    cols = LANE * ((max(hy, o) + LANE - 1) // LANE)

    wo_t = params["Wo"].T              # (D + Hy + D, O); column blocks ordered [c | input | h1]
    w = jnp.zeros((rows, cols), jnp.float32)
    w = w.at[r_wq:r_wq + hy, :hy].set(params["Wq"].T)      # (Hy, Hy)
    w = w.at[r_wc:r_wc + d, :hy].set(params["Wc"].T)       # (D, Hy)
    w = w.at[r_woih:r_woih + hy + d, :o].set(wo_t[d:, :])  # (Hy+D, O)  [input|h1] columns
    w = w.at[r_woc:r_woc + d, :o].set(wo_t[:d, :])         # (D, O)     c columns
    w = w.at[r_bq, :hy].set(params["bq"])
    w = w.at[r_v, :hy].set(params["v"][0])
    w = w.at[r_bo, :o].set(params["bo"])
    offs = (r_wq, r_wc, r_woih, r_woc, r_bq, r_v, r_bo)
    return w, offs


def _make_kernel(bb, t_len, s_len, hy, d, o, out_lanes, offs):
    """Kernel factory; bb = batches per grid step (trace-time constant)."""
    pad = out_lanes - o - s_len
    r_wq, r_wc, r_woih, r_woc, r_bq, r_v, r_bo = offs
    hp = jax.lax.Precision.HIGHEST
    f32 = jnp.float32

    def kernel(qh_ref, mb_ref, w_ref, out_ref):
        qh = qh_ref[...]                      # (bb, T, Hy+D)   [input | h1] rows
        mb = mb_ref[...]                      # (bb, S, D)      reduced memory bank
        h_t = qh[:, :, :hy]                   # (bb, T, Hy)

        # ---- carve the single packed weight slab (static slices, no extra DMAs) ----
        wq_t = w_ref[r_wq:r_wq + hy, :hy]            # (Hy, Hy)   linear_query.weight^T
        wc_t = w_ref[r_wc:r_wc + d, :hy]             # (D, Hy)    linear_context.weight^T
        wo_ih = w_ref[r_woih:r_woih + hy + d, :o]    # (Hy+D, O)  linear_out cols for [input|h1]
        wo_c = w_ref[r_woc:r_woc + d, :o]            # (D, O)     linear_out cols for c
        bq = w_ref[r_bq:r_bq + 1, :hy]               # (1, Hy)
        v_row = w_ref[r_v:r_v + 1, :hy]              # (1, Hy)
        bo = w_ref[r_bo:r_bo + 1, :o]                # (1, O)

        # ---- batched query / context projections (single batched MXU einsums) ----
        wq = jnp.einsum("bth,bhk->btk", h_t, jnp.broadcast_to(wq_t, (bb, hy, hy)),
                        preferred_element_type=f32, precision=hp) + bq           # (bb,T,Hy)
        uh = jnp.einsum("bsd,bdk->bsk", mb, jnp.broadcast_to(wc_t, (bb, d, hy)),
                        preferred_element_type=f32, precision=hp)                # (bb,S,Hy)

        # ---- additive attention scores + softmax over source positions ----
        wquh = jnp.tanh(wq[:, :, None, :] + uh[:, None, :, :])                   # (bb,T,S,Hy)
        scores = jnp.sum(wquh * v_row, axis=-1)                                   # (bb,T,S)
        m = jnp.max(scores, axis=-1, keepdims=True)
        e = jnp.exp(scores - m)
        align = e / jnp.sum(e, axis=-1, keepdims=True)                            # (bb,T,S)

        # ---- context bmm + fused output projection (split Wo; no feature concat) ----
        c = jnp.einsum("bts,bsd->btd", align, mb,
                       preferred_element_type=f32, precision=hp)                  # (bb,T,D)
        attn = (jnp.einsum("btd,bdo->bto", c, jnp.broadcast_to(wo_c, (bb, d, o)),
                           preferred_element_type=f32, precision=hp)
                + jnp.einsum("btf,bfo->bto", qh, jnp.broadcast_to(wo_ih, (bb, hy + d, o)),
                             preferred_element_type=f32, precision=hp)
                + bo)                                                              # (bb,T,O)

        # ---- one lane-dense, full-width store: [attn | align | zero pad] ----
        pieces = [attn, align]
        if pad > 0:
            pieces.append(jnp.zeros((bb, t_len, pad), f32))
        out_ref[...] = jnp.concatenate(pieces, axis=-1)

    return kernel


def _pick_num_blocks(batch, t_len):
    """1 block for small problems; ~<=1024 rows per block for large ones (DMA/compute overlap)."""
    rows = batch * t_len
    if rows <= 1024:
        return 1
    want = pl.cdiv(rows, 1024)
    for nb in range(want, batch + 1):
        if batch % nb == 0:
            return nb
    return 1


def global_attention_forward(params, inp, h1, memory_bank, dim_out,
                             hidR, hidRx, hidRy, *, num_blocks=None):
    """GlobalAttention forward.

    inp:          (T, B, hidRy)  float32   (PyTorch (seq, batch, feature) convention)
    h1:           (T, B, D)      float32,  D = hidRx + hidR
    memory_bank:  (168, B, D)    float32   (must have exactly 7*24 source steps)
    Returns (attn_h (B, T, dim_out), align_vectors (B, T, 13)).

    num_blocks: number of grid steps the batch is split into (any divisor of B).
    Default: auto (1 for small problems).  On v7x pass num_blocks>=2 so the parallel grid
    axis shards across both TensorCores; for large B multiple blocks enable DMA pipelining.
    """
    D = hidRx + hidR
    hy = hidRy
    T, B = inp.shape[0], inp.shape[1]
    if memory_bank.shape[0] != 7 * 24:
        raise ValueError("memory_bank must have exactly 7*24=168 source steps, got "
                         f"{memory_bank.shape[0]}")
    if num_blocks is None:
        num_blocks = _pick_num_blocks(B, T)
    if B % num_blocks != 0:
        raise ValueError("num_blocks must divide the batch size")
    bb = B // num_blocks

    # ---- 13-entry reduced memory bank, built on the ORIGINAL (168, B, D) layout ----
    mb_aj = memory_bank[-6:]          # last 6 source steps            (6, B, D)
    mb_days = memory_bank[23::24]     # last hour of each of 7 days    (7, B, D)
    mbank = jnp.concatenate([mb_aj, mb_days], axis=0)     # (S=13, B, D)
    mbank = jnp.transpose(mbank, (1, 0, 2))               # (B, S, D)
    S = mbank.shape[1]

    # ---- pre-concatenated activation slab: [input | h1], batch-major 3-D ----
    qh = jnp.concatenate([jnp.transpose(inp, (1, 0, 2)),
                          jnp.transpose(h1, (1, 0, 2))], axis=-1)   # (B, T, Hy+D)

    # ---- one packed weight/bias slab ----
    w_slab, offs = _weight_slab(params, hy, D, dim_out)
    w_rows, w_cols = w_slab.shape

    out_lanes = LANE * pl.cdiv(dim_out + S, LANE)
    kernel = _make_kernel(bb, T, S, hy, D, dim_out, out_lanes, offs)

    # ---- scheduler hints ----
    flops = 2 * B * (T * hy * hy + S * D * hy + T * S * hy + T * S * D
                     + T * (2 * D + hy) * dim_out)
    transcendentals = B * T * S * (hy + 1)                 # tanh + exp
    bytes_accessed = 4 * (B * T * (hy + D) + B * S * D + w_rows * w_cols
                          + B * T * out_lanes)

    block_bytes = 4 * (bb * T * (hy + D) + bb * S * D + w_rows * w_cols
                       + bb * T * out_lanes)
    vmem_limit = int(min(64 * 2 ** 20, max(16 * 2 ** 20, 8 * block_bytes)))

    out = pl.pallas_call(
        kernel,
        out_shape=jax.ShapeDtypeStruct((B, T, out_lanes), jnp.float32),
        grid=(num_blocks,),
        in_specs=[
            pl.BlockSpec((bb, T, hy + D), lambda g: (g, 0, 0)),   # activation slab
            pl.BlockSpec((bb, S, D), lambda g: (g, 0, 0)),        # reduced memory bank
            pl.BlockSpec((w_rows, w_cols), lambda g: (0, 0)),     # packed weights (shared)
        ],
        out_specs=pl.BlockSpec((bb, T, out_lanes), lambda g: (g, 0, 0)),
        compiler_params=pltpu.CompilerParams(
            dimension_semantics=("parallel",),
            vmem_limit_bytes=vmem_limit),
        cost_estimate=pl.CostEstimate(flops=flops, transcendentals=transcendentals,
                                      bytes_accessed=bytes_accessed),
    )(qh, mbank, w_slab)

    attn_h = out[..., :dim_out]              # lanes [0:dim_out]
    align = out[..., dim_out:dim_out + S]    # lanes [dim_out:dim_out+S]
    return attn_h, align


def _reference(params, inp, h1, memory_bank, dim_out, hidR, hidRx, hidRy):
    """Pure-JAX reference mirroring the PyTorch forward (HIGHEST matmul precision)."""
    hp = jax.lax.Precision.HIGHEST
    D = hidRx + hidR
    inp = jnp.transpose(inp, (1, 0, 2))
    h1 = jnp.transpose(h1, (1, 0, 2))
    mb = jnp.transpose(memory_bank, (1, 0, 2))
    B = mb.shape[0]
    mb1 = mb.reshape(B, 7, 24, D)[:, :, -1, :]
    mbank = jnp.concatenate([mb[:, -6:, :], mb1], axis=1)
    wq = jnp.dot(inp, params["Wq"].T, precision=hp) + params["bq"]
    uh = jnp.dot(mbank, params["Wc"].T, precision=hp)
    wquh = jnp.tanh(wq[:, :, None, :] + uh[:, None, :, :])
    scores = jnp.einsum("btsh,h->bts", wquh, params["v"][0], precision=hp)
    align = jax.nn.softmax(scores, axis=-1)
    c = jnp.einsum("bts,bsd->btd", align, mbank, precision=hp)
    concat = jnp.concatenate([c, inp, h1], axis=-1)
    attn = jnp.dot(concat, params["Wo"].T, precision=hp) + params["bo"]
    return attn, align


if __name__ == "__main__":
    # args.hidRNN=16, args.hidRNNx=16, args.hidRNNy=32, dim_out=8
    hidR, hidRx, hidRy = 16, 16, 32
    D = hidRx + hidR
    dim_out = 8
    B, T, SRC = 2, 4, 7 * 24   # memory_bank source length must be exactly 7*24 = 168

    key = jax.random.PRNGKey(0)
    ks = jax.random.split(key, 9)
    scale = 0.1
    params = dict(
        Wq=scale * jax.random.normal(ks[0], (hidRy, hidRy), jnp.float32),
        bq=scale * jax.random.normal(ks[1], (hidRy,), jnp.float32),
        Wc=scale * jax.random.normal(ks[2], (hidRy, D), jnp.float32),
        v=scale * jax.random.normal(ks[3], (1, hidRy), jnp.float32),
        Wo=scale * jax.random.normal(ks[4], (dim_out, hidRy + 2 * D), jnp.float32),
        bo=scale * jax.random.normal(ks[5], (dim_out,), jnp.float32),
    )
    inp = jax.random.normal(ks[6], (T, B, hidRy), jnp.float32)
    h1 = jax.random.normal(ks[7], (T, B, D), jnp.float32)
    memory_bank = jax.random.normal(ks[8], (SRC, B, D), jnp.float32)

    attn_h, align = global_attention_forward(params, inp, h1, memory_bank,
                                             dim_out, hidR, hidRx, hidRy)
    jax.block_until_ready((attn_h, align))

    ref_attn, ref_align = _reference(params, inp, h1, memory_bank,
                                     dim_out, hidR, hidRx, hidRy)
    assert attn_h.shape == (B, T, dim_out) and align.shape == (B, T, 13)
    assert jnp.allclose(attn_h, ref_attn, atol=2e-3, rtol=2e-3), \
        float(jnp.max(jnp.abs(attn_h - ref_attn)))
    assert jnp.allclose(align, ref_align, atol=2e-3, rtol=2e-3), \
        float(jnp.max(jnp.abs(align - ref_align)))

    print("KERNEL_OK")
</pallas_src>

<mosaic_0001>
module attributes {stable_mosaic.version = 11 : i64} {
  func.func @kernel(%arg0: i32, %arg1: memref<2x4x64xf32, #tpu.memory_space<vmem>>, %arg2: memref<2x13x32xf32, #tpu.memory_space<vmem>>, %arg3: memref<184x128xf32, #tpu.memory_space<vmem>>, %arg4: memref<2x4x128xf32, #tpu.memory_space<vmem>>) attributes {dimension_semantics = [#tpu.dimension_semantics<parallel>], iteration_bounds = array<i64: 1>, scalar_prefetch = 0 : i64, scratch_operands = 0 : i64, tpu.core_type = #tpu.core_type<tc>, window_params = [{transform_indices = @transform_0, window_bounds = array<i64: 2, 4, 64>}, {transform_indices = @transform_1, window_bounds = array<i64: 2, 13, 32>}, {pipeline_mode = #tpu.pipeline_mode<synchronous>, transform_indices = @transform_2, window_bounds = array<i64: 184, 128>}, {transform_indices = @transform_3, window_bounds = array<i64: 2, 4, 128>}]} {
    %c0 = arith.constant 0 : index
    %c0_0 = arith.constant 0 : index
    %c0_1 = arith.constant 0 : index
    %0 = vector.load %arg1[%c0, %c0_0, %c0_1] : memref<2x4x64xf32, #tpu.memory_space<vmem>>, vector<2x4x64xf32>
    %c0_2 = arith.constant 0 : index
    %c0_3 = arith.constant 0 : index
    %c0_4 = arith.constant 0 : index
    %1 = vector.load %arg2[%c0_2, %c0_3, %c0_4] : memref<2x13x32xf32, #tpu.memory_space<vmem>>, vector<2x13x32xf32>
    %2 = vector.extract_strided_slice %0 {offsets = [0, 0, 0], sizes = [2, 4, 32], strides = [1, 1, 1]} : vector<2x4x64xf32> to vector<2x4x32xf32>
    %c0_5 = arith.constant 0 : index
    %c0_6 = arith.constant 0 : index
    %3 = vector.load %arg3[%c0_5, %c0_6] : memref<184x128xf32, #tpu.memory_space<vmem>>, vector<32x32xf32>
    %c32 = arith.constant 32 : index
    %c0_7 = arith.constant 0 : index
    %4 = vector.load %arg3[%c32, %c0_7] : memref<184x128xf32, #tpu.memory_space<vmem>>, vector<32x32xf32>
    %c64 = arith.constant 64 : index
    %c0_8 = arith.constant 0 : index
    %5 = vector.load %arg3[%c64, %c0_8] : memref<184x128xf32, #tpu.memory_space<vmem>>, vector<64x8xf32>
    %c128 = arith.constant 128 : index
    %c0_9 = arith.constant 0 : index
    %6 = vector.load %arg3[%c128, %c0_9] : memref<184x128xf32, #tpu.memory_space<vmem>>, vector<32x8xf32>
    %c160 = arith.constant 160 : index
    %c0_10 = arith.constant 0 : index
    %7 = vector.load %arg3[%c160, %c0_10] : memref<184x128xf32, #tpu.memory_space<vmem>>, vector<1x32xf32>
    %c168 = arith.constant 168 : index
    %c0_11 = arith.constant 0 : index
    %8 = vector.load %arg3[%c168, %c0_11] : memref<184x128xf32, #tpu.memory_space<vmem>>, vector<1x32xf32>
    %c176 = arith.constant 176 : index
    %c0_12 = arith.constant 0 : index
    %9 = vector.load %arg3[%c176, %c0_12] : memref<184x128xf32, #tpu.memory_space<vmem>>, vector<1x8xf32>
    %10 = vector.shape_cast %3 : vector<32x32xf32> to vector<1x32x32xf32>
    %11 = vector.broadcast %10 : vector<1x32x32xf32> to vector<2x32x32xf32>
    "tpu.trace_start"() <{level = 10 : i32, message = "bth,bhk->btk"}> : () -> ()
    %cst = arith.constant dense<0.000000e+00> : vector<2x4x32xf32>
    %12 = tpu.matmul %2, %11, %cst {dimension_numbers = #tpu.dot_dimension_numbers<[2], [1], [1], [2], [0, 0, 0, 1, 1, 2], [0], [0]>, precision = #tpu.contract_precision<fp32>} : vector<2x4x32xf32>, vector<2x32x32xf32>, vector<2x4x32xf32> -> vector<2x4x32xf32>
    "tpu.trace_stop"() : () -> ()
    %13 = vector.shape_cast %7 : vector<1x32xf32> to vector<1x1x32xf32>
    %14 = vector.broadcast %13 : vector<1x1x32xf32> to vector<2x4x32xf32>
    %15 = arith.addf %12, %14 : vector<2x4x32xf32>
    %16 = vector.shape_cast %4 : vector<32x32xf32> to vector<1x32x32xf32>
    %17 = vector.broadcast %16 : vector<1x32x32xf32> to vector<2x32x32xf32>
    "tpu.trace_start"() <{level = 10 : i32, message = "bsd,bdk->bsk"}> : () -> ()
    %cst_13 = arith.constant dense<0.000000e+00> : vector<2x13x32xf32>
    %18 = tpu.matmul %1, %17, %cst_13 {dimension_numbers = #tpu.dot_dimension_numbers<[2], [1], [1], [2], [0, 0, 0, 1, 1, 2], [0], [0]>, precision = #tpu.contract_precision<fp32>} : vector<2x13x32xf32>, vector<2x32x32xf32>, vector<2x13x32xf32> -> vector<2x13x32xf32>
    "tpu.trace_stop"() : () -> ()
    %19 = vector.shape_cast %15 : vector<2x4x32xf32> to vector<2x4x1x32xf32>
    %20 = vector.shape_cast %18 : vector<2x13x32xf32> to vector<2x1x13x32xf32>
    %21 = vector.broadcast %19 : vector<2x4x1x32xf32> to vector<2x4x13x32xf32>
    %22 = vector.broadcast %20 : vector<2x1x13x32xf32> to vector<2x4x13x32xf32>
    %23 = arith.addf %21, %22 : vector<2x4x13x32xf32>
    %24 = math.tanh %23 : vector<2x4x13x32xf32>
    %25 = vector.shape_cast %8 : vector<1x32xf32> to vector<1x1x1x32xf32>
    %26 = vector.broadcast %25 : vector<1x1x1x32xf32> to vector<2x4x13x32xf32>
    %27 = arith.mulf %24, %26 : vector<2x4x13x32xf32>
    %cst_14 = arith.constant dense<0.000000e+00> : vector<2x4x13xf32>
    %28 = vector.multi_reduction <add>, %27, %cst_14 [3] : vector<2x4x13x32xf32> to vector<2x4x13xf32>
    %cst_15 = arith.constant dense<0xFF800000> : vector<2x4xf32>
    %29 = vector.multi_reduction <maximumf>, %28, %cst_15 [2] : vector<2x4x13xf32> to vector<2x4xf32>
    %30 = vector.shape_cast %29 : vector<2x4xf32> to vector<2x4x1xf32>
    %31 = vector.broadcast %30 : vector<2x4x1xf32> to vector<2x4x13xf32>
    %32 = arith.subf %28, %31 : vector<2x4x13xf32>
    %33 = math.exp %32 : vector<2x4x13xf32>
    %cst_16 = arith.constant dense<0.000000e+00> : vector<2x4xf32>
    %34 = vector.multi_reduction <add>, %33, %cst_16 [2] : vector<2x4x13xf32> to vector<2x4xf32>
    %35 = vector.shape_cast %34 : vector<2x4xf32> to vector<2x4x1xf32>
    %36 = vector.broadcast %35 : vector<2x4x1xf32> to vector<2x4x13xf32>
    %37 = arith.divf %33, %36 : vector<2x4x13xf32>
    "tpu.trace_start"() <{level = 10 : i32, message = "bts,bsd->btd"}> : () -> ()
    %cst_17 = arith.constant dense<0.000000e+00> : vector<2x4x32xf32>
    %38 = tpu.matmul %37, %1, %cst_17 {dimension_numbers = #tpu.dot_dimension_numbers<[2], [1], [1], [2], [0, 0, 0, 1, 1, 2], [0], [0]>, precision = #tpu.contract_precision<fp32>} : vector<2x4x13xf32>, vector<2x13x32xf32>, vector<2x4x32xf32> -> vector<2x4x32xf32>
    "tpu.trace_stop"() : () -> ()
    %39 = vector.shape_cast %6 : vector<32x8xf32> to vector<1x32x8xf32>
    %40 = vector.broadcast %39 : vector<1x32x8xf32> to vector<2x32x8xf32>
    "tpu.trace_start"() <{level = 10 : i32, message = "btd,bdo->bto"}> : () -> ()
    %cst_18 = arith.constant dense<0.000000e+00> : vector<2x4x8xf32>
    %41 = tpu.matmul %38, %40, %cst_18 {dimension_numbers = #tpu.dot_dimension_numbers<[2], [1], [1], [2], [0, 0, 0, 1, 1, 2], [0], [0]>, precision = #tpu.contract_precision<fp32>} : vector<2x4x32xf32>, vector<2x32x8xf32>, vector<2x4x8xf32> -> vector<2x4x8xf32>
    "tpu.trace_stop"() : () -> ()
    %42 = vector.shape_cast %5 : vector<64x8xf32> to vector<1x64x8xf32>
    %43 = vector.broadcast %42 : vector<1x64x8xf32> to vector<2x64x8xf32>
    "tpu.trace_start"() <{level = 10 : i32, message = "btf,bfo->bto"}> : () -> ()
    %cst_19 = arith.constant dense<0.000000e+00> : vector<2x4x8xf32>
    %44 = tpu.matmul %0, %43, %cst_19 {dimension_numbers = #tpu.dot_dimension_numbers<[2], [1], [1], [2], [0, 0, 0, 1, 1, 2], [0], [0]>, precision = #tpu.contract_precision<fp32>} : vector<2x4x64xf32>, vector<2x64x8xf32>, vector<2x4x8xf32> -> vector<2x4x8xf32>
    "tpu.trace_stop"() : () -> ()
    %45 = arith.addf %41, %44 : vector<2x4x8xf32>
    %46 = vector.shape_cast %9 : vector<1x8xf32> to vector<1x1x8xf32>
    %47 = vector.broadcast %46 : vector<1x1x8xf32> to vector<2x4x8xf32>
    %48 = arith.addf %45, %47 : vector<2x4x8xf32>
    %cst_20 = arith.constant 0.000000e+00 : f32
    %49 = vector.broadcast %cst_20 : f32 to vector<2x4x107xf32>
    %50 = tpu.concatenate %48, %37, %49 in 2 : vector<2x4x8xf32>, vector<2x4x13xf32>, vector<2x4x107xf32> -> vector<2x4x128xf32>
    %c0_21 = arith.constant 0 : index
    %c0_22 = arith.constant 0 : index
    %c0_23 = arith.constant 0 : index
    %51 = vector.load %arg4[%c0_21, %c0_22, %c0_23] : memref<2x4x128xf32, #tpu.memory_space<vmem>>, vector<2x4x128xf32>
    tpu.vector_store %arg4[%c0_21, %c0_22, %c0_23], %50 {strides = array<i32>} : memref<2x4x128xf32, #tpu.memory_space<vmem>>, vector<2x4x128xf32>,
    return
  }
  func.func @transform_0(%arg0: i32) -> (i32, i32, i32) {
    %c0_i32 = arith.constant 0 : i32
    %c0_i32_0 = arith.constant 0 : i32
    %c0_i32_1 = arith.constant 0 : i32
    return %arg0, %c0_i32, %c0_i32_0 : i32, i32, i32
  }
  func.func @transform_1(%arg0: i32) -> (i32, i32, i32) {
    %c0_i32 = arith.constant 0 : i32
    %c0_i32_0 = arith.constant 0 : i32
    %c0_i32_1 = arith.constant 0 : i32
    return %arg0, %c0_i32, %c0_i32_0 : i32, i32, i32
  }
  func.func @transform_2(%arg0: i32) -> (i32, i32) {
    %c0_i32 = arith.constant 0 : i32
    %c0_i32_0 = arith.constant 0 : i32
    %c0_i32_1 = arith.constant 0 : i32
    return %c0_i32, %c0_i32_0 : i32, i32
  }
  func.func @transform_3(%arg0: i32) -> (i32, i32, i32) {
    %c0_i32 = arith.constant 0 : i32
    %c0_i32_0 = arith.constant 0 : i32
    %c0_i32_1 = arith.constant 0 : i32
    return %arg0, %c0_i32, %c0_i32_0 : i32, i32, i32
  }
}

</mosaic_0001>

<llo_original>
// kernel: tpu_custom_call.1
$region0: #{tpu_custom_call.1}
  #allocation0 [shape = 'u32[]', space=smem, size = 0x4, offset = 0x4, fixed_abs, tag = 'smem constant byte address 0x4 - core index']
  #allocation1 [shape = 'u32[144,128]{1,0:T(1,128)}', space=vmem, size = 0x12000, scoped, tag = 'internal scratch']
  %s0 = inlined_call_operand.vmem [shape: f32[2,4,64], index: 0, kind: input, shape index: {}]
  %s1 = inlined_call_operand.vmem [shape: f32[2,13,32], index: 1, kind: input, shape index: {}]
  %s2 = inlined_call_operand.hbm [shape: f32[184,128], index: 2, kind: input, shape index: {}]
  %s3 = inlined_call_operand.hbm [shape: f32[2,4,128], index: 3, kind: output, shape index: {}]
  %s4 = sld [smem:[#allocation0]]
  $region26: #{tpu_custom_call.1} parent=0
    _
  %s6 = ssub.s32 1, %s4
  %s7 = scalar_select 0, %s6, %s4
  $region1: #{tpu_custom_call.1} parent=0
    #allocation2 [shape = 'u8[94208]{0}', space=vmem, size = 0x17000, scoped, tag = 'input window, operand 2, single buffered']
    #allocation3 [shape = 's32[1]{0}', space=sflag, size = 0x4, scoped, tag = 'scoped memory for tpu_custom_call.1']
    #allocation4 [shape = 's32[1]{0}', space=sflag, size = 0x4, scoped, tag = 'scoped memory for tpu_custom_call.1']
    #allocation5 [shape = 'u8[4096]{0}', space=vmem, size = 0x1000, scoped, tag = 'output window, operand 0, single buffered']
    %8 = vsyncpa [#allocation3], 0
    %9 = vsyncpa [#allocation4], 0
    // Predicated region
    $region2: #{tpu_custom_call.1} parent=1 // pred_check
      _
    $region3: #{tpu_custom_call.1} parent=1 // pred_check_branch
      %11 = sbr.rel (0) target = $region5
    $region4: #{tpu_custom_call.1} parent=1 // pred_region
      _
    $region5: #{tpu_custom_call.1} parent=1 // pred_fallthru
      _
    // Predicated region
    $region6: #{tpu_custom_call.1} parent=1 // pred_check
      _
    $region7: #{tpu_custom_call.1} parent=1 // pred_check_branch
      %13 = sbr.rel (0) target = $region9
    $region8: #{tpu_custom_call.1} parent=1 // pred_region
      _
    $region9: #{tpu_custom_call.1} parent=1 // pred_fallthru
      _
    // Predicated region
    $region10: #{tpu_custom_call.1} parent=1 // pred_check
      _
    $region11: #{tpu_custom_call.1} parent=1 // pred_check_branch
      %15 = sbr.rel (0) target = $region13
    $region12: #{tpu_custom_call.1} parent=1 // pred_region
      %s17 = ssub.s32 2944, 2944
      %18 = vsyncadd [#allocation3], %s17
      %s19 = sshll.u32 [#allocation2], 4
      %s20 = int_to_ptr.vmem [resolvable:$true] %s19
      %25 = dma.hbm_to_vmem [thread:$0]  %s2, 2944, %s20, [#allocation3], 128, 128, 8
    $region13: #{tpu_custom_call.1} parent=1 // pred_fallthru
      _
    // Predicated region
    $region14: #{tpu_custom_call.1} parent=1 // pred_check
      _
    $region15: #{tpu_custom_call.1} parent=1 // pred_check_branch
      %27 = sbr.rel (0) target = $region17
    $region16: #{tpu_custom_call.1} parent=1 // pred_region
      %28 = dma.done [#allocation3], 2944
    $region17: #{tpu_custom_call.1} parent=1 // pred_fallthru
      _
    %v29 = vld [vmem:[%s0] sm:$0xf]
    %v30 = vld [vmem:[%s0 + $0x4] sm:$0xf]
    %v31 = vld [vmem:[%s1] sm:$0xff]
    %v32 = vld [vmem:[%s1 + $0x8] sm:$0x1f]
    %v33 = vld [vmem:[%s1 + $0x10] sm:$0xff]
    %v34 = vld [vmem:[%s1 + $0x18] sm:$0x1f]
    %v35 = vld [vmem:[#allocation2] sm:$0xff]
    %v36 = vld [vmem:[#allocation2 + $0x8] sm:$0xff]
    %v37 = vld [vmem:[#allocation2 + $0x10] sm:$0xff]
    %v38 = vld [vmem:[#allocation2 + $0x18] sm:$0xff]
    %v39 = vld [vmem:[#allocation2 + $0x20] sm:$0xff]
    %v40 = vld [vmem:[#allocation2 + $0x28] sm:$0xff]
    %v41 = vld [vmem:[#allocation2 + $0x30] sm:$0xff]
    %v42 = vld [vmem:[#allocation2 + $0x38] sm:$0xff]
    %v43 = vld [vmem:[#allocation2 + $0x40] sm:$0xff]
    %v44 = vld [vmem:[#allocation2 + $0x48] sm:$0xff]
    %v45 = vld [vmem:[#allocation2 + $0x50] sm:$0xff]
    %v46 = vld [vmem:[#allocation2 + $0x58] sm:$0xff]
    %v47 = vld [vmem:[#allocation2 + $0x60] sm:$0xff]
    %v48 = vld [vmem:[#allocation2 + $0x68] sm:$0xff]
    %v49 = vld [vmem:[#allocation2 + $0x70] sm:$0xff]
    %v50 = vld [vmem:[#allocation2 + $0x78] sm:$0xff]
    %v51 = vld [vmem:[#allocation2 + $0x80] sm:$0xff]
    %v52 = vld [vmem:[#allocation2 + $0x88] sm:$0xff]
    %v53 = vld [vmem:[#allocation2 + $0x90] sm:$0xff]
    %v54 = vld [vmem:[#allocation2 + $0x98] sm:$0xff]
    %v55 = vld [vmem:[#allocation2 + $0xa0] sm:$0x1]
    %v56 = vld [vmem:[#allocation2 + $0xa8] sm:$0x1]
    %v57 = vld [vmem:[#allocation2 + $0xb0] sm:$0x1]
    %v58 = vlaneseq
    %v59 = vshrl.u32 %v58, 7
    %v60 = vsub.s32 0, %v59
    %v61 = vrot.slane %v55, %v60
    %vm62 = vcmask 261120
    %v64 = vsel %vm62, %v29, 0
    %66 = vmatprep.subr.mxu0 0.0
    %v67 = vand.u32 %v35, 4294901760
    %68 = vmatpush1.msra.mxu0 %v67
    %69 = vmatprep.subr.mxu0 0.0
    %v70 = vand.u32 %v36, 4294901760
    %71 = vmatpush1.msra.mxu0 %v70
    %72 = vmatprep.subr.mxu0 0.0
    %v73 = vand.u32 %v37, 4294901760
    %74 = vmatpush1.msra.mxu0 %v73
    %75 = vmatprep.subr.mxu0 0.0
    %v76 = vand.u32 %v38, 4294901760
    %77 = vmatpush1.msra.mxu0 %v76
    %78 = vmatprep.subr.mxu0 0.0
    %79 = vmatpush1.msra.mxu0 0.0
    %80 = vmatprep.subr.mxu0 0.0
    %81 = vmatpush1.msra.mxu0 0.0
    %82 = vmatprep.subr.mxu0 0.0
    %83 = vmatpush1.msra.mxu0 0.0
    %84 = vmatprep.subr.mxu0 0.0
    %85 = vmatpush1.msra.mxu0 0.0
    %86 = vmatprep.subr.mxu0 0.0
    %87 = vmatpush1.msra.mxu0 0.0
    %88 = vmatprep.subr.mxu0 0.0
    %89 = vmatpush1.msra.mxu0 0.0
    %90 = vmatprep.subr.mxu0 0.0
    %91 = vmatpush1.msra.mxu0 0.0
    %92 = vmatprep.subr.mxu0 0.0
    %93 = vmatpush1.msra.mxu0 0.0
    %94 = vmatprep.subr.mxu0 0.0
    %95 = vmatpush1.msra.mxu0 0.0
    %96 = vmatprep.subr.mxu0 0.0
    %97 = vmatpush1.msra.mxu0 0.0
    %98 = vmatprep.subr.mxu0 0.0
    %99 = vmatpush1.msra.mxu0 0.0
    %100 = vmatprep.subr.mxu0 0.0
    %101 = vmatpush1.msra.mxu0 0.0
    %102 = vmatprep.subr.mxu0 0.0
    %103 = vmatpush1.msra.mxu0 0.0
    %104 = vmatprep.subr.mxu0 0.0
    %105 = vmatpush1.msra.mxu0 0.0
    %106 = vmatprep.subr.mxu0 0.0
    %107 = vmatpush1.msra.mxu0 0.0
    %108 = vmatprep.subr.mxu0 0.0
    %109 = vmatpush1.msra.mxu0 0.0
    %110 = vmatprep.subr.mxu0 0.0
    %111 = vmatpush1.msra.mxu0 0.0
    %112 = vmatprep.subr.mxu0 0.0
    %113 = vmatpush1.msra.mxu0 0.0
    %114 = vmatprep.subr.mxu0 0.0
    %115 = vmatpush1.msra.mxu0 0.0
    %116 = vmatprep.subr.mxu0 0.0
    %117 = vmatpush1.msra.mxu0 0.0
    %118 = vmatprep.subr.mxu0 0.0
    %119 = vmatpush1.msra.mxu0 0.0
    %120 = vmatprep.subr.mxu0 0.0
    %121 = vmatpush1.msra.mxu0 0.0
    %122 = vmatprep.subr.mxu0 0.0
    %123 = vmatpush1.msra.mxu0 0.0
    %124 = vmatprep.subr.mxu0 0.0
    %125 = vmatpush1.msra.mxu0 0.0
    %126 = vmatprep.subr.mxu0 0.0
    %127 = vmatpush1.msra.mxu0 0.0
    %128 = vmatprep.subr.mxu0 0.0
    %129 = vmatpush1.msra.mxu0 0.0
    %130 = vmatprep.subr.mxu0 0.0
    %131 = vmatpush1.msra.mxu0 0.0
    %132 = vmatprep.subr.mxu0 0.0
    %133 = vmatpush1.msra.mxu0 0.0
    %134 = vmatprep.mubr.f32.mxu0 0.0
    %v135 = vand.u32 %v64, 4294901760
    %v136 = vsub.f32 %v64, %v135
    %v137 = vand.u32 %v136, 4294901760
    %v138 = vsub.f32 %v136, %v137
    %v139 = vand.u32 %v138, 4294901760
    %140 = vmatmul.mubr.f32.gmra.mrb[0].mxu0 %v139
    %v141 = vpop.f32.mrb[0].mxu0
    %v142 = vadd.f32 %v61, %v141
    %v143 = vpop.f32.mrb[0].mxu0
    %144 = vdwg.mxu0
    %145 = vmatprep.subr.mxu0 0.0
    %v146 = vand.u32 %v35, 4294901760
    %v147 = vsub.f32 %v35, %v146
    %v148 = vand.u32 %v147, 4294901760
    %v149 = vsub.f32 %v147, %v148
    %v150 = vand.u32 %v149, 4294901760
    %151 = vmatpush1.msra.mxu0 %v150
    %152 = vmatprep.subr.mxu0 0.0
    %v153 = vand.u32 %v36, 4294901760
    %v154 = vsub.f32 %v36, %v153
    %v155 = vand.u32 %v154, 4294901760
    %v156 = vsub.f32 %v154, %v155
    %v157 = vand.u32 %v156, 4294901760
    %158 = vmatpush1.msra.mxu0 %v157
    %159 = vmatprep.subr.mxu0 0.0
    %v160 = vand.u32 %v37, 4294901760
    %v161 = vsub.f32 %v37, %v160
    %v162 = vand.u32 %v161, 4294901760
    %v163 = vsub.f32 %v161, %v162
    %v164 = vand.u32 %v163, 4294901760
    %165 = vmatpush1.msra.mxu0 %v164
    %166 = vmatprep.subr.mxu0 0.0
    %v167 = vand.u32 %v38, 4294901760
    %v168 = vsub.f32 %v38, %v167
    %v169 = vand.u32 %v168, 4294901760
    %v170 = vsub.f32 %v168, %v169
    %v171 = vand.u32 %v170, 4294901760
    %172 = vmatpush1.msra.mxu0 %v171
    %173 = vmatprep.subr.mxu0 0.0
    %174 = vmatpush1.msra.mxu0 0.0
    %175 = vmatprep.subr.mxu0 0.0
    %176 = vmatpush1.msra.mxu0 0.0
    %177 = vmatprep.subr.mxu0 0.0
    %178 = vmatpush1.msra.mxu0 0.0
    %179 = vmatprep.subr.mxu0 0.0
    %180 = vmatpush1.msra.mxu0 0.0
    %181 = vmatprep.subr.mxu0 0.0
    %182 = vmatpush1.msra.mxu0 0.0
    %183 = vmatprep.subr.mxu0 0.0
    %184 = vmatpush1.msra.mxu0 0.0
    %185 = vmatprep.subr.mxu0 0.0
    %186 = vmatpush1.msra.mxu0 0.0
    %187 = vmatprep.subr.mxu0 0.0
    %188 = vmatpush1.msra.mxu0 0.0
    %189 = vmatprep.subr.mxu0 0.0
    %190 = vmatpush1.msra.mxu0 0.0
    %191 = vmatprep.subr.mxu0 0.0
    %192 = vmatpush1.msra.mxu0 0.0
    %193 = vmatprep.subr.mxu0 0.0
    %194 = vmatpush1.msra.mxu0 0.0
    %195 = vmatprep.subr.mxu0 0.0
    %196 = vmatpush1.msra.mxu0 0.0
    %197 = vmatprep.subr.mxu0 0.0
    %198 = vmatpush1.msra.mxu0 0.0
    %199 = vmatprep.subr.mxu0 0.0
    %200 = vmatpush1.msra.mxu0 0.0
    %201 = vmatprep.subr.mxu0 0.0
    %202 = vmatpush1.msra.mxu0 0.0
    %203 = vmatprep.subr.mxu0 0.0
    %204 = vmatpush1.msra.mxu0 0.0
    %205 = vmatprep.subr.mxu0 0.0
    %206 = vmatpush1.msra.mxu0 0.0
    %207 = vmatprep.subr.mxu0 0.0
    %208 = vmatpush1.msra.mxu0 0.0
    %209 = vmatprep.subr.mxu0 0.0
    %210 = vmatpush1.msra.mxu0 0.0
    %211 = vmatprep.subr.mxu0 0.0
    %212 = vmatpush1.msra.mxu0 0.0
    %213 = vmatprep.subr.mxu0 0.0
    %214 = vmatpush1.msra.mxu0 0.0
    %215 = vmatprep.subr.mxu0 0.0
    %216 = vmatpush1.msra.mxu0 0.0
    %217 = vmatprep.subr.mxu0 0.0
    %218 = vmatpush1.msra.mxu0 0.0
    %219 = vmatprep.subr.mxu0 0.0
    %220 = vmatpush1.msra.mxu0 0.0
    %221 = vmatprep.subr.mxu0 0.0
    %222 = vmatpush1.msra.mxu0 0.0
    %223 = vmatprep.subr.mxu0 0.0
    %224 = vmatpush1.msra.mxu0 0.0
    %225 = vmatprep.subr.mxu0 0.0
    %226 = vmatpush1.msra.mxu0 0.0
    %227 = vmatprep.subr.mxu0 0.0
    %228 = vmatpush1.msra.mxu0 0.0
    %229 = vmatprep.mubr.f32.mxu0 0.0
    %v230 = vand.u32 %v64, 4294901760
    %231 = vmatmul.mubr.f32.gmra.mrb[0].mxu0 %v230
    %v232 = vpop.f32.mrb[0].mxu0
    %v233 = vadd.f32 %v142, %v232
    %v234 = vpop.f32.mrb[0].mxu0
    %235 = vdwg.mxu0
    %236 = vmatprep.subr.mxu0 0.0
    %v237 = vand.u32 %v35, 4294901760
    %v238 = vsub.f32 %v35, %v237
    %239 = vmatpush1.msra.mxu0 %v238
    %240 = vmatprep.subr.mxu0 0.0
    %v241 = vand.u32 %v36, 4294901760
    %v242 = vsub.f32 %v36, %v241
    %243 = vmatpush1.msra.mxu0 %v242
    %244 = vmatprep.subr.mxu0 0.0
    %v245 = vand.u32 %v37, 4294901760
    %v246 = vsub.f32 %v37, %v245
    %247 = vmatpush1.msra.mxu0 %v246
    %248 = vmatprep.subr.mxu0 0.0
    %v249 = vand.u32 %v38, 4294901760
    %v250 = vsub.f32 %v38, %v249
    %251 = vmatpush1.msra.mxu0 %v250
    %252 = vmatprep.subr.mxu0 0.0
    %253 = vmatpush1.msra.mxu0 0.0
    %254 = vmatprep.subr.mxu0 0.0
    %255 = vmatpush1.msra.mxu0 0.0
    %256 = vmatprep.subr.mxu0 0.0
    %257 = vmatpush1.msra.mxu0 0.0
    %258 = vmatprep.subr.mxu0 0.0
    %259 = vmatpush1.msra.mxu0 0.0
    %260 = vmatprep.subr.mxu0 0.0
    %261 = vmatpush1.msra.mxu0 0.0
    %262 = vmatprep.subr.mxu0 0.0
    %263 = vmatpush1.msra.mxu0 0.0
    %264 = vmatprep.subr.mxu0 0.0
    %265 = vmatpush1.msra.mxu0 0.0
    %266 = vmatprep.subr.mxu0 0.0
    %267 = vmatpush1.msra.mxu0 0.0
    %268 = vmatprep.subr.mxu0 0.0
    %269 = vmatpush1.msra.mxu0 0.0
    %270 = vmatprep.subr.mxu0 0.0
    %271 = vmatpush1.msra.mxu0 0.0
    %272 = vmatprep.subr.mxu0 0.0
    %273 = vmatpush1.msra.mxu0 0.0
    %274 = vmatprep.subr.mxu0 0.0
    %275 = vmatpush1.msra.mxu0 0.0
    %276 = vmatprep.subr.mxu0 0.0
    %277 = vmatpush1.msra.mxu0 0.0
    %278 = vmatprep.subr.mxu0 0.0
    %279 = vmatpush1.msra.mxu0 0.0
    %280 = vmatprep.subr.mxu0 0.0
    %281 = vmatpush1.msra.mxu0 0.0
    %282 = vmatprep.subr.mxu0 0.0
    %283 = vmatpush1.msra.mxu0 0.0
    %284 = vmatprep.subr.mxu0 0.0
    %285 = vmatpush1.msra.mxu0 0.0
    %286 = vmatprep.subr.mxu0 0.0
    %287 = vmatpush1.msra.mxu0 0.0
    %288 = vmatprep.subr.mxu0 0.0
    %289 = vmatpush1.msra.mxu0 0.0
    %290 = vmatprep.subr.mxu0 0.0
    %291 = vmatpush1.msra.mxu0 0.0
    %292 = vmatprep.subr.mxu0 0.0
    %293 = vmatpush1.msra.mxu0 0.0
    %294 = vmatprep.subr.mxu0 0.0
    %295 = vmatpush1.msra.mxu0 0.0
    %296 = vmatprep.subr.mxu0 0.0
    %297 = vmatpush1.msra.mxu0 0.0
    %298 = vmatprep.subr.mxu0 0.0
    %299 = vmatpush1.msra.mxu0 0.0
    %300 = vmatprep.subr.mxu0 0.0
    %301 = vmatpush1.msra.mxu0 0.0
    %302 = vmatprep.subr.mxu0 0.0
    %303 = vmatpush1.msra.mxu0 0.0
    %304 = vmatprep.subr.mxu0 0.0
    %305 = vmatpush1.msra.mxu0 0.0
    %306 = vmatprep.subr.mxu0 0.0
    %307 = vmatpush1.msra.mxu0 0.0
    %308 = vmatprep.mubr.f32.mxu0 0.0
    %v309 = vand.u32 %v64, 4294901760
    %v310 = vsub.f32 %v64, %v309
    %311 = vmatmul.mubr.f32.gmra.mrb[0].mxu0 %v310
    %v312 = vpop.f32.mrb[0].mxu0
    %v313 = vadd.f32 %v233, %v312
    %v314 = vpop.f32.mrb[0].mxu0
    %315 = vdwg.mxu0
    %316 = vmatprep.subr.mxu0 0.0
    %v317 = vand.u32 %v35, 4294901760
    %318 = vmatpush1.msra.mxu0 %v317
    %319 = vmatprep.subr.mxu0 0.0
    %v320 = vand.u32 %v36, 4294901760
    %321 = vmatpush1.msra.mxu0 %v320
    %322 = vmatprep.subr.mxu0 0.0
    %v323 = vand.u32 %v37, 4294901760
    %324 = vmatpush1.msra.mxu0 %v323
    %325 = vmatprep.subr.mxu0 0.0
    %v326 = vand.u32 %v38, 4294901760
    %327 = vmatpush1.msra.mxu0 %v326
    %328 = vmatprep.subr.mxu0 0.0
    %329 = vmatpush1.msra.mxu0 0.0
    %330 = vmatprep.subr.mxu0 0.0
    %331 = vmatpush1.msra.mxu0 0.0
    %332 = vmatprep.subr.mxu0 0.0
    %333 = vmatpush1.msra.mxu0 0.0
    %334 = vmatprep.subr.mxu0 0.0
    %335 = vmatpush1.msra.mxu0 0.0
    %336 = vmatprep.subr.mxu0 0.0
    %337 = vmatpush1.msra.mxu0 0.0
    %338 = vmatprep.subr.mxu0 0.0
    %339 = vmatpush1.msra.mxu0 0.0
    %340 = vmatprep.subr.mxu0 0.0
    %341 = vmatpush1.msra.mxu0 0.0
    %342 = vmatprep.subr.mxu0 0.0
    %343 = vmatpush1.msra.mxu0 0.0
    %344 = vmatprep.subr.mxu0 0.0
    %345 = vmatpush1.msra.mxu0 0.0
    %346 = vmatprep.subr.mxu0 0.0
    %347 = vmatpush1.msra.mxu0 0.0
    %348 = vmatprep.subr.mxu0 0.0
    %349 = vmatpush1.msra.mxu0 0.0
    %350 = vmatprep.subr.mxu0 0.0
    %351 = vmatpush1.msra.mxu0 0.0
    %352 = vmatprep.subr.mxu0 0.0
    %353 = vmatpush1.msra.mxu0 0.0
    %354 = vmatprep.subr.mxu0 0.0
    %355 = vmatpush1.msra.mxu0 0.0
    %356 = vmatprep.subr.mxu0 0.0
    %357 = vmatpush1.msra.mxu0 0.0
    %358 = vmatprep.subr.mxu0 0.0
    %359 = vmatpush1.msra.mxu0 0.0
    %360 = vmatprep.subr.mxu0 0.0
    %361 = vmatpush1.msra.mxu0 0.0
    %362 = vmatprep.subr.mxu0 0.0
    %363 = vmatpush1.msra.mxu0 0.0
    %364 = vmatprep.subr.mxu0 0.0
    %365 = vmatpush1.msra.mxu0 0.0
    %366 = vmatprep.subr.mxu0 0.0
    %367 = vmatpush1.msra.mxu0 0.0
    %368 = vmatprep.subr.mxu0 0.0
    %369 = vmatpush1.msra.mxu0 0.0
    %370 = vmatprep.subr.mxu0 0.0
    %371 = vmatpush1.msra.mxu0 0.0
    %372 = vmatprep.subr.mxu0 0.0
    %373 = vmatpush1.msra.mxu0 0.0
    %374 = vmatprep.subr.mxu0 0.0
    %375 = vmatpush1.msra.mxu0 0.0
    %376 = vmatprep.subr.mxu0 0.0
    %377 = vmatpush1.msra.mxu0 0.0
    %378 = vmatprep.subr.mxu0 0.0
    %379 = vmatpush1.msra.mxu0 0.0
    %380 = vmatprep.subr.mxu0 0.0
    %381 = vmatpush1.msra.mxu0 0.0
    %382 = vmatprep.subr.mxu0 0.0
    %383 = vmatpush1.msra.mxu0 0.0
    %384 = vmatprep.mubr.f32.mxu0 0.0
    %v385 = vand.u32 %v64, 4294901760
    %v386 = vsub.f32 %v64, %v385
    %v387 = vand.u32 %v386, 4294901760
    %388 = vmatmul.mubr.f32.gmra.mrb[0].mxu0 %v387
    %v389 = vpop.f32.mrb[0].mxu0
    %v390 = vadd.f32 %v313, %v389
    %v391 = vpop.f32.mrb[0].mxu0
    %392 = vdwg.mxu0
    %393 = vmatprep.subr.mxu0 0.0
    %v394 = vand.u32 %v35, 4294901760
    %v395 = vsub.f32 %v35, %v394
    %v396 = vand.u32 %v395, 4294901760
    %397 = vmatpush1.msra.mxu0 %v396
    %398 = vmatprep.subr.mxu0 0.0
    %v399 = vand.u32 %v36, 4294901760
    %v400 = vsub.f32 %v36, %v399
    %v401 = vand.u32 %v400, 4294901760
    %402 = vmatpush1.msra.mxu0 %v401
    %403 = vmatprep.subr.mxu0 0.0
    %v404 = vand.u32 %v37, 4294901760
    %v405 = vsub.f32 %v37, %v404
    %v406 = vand.u32 %v405, 4294901760
    %407 = vmatpush1.msra.mxu0 %v406
    %408 = vmatprep.subr.mxu0 0.0
    %v409 = vand.u32 %v38, 4294901760
    %v410 = vsub.f32 %v38, %v409
    %v411 = vand.u32 %v410, 4294901760
    %412 = vmatpush1.msra.mxu0 %v411
    %413 = vmatprep.subr.mxu0 0.0
    %414 = vmatpush1.msra.mxu0 0.0
    %415 = vmatprep.subr.mxu0 0.0
    %416 = vmatpush1.msra.mxu0 0.0
    %417 = vmatprep.subr.mxu0 0.0
    %418 = vmatpush1.msra.mxu0 0.0
    %419 = vmatprep.subr.mxu0 0.0
    %420 = vmatpush1.msra.mxu0 0.0
    %421 = vmatprep.subr.mxu0 0.0
    %422 = vmatpush1.msra.mxu0 0.0
    %423 = vmatprep.subr.mxu0 0.0
    %424 = vmatpush1.msra.mxu0 0.0
    %425 = vmatprep.subr.mxu0 0.0
    %426 = vmatpush1.msra.mxu0 0.0
    %427 = vmatprep.subr.mxu0 0.0
    %428 = vmatpush1.msra.mxu0 0.0
    %429 = vmatprep.subr.mxu0 0.0
    %430 = vmatpush1.msra.mxu0 0.0
    %431 = vmatprep.subr.mxu0 0.0
    %432 = vmatpush1.msra.mxu0 0.0
    %433 = vmatprep.subr.mxu0 0.0
    %434 = vmatpush1.msra.mxu0 0.0
    %435 = vmatprep.subr.mxu0 0.0
    %436 = vmatpush1.msra.mxu0 0.0
    %437 = vmatprep.subr.mxu0 0.0
    %438 = vmatpush1.msra.mxu0 0.0
    %439 = vmatprep.subr.mxu0 0.0
    %440 = vmatpush1.msra.mxu0 0.0
    %441 = vmatprep.subr.mxu0 0.0
    %442 = vmatpush1.msra.mxu0 0.0
    %443 = vmatprep.subr.mxu0 0.0
    %444 = vmatpush1.msra.mxu0 0.0
    %445 = vmatprep.subr.mxu0 0.0
    %446 = vmatpush1.msra.mxu0 0.0
    %447 = vmatprep.subr.mxu0 0.0
    %448 = vmatpush1.msra.mxu0 0.0
    %449 = vmatprep.subr.mxu0 0.0
    %450 = vmatpush1.msra.mxu0 0.0
    %451 = vmatprep.subr.mxu0 0.0
    %452 = vmatpush1.msra.mxu0 0.0
    %453 = vmatprep.subr.mxu0 0.0
    %454 = vmatpush1.msra.mxu0 0.0
    %455 = vmatprep.subr.mxu0 0.0
    %456 = vmatpush1.msra.mxu0 0.0
    %457 = vmatprep.subr.mxu0 0.0
    %458 = vmatpush1.msra.mxu0 0.0
    %459 = vmatprep.subr.mxu0 0.0
    %460 = vmatpush1.msra.mxu0 0.0
    %461 = vmatprep.subr.mxu0 0.0
    %462 = vmatpush1.msra.mxu0 0.0
    %463 = vmatprep.subr.mxu0 0.0
    %464 = vmatpush1.msra.mxu0 0.0
    %465 = vmatprep.subr.mxu0 0.0
    %466 = vmatpush1.msra.mxu0 0.0
    %467 = vmatprep.subr.mxu0 0.0
    %468 = vmatpush1.msra.mxu0 0.0
    %469 = vmatprep.mubr.f32.mxu0 0.0
    %v470 = vand.u32 %v64, 4294901760
    %471 = vmatmul.mubr.f32.gmra.mrb[0].mxu0 %v470
    %v472 = vpop.f32.mrb[0].mxu0
    %v473 = vadd.f32 %v390, %v472
    %v474 = vpop.f32.mrb[0].mxu0
    %475 = vdwg.mxu0
    %476 = vmatprep.subr.mxu0 0.0
    %v477 = vand.u32 %v35, 4294901760
    %478 = vmatpush1.msra.mxu0 %v477
    %479 = vmatprep.subr.mxu0 0.0
    %v480 = vand.u32 %v36, 4294901760
    %481 = vmatpush1.msra.mxu0 %v480
    %482 = vmatprep.subr.mxu0 0.0
    %v483 = vand.u32 %v37, 4294901760
    %484 = vmatpush1.msra.mxu0 %v483
    %485 = vmatprep.subr.mxu0 0.0
    %v486 = vand.u32 %v38, 4294901760
    %487 = vmatpush1.msra.mxu0 %v486
    %488 = vmatprep.subr.mxu0 0.0
    %489 = vmatpush1.msra.mxu0 0.0
    %490 = vmatprep.subr.mxu0 0.0
    %491 = vmatpush1.msra.mxu0 0.0
    %492 = vmatprep.subr.mxu0 0.0
    %493 = vmatpush1.msra.mxu0 0.0
    %494 = vmatprep.subr.mxu0 0.0
    %495 = vmatpush1.msra.mxu0 0.0
    %496 = vmatprep.subr.mxu0 0.0
    %497 = vmatpush1.msra.mxu0 0.0
    %498 = vmatprep.subr.mxu0 0.0
    %499 = vmatpush1.msra.mxu0 0.0
    %500 = vmatprep.subr.mxu0 0.0
    %501 = vmatpush1.msra.mxu0 0.0
    %502 = vmatprep.subr.mxu0 0.0
    %503 = vmatpush1.msra.mxu0 0.0
    %504 = vmatprep.subr.mxu0 0.0
    %505 = vmatpush1.msra.mxu0 0.0
    %506 = vmatprep.subr.mxu0 0.0
    %507 = vmatpush1.msra.mxu0 0.0
    %508 = vmatprep.subr.mxu0 0.0
    %509 = vmatpush1.msra.mxu0 0.0
    %510 = vmatprep.subr.mxu0 0.0
    %511 = vmatpush1.msra.mxu0 0.0
    %512 = vmatprep.subr.mxu0 0.0
    %513 = vmatpush1.msra.mxu0 0.0
    %514 = vmatprep.subr.mxu0 0.0
    %515 = vmatpush1.msra.mxu0 0.0
    %516 = vmatprep.subr.mxu0 0.0
    %517 = vmatpush1.msra.mxu0 0.0
    %518 = vmatprep.subr.mxu0 0.0
    %519 = vmatpush1.msra.mxu0 0.0
    %520 = vmatprep.subr.mxu0 0.0
    %521 = vmatpush1.msra.mxu0 0.0
    %522 = vmatprep.subr.mxu0 0.0
    %523 = vmatpush1.msra.mxu0 0.0
    %524 = vmatprep.subr.mxu0 0.0
    %525 = vmatpush1.msra.mxu0 0.0
    %526 = vmatprep.subr.mxu0 0.0
    %527 = vmatpush1.msra.mxu0 0.0
    %528 = vmatprep.subr.mxu0 0.0
    %529 = vmatpush1.msra.mxu0 0.0
    %530 = vmatprep.subr.mxu0 0.0
    %531 = vmatpush1.msra.mxu0 0.0
    %532 = vmatprep.subr.mxu0 0.0
    %533 = vmatpush1.msra.mxu0 0.0
    %534 = vmatprep.subr.mxu0 0.0
    %535 = vmatpush1.msra.mxu0 0.0
    %536 = vmatprep.subr.mxu0 0.0
    %537 = vmatpush1.msra.mxu0 0.0
    %538 = vmatprep.subr.mxu0 0.0
    %539 = vmatpush1.msra.mxu0 0.0
    %540 = vmatprep.subr.mxu0 0.0
    %541 = vmatpush1.msra.mxu0 0.0
    %542 = vmatprep.subr.mxu0 0.0
    %543 = vmatpush1.msra.mxu0 0.0
    %544 = vmatprep.mubr.f32.mxu0 0.0
    %v545 = vand.u32 %v64, 4294901760
    %546 = vmatmul.mubr.f32.gmra.mrb[0].mxu0 %v545
    %v547 = vpop.f32.mrb[0].mxu0
    %v548 = vadd.f32 %v473, %v547
    %v549 = vpop.f32.mrb[0].mxu0
    %550 = vdwg.mxu0
    %v552 = vsel %vm62, %v30, 0
    %554 = vmatprep.subr.mxu0 0.0
    %v555 = vand.u32 %v35, 4294901760
    %556 = vmatpush1.msra.mxu0 %v555
    %557 = vmatprep.subr.mxu0 0.0
    %v558 = vand.u32 %v36, 4294901760
    %559 = vmatpush1.msra.mxu0 %v558
    %560 = vmatprep.subr.mxu0 0.0
    %v561 = vand.u32 %v37, 4294901760
    %562 = vmatpush1.msra.mxu0 %v561
    %563 = vmatprep.subr.mxu0 0.0
    %v564 = vand.u32 %v38, 4294901760
    %565 = vmatpush1.msra.mxu0 %v564
    %566 = vmatprep.subr.mxu0 0.0
    %567 = vmatpush1.msra.mxu0 0.0
    %568 = vmatprep.subr.mxu0 0.0
    %569 = vmatpush1.msra.mxu0 0.0
    %570 = vmatprep.subr.mxu0 0.0
    %571 = vmatpush1.msra.mxu0 0.0
    %572 = vmatprep.subr.mxu0 0.0
    %573 = vmatpush1.msra.mxu0 0.0
    %574 = vmatprep.subr.mxu0 0.0
    %575 = vmatpush1.msra.mxu0 0.0
    %576 = vmatprep.subr.mxu0 0.0
    %577 = vmatpush1.msra.mxu0 0.0
    %578 = vmatprep.subr.mxu0 0.0
    %579 = vmatpush1.msra.mxu0 0.0
    %580 = vmatprep.subr.mxu0 0.0
    %581 = vmatpush1.msra.mxu0 0.0
    %582 = vmatprep.subr.mxu0 0.0
    %583 = vmatpush1.msra.mxu0 0.0
    %584 = vmatprep.subr.mxu0 0.0
    %585 = vmatpush1.msra.mxu0 0.0
    %586 = vmatprep.subr.mxu0 0.0
    %587 = vmatpush1.msra.mxu0 0.0
    %588 = vmatprep.subr.mxu0 0.0
    %589 = vmatpush1.msra.mxu0 0.0
    %590 = vmatprep.subr.mxu0 0.0
    %591 = vmatpush1.msra.mxu0 0.0
    %592 = vmatprep.subr.mxu0 0.0
    %593 = vmatpush1.msra.mxu0 0.0
    %594 = vmatprep.subr.mxu0 0.0
    %595 = vmatpush1.msra.mxu0 0.0
    %596 = vmatprep.subr.mxu0 0.0
    %597 = vmatpush1.msra.mxu0 0.0
    %598 = vmatprep.subr.mxu0 0.0
    %599 = vmatpush1.msra.mxu0 0.0
    %600 = vmatprep.subr.mxu0 0.0
    %601 = vmatpush1.msra.mxu0 0.0
    %602 = vmatprep.subr.mxu0 0.0
    %603 = vmatpush1.msra.mxu0 0.0
    %604 = vmatprep.subr.mxu0 0.0
    %605 = vmatpush1.msra.mxu0 0.0
    %606 = vmatprep.subr.mxu0 0.0
    %607 = vmatpush1.msra.mxu0 0.0
    %608 = vmatprep.subr.mxu0 0.0
    %609 = vmatpush1.msra.mxu0 0.0
    %610 = vmatprep.subr.mxu0 0.0
    %611 = vmatpush1.msra.mxu0 0.0
    %612 = vmatprep.subr.mxu0 0.0
    %613 = vmatpush1.msra.mxu0 0.0
    %614 = vmatprep.subr.mxu0 0.0
    %615 = vmatpush1.msra.mxu0 0.0
    %616 = vmatprep.subr.mxu0 0.0
    %617 = vmatpush1.msra.mxu0 0.0
    %618 = vmatprep.subr.mxu0 0.0
    %619 = vmatpush1.msra.mxu0 0.0
    %620 = vmatprep.subr.mxu0 0.0
    %621 = vmatpush1.msra.mxu0 0.0
    %622 = vmatprep.mubr.f32.mxu0 0.0
    %v623 = vand.u32 %v552, 4294901760
    %v624 = vsub.f32 %v552, %v623
    %v625 = vand.u32 %v624, 4294901760
    %v626 = vsub.f32 %v624, %v625
    %v627 = vand.u32 %v626, 4294901760
    %628 = vmatmul.mubr.f32.gmra.mrb[0].mxu0 %v627
    %v629 = vpop.f32.mrb[0].mxu0
    %v630 = vadd.f32 %v61, %v629
    %v631 = vpop.f32.mrb[0].mxu0
    %632 = vdwg.mxu0
    %633 = vmatprep.subr.mxu0 0.0
    %v634 = vand.u32 %v35, 4294901760
    %v635 = vsub.f32 %v35, %v634
    %v636 = vand.u32 %v635, 4294901760
    %v637 = vsub.f32 %v635, %v636
    %v638 = vand.u32 %v637, 4294901760
    %639 = vmatpush1.msra.mxu0 %v638
    %640 = vmatprep.subr.mxu0 0.0
    %v641 = vand.u32 %v36, 4294901760
    %v642 = vsub.f32 %v36, %v641
    %v643 = vand.u32 %v642, 4294901760
    %v644 = vsub.f32 %v642, %v643
    %v645 = vand.u32 %v644, 4294901760
    %646 = vmatpush1.msra.mxu0 %v645
    %647 = vmatprep.subr.mxu0 0.0
    %v648 = vand.u32 %v37, 4294901760
    %v649 = vsub.f32 %v37, %v648
    %v650 = vand.u32 %v649, 4294901760
    %v651 = vsub.f32 %v649, %v650
    %v652 = vand.u32 %v651, 4294901760
    %653 = vmatpush1.msra.mxu0 %v652
    %654 = vmatprep.subr.mxu0 0.0
    %v655 = vand.u32 %v38, 4294901760
    %v656 = vsub.f32 %v38, %v655
    %v657 = vand.u32 %v656, 4294901760
    %v658 = vsub.f32 %v656, %v657
    %v659 = vand.u32 %v658, 4294901760
    %660 = vmatpush1.msra.mxu0 %v659
    %661 = vmatprep.subr.mxu0 0.0
    %662 = vmatpush1.msra.mxu0 0.0
    %663 = vmatprep.subr.mxu0 0.0
    %664 = vmatpush1.msra.mxu0 0.0
    %665 = vmatprep.subr.mxu0 0.0
    %666 = vmatpush1.msra.mxu0 0.0
    %667 = vmatprep.subr.mxu0 0.0
    %668 = vmatpush1.msra.mxu0 0.0
    %669 = vmatprep.subr.mxu0 0.0
    %670 = vmatpush1.msra.mxu0 0.0
    %671 = vmatprep.subr.mxu0 0.0
    %672 = vmatpush1.msra.mxu0 0.0
    %673 = vmatprep.subr.mxu0 0.0
    %674 = vmatpush1.msra.mxu0 0.0
    %675 = vmatprep.subr.mxu0 0.0
    %676 = vmatpush1.msra.mxu0 0.0
    %677 = vmatprep.subr.mxu0 0.0
    %678 = vmatpush1.msra.mxu0 0.0
    %679 = vmatprep.subr.mxu0 0.0
    %680 = vmatpush1.msra.mxu0 0.0
    %681 = vmatprep.subr.mxu0 0.0
    %682 = vmatpush1.msra.mxu0 0.0
    %683 = vmatprep.subr.mxu0 0.0
    %684 = vmatpush1.msra.mxu0 0.0
    %685 = vmatprep.subr.mxu0 0.0
    %686 = vmatpush1.msra.mxu0 0.0
    %687 = vmatprep.subr.mxu0 0.0
    %688 = vmatpush1.msra.mxu0 0.0
    %689 = vmatprep.subr.mxu0 0.0
    %690 = vmatpush1.msra.mxu0 0.0
    %691 = vmatprep.subr.mxu0 0.0
    %692 = vmatpush1.msra.mxu0 0.0
    %693 = vmatprep.subr.mxu0 0.0
    %694 = vmatpush1.msra.mxu0 0.0
    %695 = vmatprep.subr.mxu0 0.0
    %696 = vmatpush1.msra.mxu0 0.0
    %697 = vmatprep.subr.mxu0 0.0
    %698 = vmatpush1.msra.mxu0 0.0
    %699 = vmatprep.subr.mxu0 0.0
    %700 = vmatpush1.msra.mxu0 0.0
    %701 = vmatprep.subr.mxu0 0.0
    %702 = vmatpush1.msra.mxu0 0.0
    %703 = vmatprep.subr.mxu0 0.0
    %704 = vmatpush1.msra.mxu0 0.0
    %705 = vmatprep.subr.mxu0 0.0
    %706 = vmatpush1.msra.mxu0 0.0
    %707 = vmatprep.subr.mxu0 0.0
    %708 = vmatpush1.msra.mxu0 0.0
    %709 = vmatprep.subr.mxu0 0.0
    %710 = vmatpush1.msra.mxu0 0.0
    %711 = vmatprep.subr.mxu0 0.0
    %712 = vmatpush1.msra.mxu0 0.0
    %713 = vmatprep.subr.mxu0 0.0
    %714 = vmatpush1.msra.mxu0 0.0
    %715 = vmatprep.subr.mxu0 0.0
    %716 = vmatpush1.msra.mxu0 0.0
    %717 = vmatprep.mubr.f32.mxu0 0.0
    %v718 = vand.u32 %v552, 4294901760
    %719 = vmatmul.mubr.f32.gmra.mrb[0].mxu0 %v718
    %v720 = vpop.f32.mrb[0].mxu0
    %v721 = vadd.f32 %v630, %v720
    %v722 = vpop.f32.mrb[0].mxu0
    %723 = vdwg.mxu0
    %724 = vmatprep.subr.mxu0 0.0
    %v725 = vand.u32 %v35, 4294901760
    %v726 = vsub.f32 %v35, %v725
    %727 = vmatpush1.msra.mxu0 %v726
    %728 = vmatprep.subr.mxu0 0.0
    %v729 = vand.u32 %v36, 4294901760
    %v730 = vsub.f32 %v36, %v729
    %731 = vmatpush1.msra.mxu0 %v730
    %732 = vmatprep.subr.mxu0 0.0
    %v733 = vand.u32 %v37, 4294901760
    %v734 = vsub.f32 %v37, %v733
    %735 = vmatpush1.msra.mxu0 %v734
    %736 = vmatprep.subr.mxu0 0.0
    %v737 = vand.u32 %v38, 4294901760
    %v738 = vsub.f32 %v38, %v737
    %739 = vmatpush1.msra.mxu0 %v738
    %740 = vmatprep.subr.mxu0 0.0
    %741 = vmatpush1.msra.mxu0 0.0
    %742 = vmatprep.subr.mxu0 0.0
    %743 = vmatpush1.msra.mxu0 0.0
    %744 = vmatprep.subr.mxu0 0.0
    %745 = vmatpush1.msra.mxu0 0.0
    %746 = vmatprep.subr.mxu0 0.0
    %747 = vmatpush1.msra.mxu0 0.0
    %748 = vmatprep.subr.mxu0 0.0
    %749 = vmatpush1.msra.mxu0 0.0
    %750 = vmatprep.subr.mxu0 0.0
    %751 = vmatpush1.msra.mxu0 0.0
    %752 = vmatprep.subr.mxu0 0.0
    %753 = vmatpush1.msra.mxu0 0.0
    %754 = vmatprep.subr.mxu0 0.0
    %755 = vmatpush1.msra.mxu0 0.0
    %756 = vmatprep.subr.mxu0 0.0
    %757 = vmatpush1.msra.mxu0 0.0
    %758 = vmatprep.subr.mxu0 0.0
    %759 = vmatpush1.msra.mxu0 0.0
    %760 = vmatprep.subr.mxu0 0.0
    %761 = vmatpush1.msra.mxu0 0.0
    %762 = vmatprep.subr.mxu0 0.0
    %763 = vmatpush1.msra.mxu0 0.0
    %764 = vmatprep.subr.mxu0 0.0
    %765 = vmatpush1.msra.mxu0 0.0
    %766 = vmatprep.subr.mxu0 0.0
    %767 = vmatpush1.msra.mxu0 0.0
    %768 = vmatprep.subr.mxu0 0.0
    %769 = vmatpush1.msra.mxu0 0.0
    %770 = vmatprep.subr.mxu0 0.0
    %771 = vmatpush1.msra.mxu0 0.0
    %772 = vmatprep.subr.mxu0 0.0
    %773 = vmatpush1.msra.mxu0 0.0
    %774 = vmatprep.subr.mxu0 0.0
    %775 = vmatpush1.msra.mxu0 0.0
    %776 = vmatprep.subr.mxu0 0.0
    %777 = vmatpush1.msra.mxu0 0.0
    %778 = vmatprep.subr.mxu0 0.0
    %779 = vmatpush1.msra.mxu0 0.0
    %780 = vmatprep.subr.mxu0 0.0
    %781 = vmatpush1.msra.mxu0 0.0
    %782 = vmatprep.subr.mxu0 0.0
    %783 = vmatpush1.msra.mxu0 0.0
    %784 = vmatprep.subr.mxu0 0.0
    %785 = vmatpush1.msra.mxu0 0.0
    %786 = vmatprep.subr.mxu0 0.0
    %787 = vmatpush1.msra.mxu0 0.0
    %788 = vmatprep.subr.mxu0 0.0
    %789 = vmatpush1.msra.mxu0 0.0
    %790 = vmatprep.subr.mxu0 0.0
    %791 = vmatpush1.msra.mxu0 0.0
    %792 = vmatprep.subr.mxu0 0.0
    %793 = vmatpush1.msra.mxu0 0.0
    %794 = vmatprep.subr.mxu0 0.0
    %795 = vmatpush1.msra.mxu0 0.0
    %796 = vmatprep.mubr.f32.mxu0 0.0
    %v797 = vand.u32 %v552, 4294901760
    %v798 = vsub.f32 %v552, %v797
    %799 = vmatmul.mubr.f32.gmra.mrb[0].mxu0 %v798
    %v800 = vpop.f32.mrb[0].mxu0
    %v801 = vadd.f32 %v721, %v800
    %v802 = vpop.f32.mrb[0].mxu0
    %803 = vdwg.mxu0
    %804 = vmatprep.subr.mxu0 0.0
    %v805 = vand.u32 %v35, 4294901760
    %806 = vmatpush1.msra.mxu0 %v805
    %807 = vmatprep.subr.mxu0 0.0
    %v808 = vand.u32 %v36, 4294901760
    %809 = vmatpush1.msra.mxu0 %v808
    %810 = vmatprep.subr.mxu0 0.0
    %v811 = vand.u32 %v37, 4294901760
    %812 = vmatpush1.msra.mxu0 %v811
    %813 = vmatprep.subr.mxu0 0.0
    %v814 = vand.u32 %v38, 4294901760
    %815 = vmatpush1.msra.mxu0 %v814
    %816 = vmatprep.subr.mxu0 0.0
    %817 = vmatpush1.msra.mxu0 0.0
    %818 = vmatprep.subr.mxu0 0.0
    %819 = vmatpush1.msra.mxu0 0.0
    %820 = vmatprep.subr.mxu0 0.0
    %821 = vmatpush1.msra.mxu0 0.0
    %822 = vmatprep.subr.mxu0 0.0
    %823 = vmatpush1.msra.mxu0 0.0
    %824 = vmatprep.subr.mxu0 0.0
    %825 = vmatpush1.msra.mxu0 0.0
    %826 = vmatprep.subr.mxu0 0.0
    %827 = vmatpush1.msra.mxu0 0.0
    %828 = vmatprep.subr.mxu0 0.0
    %829 = vmatpush1.msra.mxu0 0.0
    %830 = vmatprep.subr.mxu0 0.0
    %831 = vmatpush1.msra.mxu0 0.0
    %832 = vmatprep.subr.mxu0 0.0
    %833 = vmatpush1.msra.mxu0 0.0
    %834 = vmatprep.subr.mxu0 0.0
    %835 = vmatpush1.msra.mxu0 0.0
    %836 = vmatprep.subr.mxu0 0.0
    %837 = vmatpush1.msra.mxu0 0.0
    %838 = vmatprep.subr.mxu0 0.0
    %839 = vmatpush1.msra.mxu0 0.0
    %840 = vmatprep.subr.mxu0 0.0
    %841 = vmatpush1.msra.mxu0 0.0
    %842 = vmatprep.subr.mxu0 0.0
    %843 = vmatpush1.msra.mxu0 0.0
    %844 = vmatprep.subr.mxu0 0.0
    %845 = vmatpush1.msra.mxu0 0.0
    %846 = vmatprep.subr.mxu0 0.0
    %847 = vmatpush1.msra.mxu0 0.0
    %848 = vmatprep.subr.mxu0 0.0
    %849 = vmatpush1.msra.mxu0 0.0
    %850 = vmatprep.subr.mxu0 0.0
    %851 = vmatpush1.msra.mxu0 0.0
    %852 = vmatprep.subr.mxu0 0.0
    %853 = vmatpush1.msra.mxu0 0.0
    %854 = vmatprep.subr.mxu0 0.0
    %855 = vmatpush1.msra.mxu0 0.0
    %856 = vmatprep.subr.mxu0 0.0
    %857 = vmatpush1.msra.mxu0 0.0
    %858 = vmatprep.subr.mxu0 0.0
    %859 = vmatpush1.msra.mxu0 0.0
    %860 = vmatprep.subr.mxu0 0.0
    %861 = vmatpush1.msra.mxu0 0.0
    %862 = vmatprep.subr.mxu0 0.0
    %863 = vmatpush1.msra.mxu0 0.0
    %864 = vmatprep.subr.mxu0 0.0
    %865 = vmatpush1.msra.mxu0 0.0
    %866 = vmatprep.subr.mxu0 0.0
    %867 = vmatpush1.msra.mxu0 0.0
    %868 = vmatprep.subr.mxu0 0.0
    %869 = vmatpush1.msra.mxu0 0.0
    %870 = vmatprep.subr.mxu0 0.0
    %871 = vmatpush1.msra.mxu0 0.0
    %872 = vmatprep.mubr.f32.mxu0 0.0
    %v873 = vand.u32 %v552, 4294901760
    %v874 = vsub.f32 %v552, %v873
    %v875 = vand.u32 %v874, 4294901760
    %876 = vmatmul.mubr.f32.gmra.mrb[0].mxu0 %v875
    %v877 = vpop.f32.mrb[0].mxu0
    %v878 = vadd.f32 %v801, %v877
    %v879 = vpop.f32.mrb[0].mxu0
    %880 = vdwg.mxu0
    %881 = vmatprep.subr.mxu0 0.0
    %v882 = vand.u32 %v35, 4294901760
    %v883 = vsub.f32 %v35, %v882
    %v884 = vand.u32 %v883, 4294901760
    %885 = vmatpush1.msra.mxu0 %v884
    %886 = vmatprep.subr.mxu0 0.0
    %v887 = vand.u32 %v36, 4294901760
    %v888 = vsub.f32 %v36, %v887
    %v889 = vand.u32 %v888, 4294901760
    %890 = vmatpush1.msra.mxu0 %v889
    %891 = vmatprep.subr.mxu0 0.0
    %v892 = vand.u32 %v37, 4294901760
    %v893 = vsub.f32 %v37, %v892
    %v894 = vand.u32 %v893, 4294901760
    %895 = vmatpush1.msra.mxu0 %v894
    %896 = vmatprep.subr.mxu0 0.0
    %v897 = vand.u32 %v38, 4294901760
    %v898 = vsub.f32 %v38, %v897
    %v899 = vand.u32 %v898, 4294901760
    %900 = vmatpush1.msra.mxu0 %v899
    %901 = vmatprep.subr.mxu0 0.0
    %902 = vmatpush1.msra.mxu0 0.0
    %903 = vmatprep.subr.mxu0 0.0
    %904 = vmatpush1.msra.mxu0 0.0
    %905 = vmatprep.subr.mxu0 0.0
    %906 = vmatpush1.msra.mxu0 0.0
    %907 = vmatprep.subr.mxu0 0.0
    %908 = vmatpush1.msra.mxu0 0.0
    %909 = vmatprep.subr.mxu0 0.0
    %910 = vmatpush1.msra.mxu0 0.0
    %911 = vmatprep.subr.mxu0 0.0
    %912 = vmatpush1.msra.mxu0 0.0
    %913 = vmatprep.subr.mxu0 0.0
    %914 = vmatpush1.msra.mxu0 0.0
    %915 = vmatprep.subr.mxu0 0.0
    %916 = vmatpush1.msra.mxu0 0.0
    %917 = vmatprep.subr.mxu0 0.0
    %918 = vmatpush1.msra.mxu0 0.0
    %919 = vmatprep.subr.mxu0 0.0
    %920 = vmatpush1.msra.mxu0 0.0
    %921 = vmatprep.subr.mxu0 0.0
    %922 = vmatpush1.msra.mxu0 0.0
    %923 = vmatprep.subr.mxu0 0.0
    %924 = vmatpush1.msra.mxu0 0.0
    %925 = vmatprep.subr.mxu0 0.0
    %926 = vmatpush1.msra.mxu0 0.0
    %927 = vmatprep.subr.mxu0 0.0
    %928 = vmatpush1.msra.mxu0 0.0
    %929 = vmatprep.subr.mxu0 0.0
    %930 = vmatpush1.msra.mxu0 0.0
    %931 = vmatprep.subr.mxu0 0.0
    %932 = vmatpush1.msra.mxu0 0.0
    %933 = vmatprep.subr.mxu0 0.0
    %934 = vmatpush1.msra.mxu0 0.0
    %935 = vmatprep.subr.mxu0 0.0
    %936 = vmatpush1.msra.mxu0 0.0
    %937 = vmatprep.subr.mxu0 0.0
    %938 = vmatpush1.msra.mxu0 0.0
    %939 = vmatprep.subr.mxu0 0.0
    %940 = vmatpush1.msra.mxu0 0.0
    %941 = vmatprep.subr.mxu0 0.0
    %942 = vmatpush1.msra.mxu0 0.0
    %943 = vmatprep.subr.mxu0 0.0
    %944 = vmatpush1.msra.mxu0 0.0
    %945 = vmatprep.subr.mxu0 0.0
    %946 = vmatpush1.msra.mxu0 0.0
    %947 = vmatprep.subr.mxu0 0.0
    %948 = vmatpush1.msra.mxu0 0.0
    %949 = vmatprep.subr.mxu0 0.0
    %950 = vmatpush1.msra.mxu0 0.0
    %951 = vmatprep.subr.mxu0 0.0
    %952 = vmatpush1.msra.mxu0 0.0
    %953 = vmatprep.subr.mxu0 0.0
    %954 = vmatpush1.msra.mxu0 0.0
    %955 = vmatprep.subr.mxu0 0.0
    %956 = vmatpush1.msra.mxu0 0.0
    %957 = vmatprep.mubr.f32.mxu0 0.0
    %v958 = vand.u32 %v552, 4294901760
    %959 = vmatmul.mubr.f32.gmra.mrb[0].mxu0 %v958
    %v960 = vpop.f32.mrb[0].mxu0
    %v961 = vadd.f32 %v878, %v960
    %v962 = vpop.f32.mrb[0].mxu0
    %963 = vdwg.mxu0
    %964 = vmatprep.subr.mxu0 0.0
    %v965 = vand.u32 %v35, 4294901760
    %966 = vmatpush1.msra.mxu0 %v965
    %967 = vmatprep.subr.mxu0 0.0
    %v968 = vand.u32 %v36, 4294901760
    %969 = vmatpush1.msra.mxu0 %v968
    %970 = vmatprep.subr.mxu0 0.0
    %v971 = vand.u32 %v37, 4294901760
    %972 = vmatpush1.msra.mxu0 %v971
    %973 = vmatprep.subr.mxu0 0.0
    %v974 = vand.u32 %v38, 4294901760
    %975 = vmatpush1.msra.mxu0 %v974
    %976 = vmatprep.subr.mxu0 0.0
    %977 = vmatpush1.msra.mxu0 0.0
    %978 = vmatprep.subr.mxu0 0.0
    %979 = vmatpush1.msra.mxu0 0.0
    %980 = vmatprep.subr.mxu0 0.0
    %981 = vmatpush1.msra.mxu0 0.0
    %982 = vmatprep.subr.mxu0 0.0
    %983 = vmatpush1.msra.mxu0 0.0
    %984 = vmatprep.subr.mxu0 0.0
    %985 = vmatpush1.msra.mxu0 0.0
    %986 = vmatprep.subr.mxu0 0.0
    %987 = vmatpush1.msra.mxu0 0.0
    %988 = vmatprep.subr.mxu0 0.0
    %989 = vmatpush1.msra.mxu0 0.0
    %990 = vmatprep.subr.mxu0 0.0
    %991 = vmatpush1.msra.mxu0 0.0
    %992 = vmatprep.subr.mxu0 0.0
    %993 = vmatpush1.msra.mxu0 0.0
    %994 = vmatprep.subr.mxu0 0.0
    %995 = vmatpush1.msra.mxu0 0.0
    %996 = vmatprep.subr.mxu0 0.0
    %997 = vmatpush1.msra.mxu0 0.0
    %998 = vmatprep.subr.mxu0 0.0
    %999 = vmatpush1.msra.mxu0 0.0
    %1000 = vmatprep.subr.mxu0 0.0
    %1001 = vmatpush1.msra.mxu0 0.0
    %1002 = vmatprep.subr.mxu0 0.0
    %1003 = vmatpush1.msra.mxu0 0.0
    %1004 = vmatprep.subr.mxu0 0.0
    %1005 = vmatpush1.msra.mxu0 0.0
    %1006 = vmatprep.subr.mxu0 0.0
    %1007 = vmatpush1.msra.mxu0 0.0
    %1008 = vmatprep.subr.mxu0 0.0
    %1009 = vmatpush1.msra.mxu0 0.0
    %1010 = vmatprep.subr.mxu0 0.0
    %1011 = vmatpush1.msra.mxu0 0.0
    %1012 = vmatprep.subr.mxu0 0.0
    %1013 = vmatpush1.msra.mxu0 0.0
    %1014 = vmatprep.subr.mxu0 0.0
    %1015 = vmatpush1.msra.mxu0 0.0
    %1016 = vmatprep.subr.mxu0 0.0
    %1017 = vmatpush1.msra.mxu0 0.0
    %1018 = vmatprep.subr.mxu0 0.0
    %1019 = vmatpush1.msra.mxu0 0.0
    %1020 = vmatprep.subr.mxu0 0.0
    %1021 = vmatpush1.msra.mxu0 0.0
    %1022 = vmatprep.subr.mxu0 0.0
    %1023 = vmatpush1.msra.mxu0 0.0
    %1024 = vmatprep.subr.mxu0 0.0
    %1025 = vmatpush1.msra.mxu0 0.0
    %1026 = vmatprep.subr.mxu0 0.0
    %1027 = vmatpush1.msra.mxu0 0.0
    %1028 = vmatprep.subr.mxu0 0.0
    %1029 = vmatpush1.msra.mxu0 0.0
    %1030 = vmatprep.subr.mxu0 0.0
    %1031 = vmatpush1.msra.mxu0 0.0
    %1032 = vmatprep.mubr.f32.mxu0 0.0
    %v1033 = vand.u32 %v552, 4294901760
    %1034 = vmatmul.mubr.f32.gmra.mrb[0].mxu0 %v1033
    %v1035 = vpop.f32.mrb[0].mxu0
    %v1036 = vadd.f32 %v961, %v1035
    %v1037 = vpop.f32.mrb[0].mxu0
    %1038 = vdwg.mxu0
    %v1040 = vsel %vm62, %v31, 0
    %v1043 = vsel %vm62, %v32, 0
    %1045 = vmatprep.subr.mxu0 0.0
    %v1046 = vand.u32 %v39, 4294901760
    %1047 = vmatpush1.msra.mxu0 %v1046
    %1048 = vmatprep.subr.mxu0 0.0
    %v1049 = vand.u32 %v40, 4294901760
    %1050 = vmatpush1.msra.mxu0 %v1049
    %1051 = vmatprep.subr.mxu0 0.0
    %v1052 = vand.u32 %v41, 4294901760
    %1053 = vmatpush1.msra.mxu0 %v1052
    %1054 = vmatprep.subr.mxu0 0.0
    %v1055 = vand.u32 %v42, 4294901760
    %1056 = vmatpush1.msra.mxu0 %v1055
    %1057 = vmatprep.subr.mxu0 0.0
    %1058 = vmatpush1.msra.mxu0 0.0
    %1059 = vmatprep.subr.mxu0 0.0
    %1060 = vmatpush1.msra.mxu0 0.0
    %1061 = vmatprep.subr.mxu0 0.0
    %1062 = vmatpush1.msra.mxu0 0.0
    %1063 = vmatprep.subr.mxu0 0.0
    %1064 = vmatpush1.msra.mxu0 0.0
    %1065 = vmatprep.subr.mxu0 0.0
    %1066 = vmatpush1.msra.mxu0 0.0
    %1067 = vmatprep.subr.mxu0 0.0
    %1068 = vmatpush1.msra.mxu0 0.0
    %1069 = vmatprep.subr.mxu0 0.0
    %1070 = vmatpush1.msra.mxu0 0.0
    %1071 = vmatprep.subr.mxu0 0.0
    %1072 = vmatpush1.msra.mxu0 0.0
    %1073 = vmatprep.subr.mxu0 0.0
    %1074 = vmatpush1.msra.mxu0 0.0
    %1075 = vmatprep.subr.mxu0 0.0
    %1076 = vmatpush1.msra.mxu0 0.0
    %1077 = vmatprep.subr.mxu0 0.0
    %1078 = vmatpush1.msra.mxu0 0.0
    %1079 = vmatprep.subr.mxu0 0.0
    %1080 = vmatpush1.msra.mxu0 0.0
    %1081 = vmatprep.subr.mxu0 0.0
    %1082 = vmatpush1.msra.mxu0 0.0
    %1083 = vmatprep.subr.mxu0 0.0
    %1084 = vmatpush1.msra.mxu0 0.0
    %1085 = vmatprep.subr.mxu0 0.0
    %1086 = vmatpush1.msra.mxu0 0.0
    %1087 = vmatprep.subr.mxu0 0.0
    %1088 = vmatpush1.msra.mxu0 0.0
    %1089 = vmatprep.subr.mxu0 0.0
    %1090 = vmatpush1.msra.mxu0 0.0
    %1091 = vmatprep.subr.mxu0 0.0
    %1092 = vmatpush1.msra.mxu0 0.0
    %1093 = vmatprep.subr.mxu0 0.0
    %1094 = vmatpush1.msra.mxu0 0.0
    %1095 = vmatprep.subr.mxu0 0.0
    %1096 = vmatpush1.msra.mxu0 0.0
    %1097 = vmatprep.subr.mxu0 0.0
    %1098 = vmatpush1.msra.mxu0 0.0
    %1099 = vmatprep.subr.mxu0 0.0
    %1100 = vmatpush1.msra.mxu0 0.0
    %1101 = vmatprep.subr.mxu0 0.0
    %1102 = vmatpush1.msra.mxu0 0.0
    %1103 = vmatprep.subr.mxu0 0.0
    %1104 = vmatpush1.msra.mxu0 0.0
    %1105 = vmatprep.subr.mxu0 0.0
    %1106 = vmatpush1.msra.mxu0 0.0
    %1107 = vmatprep.subr.mxu0 0.0
    %1108 = vmatpush1.msra.mxu0 0.0
    %1109 = vmatprep.subr.mxu0 0.0
    %1110 = vmatpush1.msra.mxu0 0.0
    %1111 = vmatprep.subr.mxu0 0.0
    %1112 = vmatpush1.msra.mxu0 0.0
    %1113 = vmatprep.mubr.f32.mxu0 0.0
    %v1114 = vand.u32 %v1040, 4294901760
    %v1115 = vsub.f32 %v1040, %v1114
    %v1116 = vand.u32 %v1115, 4294901760
    %v1117 = vsub.f32 %v1115, %v1116
    %v1118 = vand.u32 %v1117, 4294901760
    %1119 = vmatmul.mubr.f32.gmra.mrb[0].mxu0 %v1118
    %v1120 = vpop.f32.mrb[0].mxu0
    %v1121 = vadd.f32 0.0, %v1120
    %v1122 = vpop.f32.mrb[0].mxu0
    %1123 = vmatprep.mubr.f32.mxu0 0.0
    %v1124 = vand.u32 %v1043, 4294901760
    %v1125 = vsub.f32 %v1043, %v1124
    %v1126 = vand.u32 %v1125, 4294901760
    %v1127 = vsub.f32 %v1125, %v1126
    %v1128 = vand.u32 %v1127, 4294901760
    %1129 = vmatmul.mubr.f32.gmra.mrb[0].mxu0 %v1128
    %v1130 = vpop.f32.mrb[0].mxu0
    %v1131 = vadd.f32 0.0, %v1130
    %v1132 = vpop.f32.mrb[0].mxu0
    %1133 = vdwg.mxu0
    %1134 = vmatprep.subr.mxu0 0.0
    %v1135 = vand.u32 %v39, 4294901760
    %v1136 = vsub.f32 %v39, %v1135
    %v1137 = vand.u32 %v1136, 4294901760
    %v1138 = vsub.f32 %v1136, %v1137
    %v1139 = vand.u32 %v1138, 4294901760
    %1140 = vmatpush1.msra.mxu0 %v1139
    %1141 = vmatprep.subr.mxu0 0.0
    %v1142 = vand.u32 %v40, 4294901760
    %v1143 = vsub.f32 %v40, %v1142
    %v1144 = vand.u32 %v1143, 4294901760
    %v1145 = vsub.f32 %v1143, %v1144
    %v1146 = vand.u32 %v1145, 4294901760
    %1147 = vmatpush1.msra.mxu0 %v1146
    %1148 = vmatprep.subr.mxu0 0.0
    %v1149 = vand.u32 %v41, 4294901760
    %v1150 = vsub.f32 %v41, %v1149
    %v1151 = vand.u32 %v1150, 4294901760
    %v1152 = vsub.f32 %v1150, %v1151
    %v1153 = vand.u32 %v1152, 4294901760
    %1154 = vmatpush1.msra.mxu0 %v1153
    %1155 = vmatprep.subr.mxu0 0.0
    %v1156 = vand.u32 %v42, 4294901760
    %v1157 = vsub.f32 %v42, %v1156
    %v1158 = vand.u32 %v1157, 4294901760
    %v1159 = vsub.f32 %v1157, %v1158
    %v1160 = vand.u32 %v1159, 4294901760
    %1161 = vmatpush1.msra.mxu0 %v1160
    %1162 = vmatprep.subr.mxu0 0.0
    %1163 = vmatpush1.msra.mxu0 0.0
    %1164 = vmatprep.subr.mxu0 0.0
    %1165 = vmatpush1.msra.mxu0 0.0
    %1166 = vmatprep.subr.mxu0 0.0
    %1167 = vmatpush1.msra.mxu0 0.0
    %1168 = vmatprep.subr.mxu0 0.0
    %1169 = vmatpush1.msra.mxu0 0.0
    %1170 = vmatprep.subr.mxu0 0.0
    %1171 = vmatpush1.msra.mxu0 0.0
    %1172 = vmatprep.subr.mxu0 0.0
    %1173 = vmatpush1.msra.mxu0 0.0
    %1174 = vmatprep.subr.mxu0 0.0
    %1175 = vmatpush1.msra.mxu0 0.0
    %1176 = vmatprep.subr.mxu0 0.0
    %1177 = vmatpush1.msra.mxu0 0.0
    %1178 = vmatprep.subr.mxu0 0.0
    %1179 = vmatpush1.msra.mxu0 0.0
    %1180 = vmatprep.subr.mxu0 0.0
    %1181 = vmatpush1.msra.mxu0 0.0
    %1182 = vmatprep.subr.mxu0 0.0
    %1183 = vmatpush1.msra.mxu0 0.0
    %1184 = vmatprep.subr.mxu0 0.0
    %1185 = vmatpush1.msra.mxu0 0.0
    %1186 = vmatprep.subr.mxu0 0.0
    %1187 = vmatpush1.msra.mxu0 0.0
    %1188 = vmatprep.subr.mxu0 0.0
    %1189 = vmatpush1.msra.mxu0 0.0
    %1190 = vmatprep.subr.mxu0 0.0
    %1191 = vmatpush1.msra.mxu0 0.0
    %1192 = vmatprep.subr.mxu0 0.0
    %1193 = vmatpush1.msra.mxu0 0.0
    %1194 = vmatprep.subr.mxu0 0.0
    %1195 = vmatpush1.msra.mxu0 0.0
    %1196 = vmatprep.subr.mxu0 0.0
    %1197 = vmatpush1.msra.mxu0 0.0
    %1198 = vmatprep.subr.mxu0 0.0
    %1199 = vmatpush1.msra.mxu0 0.0
    %1200 = vmatprep.subr.mxu0 0.0
    %1201 = vmatpush1.msra.mxu0 0.0
    %1202 = vmatprep.subr.mxu0 0.0
    %1203 = vmatpush1.msra.mxu0 0.0
    %1204 = vmatprep.subr.mxu0 0.0
    %1205 = vmatpush1.msra.mxu0 0.0
    %1206 = vmatprep.subr.mxu0 0.0
    %1207 = vmatpush1.msra.mxu0 0.0
    %1208 = vmatprep.subr.mxu0 0.0
    %1209 = vmatpush1.msra.mxu0 0.0
    %1210 = vmatprep.subr.mxu0 0.0
    %1211 = vmatpush1.msra.mxu0 0.0
    %1212 = vmatprep.subr.mxu0 0.0
    %1213 = vmatpush1.msra.mxu0 0.0
    %1214 = vmatprep.subr.mxu0 0.0
    %1215 = vmatpush1.msra.mxu0 0.0
    %1216 = vmatprep.subr.mxu0 0.0
    %1217 = vmatpush1.msra.mxu0 0.0
    %1218 = vmatprep.mubr.f32.mxu0 0.0
    %v1219 = vand.u32 %v1040, 4294901760
    %1220 = vmatmul.mubr.f32.gmra.mrb[0].mxu0 %v1219
    %v1221 = vpop.f32.mrb[0].mxu0
    %v1222 = vadd.f32 %v1121, %v1221
    %v1223 = vpop.f32.mrb[0].mxu0
    %1224 = vmatprep.mubr.f32.mxu0 0.0
    %v1225 = vand.u32 %v1043, 4294901760
    %1226 = vmatmul.mubr.f32.gmra.mrb[0].mxu0 %v1225
    %v1227 = vpop.f32.mrb[0].mxu0
    %v1228 = vadd.f32 %v1131, %v1227
    %v1229 = vpop.f32.mrb[0].mxu0
    %1230 = vdwg.mxu0
    %1231 = vmatprep.subr.mxu0 0.0
    %v1232 = vand.u32 %v39, 4294901760
    %v1233 = vsub.f32 %v39, %v1232
    %1234 = vmatpush1.msra.mxu0 %v1233
    %1235 = vmatprep.subr.mxu0 0.0
    %v1236 = vand.u32 %v40, 4294901760
    %v1237 = vsub.f32 %v40, %v1236
    %1238 = vmatpush1.msra.mxu0 %v1237
    %1239 = vmatprep.subr.mxu0 0.0
    %v1240 = vand.u32 %v41, 4294901760
    %v1241 = vsub.f32 %v41, %v1240
    %1242 = vmatpush1.msra.mxu0 %v1241
    %1243 = vmatprep.subr.mxu0 0.0
    %v1244 = vand.u32 %v42, 4294901760
    %v1245 = vsub.f32 %v42, %v1244
    %1246 = vmatpush1.msra.mxu0 %v1245
    %1247 = vmatprep.subr.mxu0 0.0
    %1248 = vmatpush1.msra.mxu0 0.0
    %1249 = vmatprep.subr.mxu0 0.0
    %1250 = vmatpush1.msra.mxu0 0.0
    %1251 = vmatprep.subr.mxu0 0.0
    %1252 = vmatpush1.msra.mxu0 0.0
    %1253 = vmatprep.subr.mxu0 0.0
    %1254 = vmatpush1.msra.mxu0 0.0
    %1255 = vmatprep.subr.mxu0 0.0
    %1256 = vmatpush1.msra.mxu0 0.0
    %1257 = vmatprep.subr.mxu0 0.0
    %1258 = vmatpush1.msra.mxu0 0.0
    %1259 = vmatprep.subr.mxu0 0.0
    %1260 = vmatpush1.msra.mxu0 0.0
    %1261 = vmatprep.subr.mxu0 0.0
    %1262 = vmatpush1.msra.mxu0 0.0
    %1263 = vmatprep.subr.mxu0 0.0
    %1264 = vmatpush1.msra.mxu0 0.0
    %1265 = vmatprep.subr.mxu0 0.0
    %1266 = vmatpush1.msra.mxu0 0.0
    %1267 = vmatprep.subr.mxu0 0.0
    %1268 = vmatpush1.msra.mxu0 0.0
    %1269 = vmatprep.subr.mxu0 0.0
    %1270 = vmatpush1.msra.mxu0 0.0
    %1271 = vmatprep.subr.mxu0 0.0
    %1272 = vmatpush1.msra.mxu0 0.0
    %1273 = vmatprep.subr.mxu0 0.0
    %1274 = vmatpush1.msra.mxu0 0.0
    %1275 = vmatprep.subr.mxu0 0.0
    %1276 = vmatpush1.msra.mxu0 0.0
    %1277 = vmatprep.subr.mxu0 0.0
    %1278 = vmatpush1.msra.mxu0 0.0
    %1279 = vmatprep.subr.mxu0 0.0
    %1280 = vmatpush1.msra.mxu0 0.0
    %1281 = vmatprep.subr.mxu0 0.0
    %1282 = vmatpush1.msra.mxu0 0.0
    %1283 = vmatprep.subr.mxu0 0.0
    %1284 = vmatpush1.msra.mxu0 0.0
    %1285 = vmatprep.subr.mxu0 0.0
    %1286 = vmatpush1.msra.mxu0 0.0
    %1287 = vmatprep.subr.mxu0 0.0
    %1288 = vmatpush1.msra.mxu0 0.0
    %1289 = vmatprep.subr.mxu0 0.0
    %1290 = vmatpush1.msra.mxu0 0.0
    %1291 = vmatprep.subr.mxu0 0.0
    %1292 = vmatpush1.msra.mxu0 0.0
    %1293 = vmatprep.subr.mxu0 0.0
    %1294 = vmatpush1.msra.mxu0 0.0
    %1295 = vmatprep.subr.mxu0 0.0
    %1296 = vmatpush1.msra.mxu0 0.0
    %1297 = vmatprep.subr.mxu0 0.0
    %1298 = vmatpush1.msra.mxu0 0.0
    %1299 = vmatprep.subr.mxu0 0.0
    %1300 = vmatpush1.msra.mxu0 0.0
    %1301 = vmatprep.subr.mxu0 0.0
    %1302 = vmatpush1.msra.mxu0 0.0
    %1303 = vmatprep.mubr.f32.mxu0 0.0
    %v1304 = vand.u32 %v1040, 4294901760
    %v1305 = vsub.f32 %v1040, %v1304
    %1306 = vmatmul.mubr.f32.gmra.mrb[0].mxu0 %v1305
    %v1307 = vpop.f32.mrb[0].mxu0
    %v1308 = vadd.f32 %v1222, %v1307
    %v1309 = vpop.f32.mrb[0].mxu0
    %1310 = vmatprep.mubr.f32.mxu0 0.0
    %v1311 = vand.u32 %v1043, 4294901760
    %v1312 = vsub.f32 %v1043, %v1311
    %1313 = vmatmul.mubr.f32.gmra.mrb[0].mxu0 %v1312
    %v1314 = vpop.f32.mrb[0].mxu0
    %v1315 = vadd.f32 %v1228, %v1314
    %v1316 = vpop.f32.mrb[0].mxu0
    %1317 = vdwg.mxu0
    %1318 = vmatprep.subr.mxu0 0.0
    %v1319 = vand.u32 %v39, 4294901760
    %1320 = vmatpush1.msra.mxu0 %v1319
    %1321 = vmatprep.subr.mxu0 0.0
    %v1322 = vand.u32 %v40, 4294901760
    %1323 = vmatpush1.msra.mxu0 %v1322
    %1324 = vmatprep.subr.mxu0 0.0
    %v1325 = vand.u32 %v41, 4294901760
    %1326 = vmatpush1.msra.mxu0 %v1325
    %1327 = vmatprep.subr.mxu0 0.0
    %v1328 = vand.u32 %v42, 4294901760
    %1329 = vmatpush1.msra.mxu0 %v1328
    %1330 = vmatprep.subr.mxu0 0.0
    %1331 = vmatpush1.msra.mxu0 0.0
    %1332 = vmatprep.subr.mxu0 0.0
    %1333 = vmatpush1.msra.mxu0 0.0
    %1334 = vmatprep.subr.mxu0 0.0
    %1335 = vmatpush1.msra.mxu0 0.0
    %1336 = vmatprep.subr.mxu0 0.0
    %1337 = vmatpush1.msra.mxu0 0.0
    %1338 = vmatprep.subr.mxu0 0.0
    %1339 = vmatpush1.msra.mxu0 0.0
    %1340 = vmatprep.subr.mxu0 0.0
    %1341 = vmatpush1.msra.mxu0 0.0
    %1342 = vmatprep.subr.mxu0 0.0
    %1343 = vmatpush1.msra.mxu0 0.0
    %1344 = vmatprep.subr.mxu0 0.0
    %1345 = vmatpush1.msra.mxu0 0.0
    %1346 = vmatprep.subr.mxu0 0.0
    %1347 = vmatpush1.msra.mxu0 0.0
    %1348 = vmatprep.subr.mxu0 0.0
    %1349 = vmatpush1.msra.mxu0 0.0
    %1350 = vmatprep.subr.mxu0 0.0
    %1351 = vmatpush1.msra.mxu0 0.0
    %1352 = vmatprep.subr.mxu0 0.0
    %1353 = vmatpush1.msra.mxu0 0.0
    %1354 = vmatprep.subr.mxu0 0.0
    %1355 = vmatpush1.msra.mxu0 0.0
    %1356 = vmatprep.subr.mxu0 0.0
    %1357 = vmatpush1.msra.mxu0 0.0
    %1358 = vmatprep.subr.mxu0 0.0
    %1359 = vmatpush1.msra.mxu0 0.0
    %1360 = vmatprep.subr.mxu0 0.0
    %1361 = vmatpush1.msra.mxu0 0.0
    %1362 = vmatprep.subr.mxu0 0.0
    %1363 = vmatpush1.msra.mxu0 0.0
    %1364 = vmatprep.subr.mxu0 0.0
    %1365 = vmatpush1.msra.mxu0 0.0
    %1366 = vmatprep.subr.mxu0 0.0
    %1367 = vmatpush1.msra.mxu0 0.0
    %1368 = vmatprep.subr.mxu0 0.0
    %1369 = vmatpush1.msra.mxu0 0.0
    %1370 = vmatprep.subr.mxu0 0.0
    %1371 = vmatpush1.msra.mxu0 0.0
    %1372 = vmatprep.subr.mxu0 0.0
    %1373 = vmatpush1.msra.mxu0 0.0
    %1374 = vmatprep.subr.mxu0 0.0
    %1375 = vmatpush1.msra.mxu0 0.0
    %1376 = vmatprep.subr.mxu0 0.0
    %1377 = vmatpush1.msra.mxu0 0.0
    %1378 = vmatprep.subr.mxu0 0.0
    %1379 = vmatpush1.msra.mxu0 0.0
    %1380 = vmatprep.subr.mxu0 0.0
    %1381 = vmatpush1.msra.mxu0 0.0
    %1382 = vmatprep.subr.mxu0 0.0
    %1383 = vmatpush1.msra.mxu0 0.0
    %1384 = vmatprep.subr.mxu0 0.0
    %1385 = vmatpush1.msra.mxu0 0.0
    %1386 = vmatprep.mubr.f32.mxu0 0.0
    %v1387 = vand.u32 %v1040, 4294901760
    %v1388 = vsub.f32 %v1040, %v1387
    %v1389 = vand.u32 %v1388, 4294901760
    %1390 = vmatmul.mubr.f32.gmra.mrb[0].mxu0 %v1389
    %v1391 = vpop.f32.mrb[0].mxu0
    %v1392 = vadd.f32 %v1308, %v1391
    %v1393 = vpop.f32.mrb[0].mxu0
    %1394 = vmatprep.mubr.f32.mxu0 0.0
    %v1395 = vand.u32 %v1043, 4294901760
    %v1396 = vsub.f32 %v1043, %v1395
    %v1397 = vand.u32 %v1396, 4294901760
    %1398 = vmatmul.mubr.f32.gmra.mrb[0].mxu0 %v1397
    %v1399 = vpop.f32.mrb[0].mxu0
    %v1400 = vadd.f32 %v1315, %v1399
    %v1401 = vpop.f32.mrb[0].mxu0
    %1402 = vdwg.mxu0
    %1403 = vmatprep.subr.mxu0 0.0
    %v1404 = vand.u32 %v39, 4294901760
    %v1405 = vsub.f32 %v39, %v1404
    %v1406 = vand.u32 %v1405, 4294901760
    %1407 = vmatpush1.msra.mxu0 %v1406
    %1408 = vmatprep.subr.mxu0 0.0
    %v1409 = vand.u32 %v40, 4294901760
    %v1410 = vsub.f32 %v40, %v1409
    %v1411 = vand.u32 %v1410, 4294901760
    %1412 = vmatpush1.msra.mxu0 %v1411
    %1413 = vmatprep.subr.mxu0 0.0
    %v1414 = vand.u32 %v41, 4294901760
    %v1415 = vsub.f32 %v41, %v1414
    %v1416 = vand.u32 %v1415, 4294901760
    %1417 = vmatpush1.msra.mxu0 %v1416
    %1418 = vmatprep.subr.mxu0 0.0
    %v1419 = vand.u32 %v42, 4294901760
    %v1420 = vsub.f32 %v42, %v1419
    %v1421 = vand.u32 %v1420, 4294901760
    %1422 = vmatpush1.msra.mxu0 %v1421
    %1423 = vmatprep.subr.mxu0 0.0
    %1424 = vmatpush1.msra.mxu0 0.0
    %1425 = vmatprep.subr.mxu0 0.0
    %1426 = vmatpush1.msra.mxu0 0.0
    %1427 = vmatprep.subr.mxu0 0.0
    %1428 = vmatpush1.msra.mxu0 0.0
    %1429 = vmatprep.subr.mxu0 0.0
    %1430 = vmatpush1.msra.mxu0 0.0
    %1431 = vmatprep.subr.mxu0 0.0
    %1432 = vmatpush1.msra.mxu0 0.0
    %1433 = vmatprep.subr.mxu0 0.0
    %1434 = vmatpush1.msra.mxu0 0.0
    %1435 = vmatprep.subr.mxu0 0.0
    %1436 = vmatpush1.msra.mxu0 0.0
    %1437 = vmatprep.subr.mxu0 0.0
    %1438 = vmatpush1.msra.mxu0 0.0
    %1439 = vmatprep.subr.mxu0 0.0
    %1440 = vmatpush1.msra.mxu0 0.0
    %1441 = vmatprep.subr.mxu0 0.0
    %1442 = vmatpush1.msra.mxu0 0.0
    %1443 = vmatprep.subr.mxu0 0.0
    %1444 = vmatpush1.msra.mxu0 0.0
    %1445 = vmatprep.subr.mxu0 0.0
    %1446 = vmatpush1.msra.mxu0 0.0
    %1447 = vmatprep.subr.mxu0 0.0
    %1448 = vmatpush1.msra.mxu0 0.0
    %1449 = vmatprep.subr.mxu0 0.0
    %1450 = vmatpush1.msra.mxu0 0.0
    %1451 = vmatprep.subr.mxu0 0.0
    %1452 = vmatpush1.msra.mxu0 0.0
    %1453 = vmatprep.subr.mxu0 0.0
    %1454 = vmatpush1.msra.mxu0 0.0
    %1455 = vmatprep.subr.mxu0 0.0
    %1456 = vmatpush1.msra.mxu0 0.0
    %1457 = vmatprep.subr.mxu0 0.0
    %1458 = vmatpush1.msra.mxu0 0.0
    %1459 = vmatprep.subr.mxu0 0.0
    %1460 = vmatpush1.msra.mxu0 0.0
    %1461 = vmatprep.subr.mxu0 0.0
    %1462 = vmatpush1.msra.mxu0 0.0
    %1463 = vmatprep.subr.mxu0 0.0
    %1464 = vmatpush1.msra.mxu0 0.0
    %1465 = vmatprep.subr.mxu0 0.0
    %1466 = vmatpush1.msra.mxu0 0.0
    %1467 = vmatprep.subr.mxu0 0.0
    %1468 = vmatpush1.msra.mxu0 0.0
    %1469 = vmatprep.subr.mxu0 0.0
    %1470 = vmatpush1.msra.mxu0 0.0
    %1471 = vmatprep.subr.mxu0 0.0
    %1472 = vmatpush1.msra.mxu0 0.0
    %1473 = vmatprep.subr.mxu0 0.0
    %1474 = vmatpush1.msra.mxu0 0.0
    %1475 = vmatprep.subr.mxu0 0.0
    %1476 = vmatpush1.msra.mxu0 0.0
    %1477 = vmatprep.subr.mxu0 0.0
    %1478 = vmatpush1.msra.mxu0 0.0
    %1479 = vmatprep.mubr.f32.mxu0 0.0
    %v1480 = vand.u32 %v1040, 4294901760
    %1481 = vmatmul.mubr.f32.gmra.mrb[0].mxu0 %v1480
    %v1482 = vpop.f32.mrb[0].mxu0
    %v1483 = vadd.f32 %v1392, %v1482
    %v1484 = vpop.f32.mrb[0].mxu0
    %1485 = vmatprep.mubr.f32.mxu0 0.0
    %v1486 = vand.u32 %v1043, 4294901760
    %1487 = vmatmul.mubr.f32.gmra.mrb[0].mxu0 %v1486
    %v1488 = vpop.f32.mrb[0].mxu0
    %v1489 = vadd.f32 %v1400, %v1488
    %v1490 = vpop.f32.mrb[0].mxu0
    %1491 = vdwg.mxu0
    %1492 = vmatprep.subr.mxu0 0.0
    %v1493 = vand.u32 %v39, 4294901760
    %1494 = vmatpush1.msra.mxu0 %v1493
    %1495 = vmatprep.subr.mxu0 0.0
    %v1496 = vand.u32 %v40, 4294901760
    %1497 = vmatpush1.msra.mxu0 %v1496
    %1498 = vmatprep.subr.mxu0 0.0
    %v1499 = vand.u32 %v41, 4294901760
    %1500 = vmatpush1.msra.mxu0 %v1499
    %1501 = vmatprep.subr.mxu0 0.0
    %v1502 = vand.u32 %v42, 4294901760
    %1503 = vmatpush1.msra.mxu0 %v1502
    %1504 = vmatprep.subr.mxu0 0.0
    %1505 = vmatpush1.msra.mxu0 0.0
    %1506 = vmatprep.subr.mxu0 0.0
    %1507 = vmatpush1.msra.mxu0 0.0
    %1508 = vmatprep.subr.mxu0 0.0
    %1509 = vmatpush1.msra.mxu0 0.0
    %1510 = vmatprep.subr.mxu0 0.0
    %1511 = vmatpush1.msra.mxu0 0.0
    %1512 = vmatprep.subr.mxu0 0.0
    %1513 = vmatpush1.msra.mxu0 0.0
    %1514 = vmatprep.subr.mxu0 0.0
    %1515 = vmatpush1.msra.mxu0 0.0
    %1516 = vmatprep.subr.mxu0 0.0
    %1517 = vmatpush1.msra.mxu0 0.0
    %1518 = vmatprep.subr.mxu0 0.0
    %1519 = vmatpush1.msra.mxu0 0.0
    %1520 = vmatprep.subr.mxu0 0.0
    %1521 = vmatpush1.msra.mxu0 0.0
    %1522 = vmatprep.subr.mxu0 0.0
    %1523 = vmatpush1.msra.mxu0 0.0
    %1524 = vmatprep.subr.mxu0 0.0
    %1525 = vmatpush1.msra.mxu0 0.0
    %1526 = vmatprep.subr.mxu0 0.0
    %1527 = vmatpush1.msra.mxu0 0.0
    %1528 = vmatprep.subr.mxu0 0.0
    %1529 = vmatpush1.msra.mxu0 0.0
    %1530 = vmatprep.subr.mxu0 0.0
    %1531 = vmatpush1.msra.mxu0 0.0
    %1532 = vmatprep.subr.mxu0 0.0
    %1533 = vmatpush1.msra.mxu0 0.0
    %1534 = vmatprep.subr.mxu0 0.0
    %1535 = vmatpush1.msra.mxu0 0.0
    %1536 = vmatprep.subr.mxu0 0.0
    %1537 = vmatpush1.msra.mxu0 0.0
    %1538 = vmatprep.subr.mxu0 0.0
    %1539 = vmatpush1.msra.mxu0 0.0
    %1540 = vmatprep.subr.mxu0 0.0
    %1541 = vmatpush1.msra.mxu0 0.0
    %1542 = vmatprep.subr.mxu0 0.0
    %1543 = vmatpush1.msra.mxu0 0.0
    %1544 = vmatprep.subr.mxu0 0.0
    %1545 = vmatpush1.msra.mxu0 0.0
    %1546 = vmatprep.subr.mxu0 0.0
    %1547 = vmatpush1.msra.mxu0 0.0
    %1548 = vmatprep.subr.mxu0 0.0
    %1549 = vmatpush1.msra.mxu0 0.0
    %1550 = vmatprep.subr.mxu0 0.0
    %1551 = vmatpush1.msra.mxu0 0.0
    %1552 = vmatprep.subr.mxu0 0.0
    %1553 = vmatpush1.msra.mxu0 0.0
    %1554 = vmatprep.subr.mxu0 0.0
    %1555 = vmatpush1.msra.mxu0 0.0
    %1556 = vmatprep.subr.mxu0 0.0
    %1557 = vmatpush1.msra.mxu0 0.0
    %1558 = vmatprep.subr.mxu0 0.0
    %1559 = vmatpush1.msra.mxu0 0.0
    %1560 = vmatprep.mubr.f32.mxu0 0.0
    %v1561 = vand.u32 %v1040, 4294901760
    %1562 = vmatmul.mubr.f32.gmra.mrb[0].mxu0 %v1561
    %v1563 = vpop.f32.mrb[0].mxu0
    %v1564 = vadd.f32 %v1483, %v1563
    %v1565 = vpop.f32.mrb[0].mxu0
    %1566 = vmatprep.mubr.f32.mxu0 0.0
    %v1567 = vand.u32 %v1043, 4294901760
    %1568 = vmatmul.mubr.f32.gmra.mrb[0].mxu0 %v1567
    %v1569 = vpop.f32.mrb[0].mxu0
    %v1570 = vadd.f32 %v1489, %v1569
    %v1571 = vpop.f32.mrb[0].mxu0
    %1572 = vdwg.mxu0
    %v1574 = vsel %vm62, %v33, 0
    %v1577 = vsel %vm62, %v34, 0
    %1579 = vmatprep.subr.mxu0 0.0
    %v1580 = vand.u32 %v39, 4294901760
    %1581 = vmatpush1.msra.mxu0 %v1580
    %1582 = vmatprep.subr.mxu0 0.0
    %v1583 = vand.u32 %v40, 4294901760
    %1584 = vmatpush1.msra.mxu0 %v1583
    %1585 = vmatprep.subr.mxu0 0.0
    %v1586 = vand.u32 %v41, 4294901760
    %1587 = vmatpush1.msra.mxu0 %v1586
    %1588 = vmatprep.subr.mxu0 0.0
    %v1589 = vand.u32 %v42, 4294901760
    %1590 = vmatpush1.msra.mxu0 %v1589
    %1591 = vmatprep.subr.mxu0 0.0
    %1592 = vmatpush1.msra.mxu0 0.0
    %1593 = vmatprep.subr.mxu0 0.0
    %1594 = vmatpush1.msra.mxu0 0.0
    %1595 = vmatprep.subr.mxu0 0.0
    %1596 = vmatpush1.msra.mxu0 0.0
    %1597 = vmatprep.subr.mxu0 0.0
    %1598 = vmatpush1.msra.mxu0 0.0
    %1599 = vmatprep.subr.mxu0 0.0
    %1600 = vmatpush1.msra.mxu0 0.0
    %1601 = vmatprep.subr.mxu0 0.0
    %1602 = vmatpush1.msra.mxu0 0.0
    %1603 = vmatprep.subr.mxu0 0.0
    %1604 = vmatpush1.msra.mxu0 0.0
    %1605 = vmatprep.subr.mxu0 0.0
    %1606 = vmatpush1.msra.mxu0 0.0
    %1607 = vmatprep.subr.mxu0 0.0
    %1608 = vmatpush1.msra.mxu0 0.0
    %1609 = vmatprep.subr.mxu0 0.0
    %1610 = vmatpush1.msra.mxu0 0.0
    %1611 = vmatprep.subr.mxu0 0.0
    %1612 = vmatpush1.msra.mxu0 0.0
    %1613 = vmatprep.subr.mxu0 0.0
    %1614 = vmatpush1.msra.mxu0 0.0
    %1615 = vmatprep.subr.mxu0 0.0
    %1616 = vmatpush1.msra.mxu0 0.0
    %1617 = vmatprep.subr.mxu0 0.0
    %1618 = vmatpush1.msra.mxu0 0.0
    %1619 = vmatprep.subr.mxu0 0.0
    %1620 = vmatpush1.msra.mxu0 0.0
    %1621 = vmatprep.subr.mxu0 0.0
    %1622 = vmatpush1.msra.mxu0 0.0
    %1623 = vmatprep.subr.mxu0 0.0
    %1624 = vmatpush1.msra.mxu0 0.0
    %1625 = vmatprep.subr.mxu0 0.0
    %1626 = vmatpush1.msra.mxu0 0.0
    %1627 = vmatprep.subr.mxu0 0.0
    %1628 = vmatpush1.msra.mxu0 0.0
    %1629 = vmatprep.subr.mxu0 0.0
    %1630 = vmatpush1.msra.mxu0 0.0
    %1631 = vmatprep.subr.mxu0 0.0
    %1632 = vmatpush1.msra.mxu0 0.0
    %1633 = vmatprep.subr.mxu0 0.0
    %1634 = vmatpush1.msra.mxu0 0.0
    %1635 = vmatprep.subr.mxu0 0.0
    %1636 = vmatpush1.msra.mxu0 0.0
    %1637 = vmatprep.subr.mxu0 0.0
    %1638 = vmatpush1.msra.mxu0 0.0
    %1639 = vmatprep.subr.mxu0 0.0
    %1640 = vmatpush1.msra.mxu0 0.0
    %1641 = vmatprep.subr.mxu0 0.0
    %1642 = vmatpush1.msra.mxu0 0.0
    %1643 = vmatprep.subr.mxu0 0.0
    %1644 = vmatpush1.msra.mxu0 0.0
    %1645 = vmatprep.subr.mxu0 0.0
    %1646 = vmatpush1.msra.mxu0 0.0
    %1647 = vmatprep.mubr.f32.mxu0 0.0
    %v1648 = vand.u32 %v1574, 4294901760
    %v1649 = vsub.f32 %v1574, %v1648
    %v1650 = vand.u32 %v1649, 4294901760
    %v1651 = vsub.f32 %v1649, %v1650
    %v1652 = vand.u32 %v1651, 4294901760
    %1653 = vmatmul.mubr.f32.gmra.mrb[0].mxu0 %v1652
    %v1654 = vpop.f32.mrb[0].mxu0
    %v1655 = vadd.f32 0.0, %v1654
    %v1656 = vpop.f32.mrb[0].mxu0
    %1657 = vmatprep.mubr.f32.mxu0 0.0
    %v1658 = vand.u32 %v1577, 4294901760
    %v1659 = vsub.f32 %v1577, %v1658
    %v1660 = vand.u32 %v1659, 4294901760
    %v1661 = vsub.f32 %v1659, %v1660
    %v1662 = vand.u32 %v1661, 4294901760
    %1663 = vmatmul.mubr.f32.gmra.mrb[0].mxu0 %v1662
    %v1664 = vpop.f32.mrb[0].mxu0
    %v1665 = vadd.f32 0.0, %v1664
    %v1666 = vpop.f32.mrb[0].mxu0
    %1667 = vdwg.mxu0
    %1668 = vmatprep.subr.mxu0 0.0
    %v1669 = vand.u32 %v39, 4294901760
    %v1670 = vsub.f32 %v39, %v1669
    %v1671 = vand.u32 %v1670, 4294901760
    %v1672 = vsub.f32 %v1670, %v1671
    %v1673 = vand.u32 %v1672, 4294901760
    %1674 = vmatpush1.msra.mxu0 %v1673
    %1675 = vmatprep.subr.mxu0 0.0
    %v1676 = vand.u32 %v40, 4294901760
    %v1677 = vsub.f32 %v40, %v1676
    %v1678 = vand.u32 %v1677, 4294901760
    %v1679 = vsub.f32 %v1677, %v1678
    %v1680 = vand.u32 %v1679, 4294901760
    %1681 = vmatpush1.msra.mxu0 %v1680
    %1682 = vmatprep.subr.mxu0 0.0
    %v1683 = vand.u32 %v41, 4294901760
    %v1684 = vsub.f32 %v41, %v1683
    %v1685 = vand.u32 %v1684, 4294901760
    %v1686 = vsub.f32 %v1684, %v1685
    %v1687 = vand.u32 %v1686, 4294901760
    %1688 = vmatpush1.msra.mxu0 %v1687
    %1689 = vmatprep.subr.mxu0 0.0
    %v1690 = vand.u32 %v42, 4294901760
    %v1691 = vsub.f32 %v42, %v1690
    %v1692 = vand.u32 %v1691, 4294901760
    %v1693 = vsub.f32 %v1691, %v1692
    %v1694 = vand.u32 %v1693, 4294901760
    %1695 = vmatpush1.msra.mxu0 %v1694
    %1696 = vmatprep.subr.mxu0 0.0
    %1697 = vmatpush1.msra.mxu0 0.0
    %1698 = vmatprep.subr.mxu0 0.0
    %1699 = vmatpush1.msra.mxu0 0.0
    %1700 = vmatprep.subr.mxu0 0.0
    %1701 = vmatpush1.msra.mxu0 0.0
    %1702 = vmatprep.subr.mxu0 0.0
    %1703 = vmatpush1.msra.mxu0 0.0
    %1704 = vmatprep.subr.mxu0 0.0
    %1705 = vmatpush1.msra.mxu0 0.0
    %1706 = vmatprep.subr.mxu0 0.0
    %1707 = vmatpush1.msra.mxu0 0.0
    %1708 = vmatprep.subr.mxu0 0.0
    %1709 = vmatpush1.msra.mxu0 0.0
    %1710 = vmatprep.subr.mxu0 0.0
    %1711 = vmatpush1.msra.mxu0 0.0
    %1712 = vmatprep.subr.mxu0 0.0
    %1713 = vmatpush1.msra.mxu0 0.0
    %1714 = vmatprep.subr.mxu0 0.0
    %1715 = vmatpush1.msra.mxu0 0.0
    %1716 = vmatprep.subr.mxu0 0.0
    %1717 = vmatpush1.msra.mxu0 0.0
    %1718 = vmatprep.subr.mxu0 0.0
    %1719 = vmatpush1.msra.mxu0 0.0
    %1720 = vmatprep.subr.mxu0 0.0
    %1721 = vmatpush1.msra.mxu0 0.0
    %1722 = vmatprep.subr.mxu0 0.0
    %1723 = vmatpush1.msra.mxu0 0.0
    %1724 = vmatprep.subr.mxu0 0.0
    %1725 = vmatpush1.msra.mxu0 0.0
    %1726 = vmatprep.subr.mxu0 0.0
    %1727 = vmatpush1.msra.mxu0 0.0
    %1728 = vmatprep.subr.mxu0 0.0
    %1729 = vmatpush1.msra.mxu0 0.0
    %1730 = vmatprep.subr.mxu0 0.0
    %1731 = vmatpush1.msra.mxu0 0.0
    %1732 = vmatprep.subr.mxu0 0.0
    %1733 = vmatpush1.msra.mxu0 0.0
    %1734 = vmatprep.subr.mxu0 0.0
    %1735 = vmatpush1.msra.mxu0 0.0
    %1736 = vmatprep.subr.mxu0 0.0
    %1737 = vmatpush1.msra.mxu0 0.0
    %1738 = vmatprep.subr.mxu0 0.0
    %1739 = vmatpush1.msra.mxu0 0.0
    %1740 = vmatprep.subr.mxu0 0.0
    %1741 = vmatpush1.msra.mxu0 0.0
    %1742 = vmatprep.subr.mxu0 0.0
    %1743 = vmatpush1.msra.mxu0 0.0
    %1744 = vmatprep.subr.mxu0 0.0
    %1745 = vmatpush1.msra.mxu0 0.0
    %1746 = vmatprep.subr.mxu0 0.0
    %1747 = vmatpush1.msra.mxu0 0.0
    %1748 = vmatprep.subr.mxu0 0.0
    %1749 = vmatpush1.msra.mxu0 0.0
    %1750 = vmatprep.subr.mxu0 0.0
    %1751 = vmatpush1.msra.mxu0 0.0
    %1752 = vmatprep.mubr.f32.mxu0 0.0
    %v1753 = vand.u32 %v1574, 4294901760
    %1754 = vmatmul.mubr.f32.gmra.mrb[0].mxu0 %v1753
    %v1755 = vpop.f32.mrb[0].mxu0
    %v1756 = vadd.f32 %v1655, %v1755
    %v1757 = vpop.f32.mrb[0].mxu0
    %1758 = vmatprep.mubr.f32.mxu0 0.0
    %v1759 = vand.u32 %v1577, 4294901760
    %1760 = vmatmul.mubr.f32.gmra.mrb[0].mxu0 %v1759
    %v1761 = vpop.f32.mrb[0].mxu0
    %v1762 = vadd.f32 %v1665, %v1761
    %v1763 = vpop.f32.mrb[0].mxu0
    %1764 = vdwg.mxu0
    %1765 = vmatprep.subr.mxu0 0.0
    %v1766 = vand.u32 %v39, 4294901760
    %v1767 = vsub.f32 %v39, %v1766
    %1768 = vmatpush1.msra.mxu0 %v1767
    %1769 = vmatprep.subr.mxu0 0.0
    %v1770 = vand.u32 %v40, 4294901760
    %v1771 = vsub.f32 %v40, %v1770
    %1772 = vmatpush1.msra.mxu0 %v1771
    %1773 = vmatprep.subr.mxu0 0.0
    %v1774 = vand.u32 %v41, 4294901760
    %v1775 = vsub.f32 %v41, %v1774
    %1776 = vmatpush1.msra.mxu0 %v1775
    %1777 = vmatprep.subr.mxu0 0.0
    %v1778 = vand.u32 %v42, 4294901760
    %v1779 = vsub.f32 %v42, %v1778
    %1780 = vmatpush1.msra.mxu0 %v1779
    %1781 = vmatprep.subr.mxu0 0.0
    %1782 = vmatpush1.msra.mxu0 0.0
    %1783 = vmatprep.subr.mxu0 0.0
    %1784 = vmatpush1.msra.mxu0 0.0
    %1785 = vmatprep.subr.mxu0 0.0
    %1786 = vmatpush1.msra.mxu0 0.0
    %1787 = vmatprep.subr.mxu0 0.0
    %1788 = vmatpush1.msra.mxu0 0.0
    %1789 = vmatprep.subr.mxu0 0.0
    %1790 = vmatpush1.msra.mxu0 0.0
    %1791 = vmatprep.subr.mxu0 0.0
    %1792 = vmatpush1.msra.mxu0 0.0
    %1793 = vmatprep.subr.mxu0 0.0
    %1794 = vmatpush1.msra.mxu0 0.0
    %1795 = vmatprep.subr.mxu0 0.0
    %1796 = vmatpush1.msra.mxu0 0.0
    %1797 = vmatprep.subr.mxu0 0.0
    %1798 = vmatpush1.msra.mxu0 0.0
    %1799 = vmatprep.subr.mxu0 0.0
    %1800 = vmatpush1.msra.mxu0 0.0
    %1801 = vmatprep.subr.mxu0 0.0
    %1802 = vmatpush1.msra.mxu0 0.0
    %1803 = vmatprep.subr.mxu0 0.0
    %1804 = vmatpush1.msra.mxu0 0.0
    %1805 = vmatprep.subr.mxu0 0.0
    %1806 = vmatpush1.msra.mxu0 0.0
    %1807 = vmatprep.subr.mxu0 0.0
    %1808 = vmatpush1.msra.mxu0 0.0
    %1809 = vmatprep.subr.mxu0 0.0
    %1810 = vmatpush1.msra.mxu0 0.0
    %1811 = vmatprep.subr.mxu0 0.0
    %1812 = vmatpush1.msra.mxu0 0.0
    %1813 = vmatprep.subr.mxu0 0.0
    %1814 = vmatpush1.msra.mxu0 0.0
    %1815 = vmatprep.subr.mxu0 0.0
    %1816 = vmatpush1.msra.mxu0 0.0
    %1817 = vmatprep.subr.mxu0 0.0
    %1818 = vmatpush1.msra.mxu0 0.0
    %1819 = vmatprep.subr.mxu0 0.0
    %1820 = vmatpush1.msra.mxu0 0.0
    %1821 = vmatprep.subr.mxu0 0.0
    %1822 = vmatpush1.msra.mxu0 0.0
    %1823 = vmatprep.subr.mxu0 0.0
    %1824 = vmatpush1.msra.mxu0 0.0
    %1825 = vmatprep.subr.mxu0 0.0
    %1826 = vmatpush1.msra.mxu0 0.0
    %1827 = vmatprep.subr.mxu0 0.0
    %1828 = vmatpush1.msra.mxu0 0.0
    %1829 = vmatprep.subr.mxu0 0.0
    %1830 = vmatpush1.msra.mxu0 0.0
    %1831 = vmatprep.subr.mxu0 0.0
    %1832 = vmatpush1.msra.mxu0 0.0
    %1833 = vmatprep.subr.mxu0 0.0
    %1834 = vmatpush1.msra.mxu0 0.0
    %1835 = vmatprep.subr.mxu0 0.0
    %1836 = vmatpush1.msra.mxu0 0.0
    %1837 = vmatprep.mubr.f32.mxu0 0.0
    %v1838 = vand.u32 %v1574, 4294901760
    %v1839 = vsub.f32 %v1574, %v1838
    %1840 = vmatmul.mubr.f32.gmra.mrb[0].mxu0 %v1839
    %v1841 = vpop.f32.mrb[0].mxu0
    %v1842 = vadd.f32 %v1756, %v1841
    %v1843 = vpop.f32.mrb[0].mxu0
    %1844 = vmatprep.mubr.f32.mxu0 0.0
    %v1845 = vand.u32 %v1577, 4294901760
    %v1846 = vsub.f32 %v1577, %v1845
    %1847 = vmatmul.mubr.f32.gmra.mrb[0].mxu0 %v1846
    %v1848 = vpop.f32.mrb[0].mxu0
    %v1849 = vadd.f32 %v1762, %v1848
    %v1850 = vpop.f32.mrb[0].mxu0
    %1851 = vdwg.mxu0
    %1852 = vmatprep.subr.mxu0 0.0
    %v1853 = vand.u32 %v39, 4294901760
    %1854 = vmatpush1.msra.mxu0 %v1853
    %1855 = vmatprep.subr.mxu0 0.0
    %v1856 = vand.u32 %v40, 4294901760
    %1857 = vmatpush1.msra.mxu0 %v1856
    %1858 = vmatprep.subr.mxu0 0.0
    %v1859 = vand.u32 %v41, 4294901760
    %1860 = vmatpush1.msra.mxu0 %v1859
    %1861 = vmatprep.subr.mxu0 0.0
    %v1862 = vand.u32 %v42, 4294901760
    %1863 = vmatpush1.msra.mxu0 %v1862
    %1864 = vmatprep.subr.mxu0 0.0
    %1865 = vmatpush1.msra.mxu0 0.0
    %1866 = vmatprep.subr.mxu0 0.0
    %1867 = vmatpush1.msra.mxu0 0.0
    %1868 = vmatprep.subr.mxu0 0.0
    %1869 = vmatpush1.msra.mxu0 0.0
    %1870 = vmatprep.subr.mxu0 0.0
    %1871 = vmatpush1.msra.mxu0 0.0
    %1872 = vmatprep.subr.mxu0 0.0
    %1873 = vmatpush1.msra.mxu0 0.0
    %1874 = vmatprep.subr.mxu0 0.0
    %1875 = vmatpush1.msra.mxu0 0.0
    %1876 = vmatprep.subr.mxu0 0.0
    %1877 = vmatpush1.msra.mxu0 0.0
    %1878 = vmatprep.subr.mxu0 0.0
    %1879 = vmatpush1.msra.mxu0 0.0
    %1880 = vmatprep.subr.mxu0 0.0
    %1881 = vmatpush1.msra.mxu0 0.0
    %1882 = vmatprep.subr.mxu0 0.0
    %1883 = vmatpush1.msra.mxu0 0.0
    %1884 = vmatprep.subr.mxu0 0.0
    %1885 = vmatpush1.msra.mxu0 0.0
    %1886 = vmatprep.subr.mxu0 0.0
    %1887 = vmatpush1.msra.mxu0 0.0
    %1888 = vmatprep.subr.mxu0 0.0
    %1889 = vmatpush1.msra.mxu0 0.0
    %1890 = vmatprep.subr.mxu0 0.0
    %1891 = vmatpush1.msra.mxu0 0.0
    %1892 = vmatprep.subr.mxu0 0.0
    %1893 = vmatpush1.msra.mxu0 0.0
    %1894 = vmatprep.subr.mxu0 0.0
    %1895 = vmatpush1.msra.mxu0 0.0
    %1896 = vmatprep.subr.mxu0 0.0
    %1897 = vmatpush1.msra.mxu0 0.0
    %1898 = vmatprep.subr.mxu0 0.0
    %1899 = vmatpush1.msra.mxu0 0.0
    %1900 = vmatprep.subr.mxu0 0.0
    %1901 = vmatpush1.msra.mxu0 0.0
    %1902 = vmatprep.subr.mxu0 0.0
    %1903 = vmatpush1.msra.mxu0 0.0
    %1904 = vmatprep.subr.mxu0 0.0
    %1905 = vmatpush1.msra.mxu0 0.0
    %1906 = vmatprep.subr.mxu0 0.0
    %1907 = vmatpush1.msra.mxu0 0.0
    %1908 = vmatprep.subr.mxu0 0.0
    %1909 = vmatpush1.msra.mxu0 0.0
    %1910 = vmatprep.subr.mxu0 0.0
    %1911 = vmatpush1.msra.mxu0 0.0
    %1912 = vmatprep.subr.mxu0 0.0
    %1913 = vmatpush1.msra.mxu0 0.0
    %1914 = vmatprep.subr.mxu0 0.0
    %1915 = vmatpush1.msra.mxu0 0.0
    %1916 = vmatprep.subr.mxu0 0.0
    %1917 = vmatpush1.msra.mxu0 0.0
    %1918 = vmatprep.subr.mxu0 0.0
    %1919 = vmatpush1.msra.mxu0 0.0
    %1920 = vmatprep.mubr.f32.mxu0 0.0
    %v1921 = vand.u32 %v1574, 4294901760
    %v1922 = vsub.f32 %v1574, %v1921
    %v1923 = vand.u32 %v1922, 4294901760
    %1924 = vmatmul.mubr.f32.gmra.mrb[0].mxu0 %v1923
    %v1925 = vpop.f32.mrb[0].mxu0
    %v1926 = vadd.f32 %v1842, %v1925
    %v1927 = vpop.f32.mrb[0].mxu0
    %1928 = vmatprep.mubr.f32.mxu0 0.0
    %v1929 = vand.u32 %v1577, 4294901760
    %v1930 = vsub.f32 %v1577, %v1929
    %v1931 = vand.u32 %v1930, 4294901760
    %1932 = vmatmul.mubr.f32.gmra.mrb[0].mxu0 %v1931
    %v1933 = vpop.f32.mrb[0].mxu0
    %v1934 = vadd.f32 %v1849, %v1933
    %v1935 = vpop.f32.mrb[0].mxu0
    %1936 = vdwg.mxu0
    %1937 = vmatprep.subr.mxu0 0.0
    %v1938 = vand.u32 %v39, 4294901760
    %v1939 = vsub.f32 %v39, %v1938
    %v1940 = vand.u32 %v1939, 4294901760
    %1941 = vmatpush1.msra.mxu0 %v1940
    %1942 = vmatprep.subr.mxu0 0.0
    %v1943 = vand.u32 %v40, 4294901760
    %v1944 = vsub.f32 %v40, %v1943
    %v1945 = vand.u32 %v1944, 4294901760
    %1946 = vmatpush1.msra.mxu0 %v1945
    %1947 = vmatprep.subr.mxu0 0.0
    %v1948 = vand.u32 %v41, 4294901760
    %v1949 = vsub.f32 %v41, %v1948
    %v1950 = vand.u32 %v1949, 4294901760
    %1951 = vmatpush1.msra.mxu0 %v1950
    %1952 = vmatprep.subr.mxu0 0.0
    %v1953 = vand.u32 %v42, 4294901760
    %v1954 = vsub.f32 %v42, %v1953
    %v1955 = vand.u32 %v1954, 4294901760
    %1956 = vmatpush1.msra.mxu0 %v1955
    %1957 = vmatprep.subr.mxu0 0.0
    %1958 = vmatpush1.msra.mxu0 0.0
    %1959 = vmatprep.subr.mxu0 0.0
    %1960 = vmatpush1.msra.mxu0 0.0
    %1961 = vmatprep.subr.mxu0 0.0
    %1962 = vmatpush1.msra.mxu0 0.0
    %1963 = vmatprep.subr.mxu0 0.0
    %1964 = vmatpush1.msra.mxu0 0.0
    %1965 = vmatprep.subr.mxu0 0.0
    %1966 = vmatpush1.msra.mxu0 0.0
    %1967 = vmatprep.subr.mxu0 0.0
    %1968 = vmatpush1.msra.mxu0 0.0
    %1969 = vmatprep.subr.mxu0 0.0
    %1970 = vmatpush1.msra.mxu0 0.0
    %1971 = vmatprep.subr.mxu0 0.0
    %1972 = vmatpush1.msra.mxu0 0.0
    %1973 = vmatprep.subr.mxu0 0.0
    %1974 = vmatpush1.msra.mxu0 0.0
    %1975 = vmatprep.subr.mxu0 0.0
    %1976 = vmatpush1.msra.mxu0 0.0
    %1977 = vmatprep.subr.mxu0 0.0
    %1978 = vmatpush1.msra.mxu0 0.0
    %1979 = vmatprep.subr.mxu0 0.0
    %1980 = vmatpush1.msra.mxu0 0.0
    %1981 = vmatprep.subr.mxu0 0.0
    %1982 = vmatpush1.msra.mxu0 0.0
    %1983 = vmatprep.subr.mxu0 0.0
    %1984 = vmatpush1.msra.mxu0 0.0
    %1985 = vmatprep.subr.mxu0 0.0
    %1986 = vmatpush1.msra.mxu0 0.0
    %1987 = vmatprep.subr.mxu0 0.0
    %1988 = vmatpush1.msra.mxu0 0.0
    %1989 = vmatprep.subr.mxu0 0.0
    %1990 = vmatpush1.msra.mxu0 0.0
    %1991 = vmatprep.subr.mxu0 0.0
    %1992 = vmatpush1.msra.mxu0 0.0
    %1993 = vmatprep.subr.mxu0 0.0
    %1994 = vmatpush1.msra.mxu0 0.0
    %1995 = vmatprep.subr.mxu0 0.0
    %1996 = vmatpush1.msra.mxu0 0.0
    %1997 = vmatprep.subr.mxu0 0.0
    %1998 = vmatpush1.msra.mxu0 0.0
    %1999 = vmatprep.subr.mxu0 0.0
    %2000 = vmatpush1.msra.mxu0 0.0
    %2001 = vmatprep.subr.mxu0 0.0
    %2002 = vmatpush1.msra.mxu0 0.0
    %2003 = vmatprep.subr.mxu0 0.0
    %2004 = vmatpush1.msra.mxu0 0.0
    %2005 = vmatprep.subr.mxu0 0.0
    %2006 = vmatpush1.msra.mxu0 0.0
    %2007 = vmatprep.subr.mxu0 0.0
    %2008 = vmatpush1.msra.mxu0 0.0
    %2009 = vmatprep.subr.mxu0 0.0
    %2010 = vmatpush1.msra.mxu0 0.0
    %2011 = vmatprep.subr.mxu0 0.0
    %2012 = vmatpush1.msra.mxu0 0.0
    %2013 = vmatprep.mubr.f32.mxu0 0.0
    %v2014 = vand.u32 %v1574, 4294901760
    %2015 = vmatmul.mubr.f32.gmra.mrb[0].mxu0 %v2014
    %v2016 = vpop.f32.mrb[0].mxu0
    %v2017 = vadd.f32 %v1926, %v2016
    %v2018 = vpop.f32.mrb[0].mxu0
    %2019 = vmatprep.mubr.f32.mxu0 0.0
    %v2020 = vand.u32 %v1577, 4294901760
    %2021 = vmatmul.mubr.f32.gmra.mrb[0].mxu0 %v2020
    %v2022 = vpop.f32.mrb[0].mxu0
    %v2023 = vadd.f32 %v1934, %v2022
    %v2024 = vpop.f32.mrb[0].mxu0
    %2025 = vdwg.mxu0
    %2026 = vmatprep.subr.mxu0 0.0
    %v2027 = vand.u32 %v39, 4294901760
    %2028 = vmatpush1.msra.mxu0 %v2027
    %2029 = vmatprep.subr.mxu0 0.0
    %v2030 = vand.u32 %v40, 4294901760
    %2031 = vmatpush1.msra.mxu0 %v2030
    %2032 = vmatprep.subr.mxu0 0.0
    %v2033 = vand.u32 %v41, 4294901760
    %2034 = vmatpush1.msra.mxu0 %v2033
    %2035 = vmatprep.subr.mxu0 0.0
    %v2036 = vand.u32 %v42, 4294901760
    %2037 = vmatpush1.msra.mxu0 %v2036
    %2038 = vmatprep.subr.mxu0 0.0
    %2039 = vmatpush1.msra.mxu0 0.0
    %2040 = vmatprep.subr.mxu0 0.0
    %2041 = vmatpush1.msra.mxu0 0.0
    %2042 = vmatprep.subr.mxu0 0.0
    %2043 = vmatpush1.msra.mxu0 0.0
    %2044 = vmatprep.subr.mxu0 0.0
    %2045 = vmatpush1.msra.mxu0 0.0
    %2046 = vmatprep.subr.mxu0 0.0
    %2047 = vmatpush1.msra.mxu0 0.0
    %2048 = vmatprep.subr.mxu0 0.0
    %2049 = vmatpush1.msra.mxu0 0.0
    %2050 = vmatprep.subr.mxu0 0.0
    %2051 = vmatpush1.msra.mxu0 0.0
    %2052 = vmatprep.subr.mxu0 0.0
    %2053 = vmatpush1.msra.mxu0 0.0
    %2054 = vmatprep.subr.mxu0 0.0
    %2055 = vmatpush1.msra.mxu0 0.0
    %2056 = vmatprep.subr.mxu0 0.0
    %2057 = vmatpush1.msra.mxu0 0.0
    %2058 = vmatprep.subr.mxu0 0.0
    %2059 = vmatpush1.msra.mxu0 0.0
    %2060 = vmatprep.subr.mxu0 0.0
    %2061 = vmatpush1.msra.mxu0 0.0
    %2062 = vmatprep.subr.mxu0 0.0
    %2063 = vmatpush1.msra.mxu0 0.0
    %2064 = vmatprep.subr.mxu0 0.0
    %2065 = vmatpush1.msra.mxu0 0.0
    %2066 = vmatprep.subr.mxu0 0.0
    %2067 = vmatpush1.msra.mxu0 0.0
    %2068 = vmatprep.subr.mxu0 0.0
    %2069 = vmatpush1.msra.mxu0 0.0
    %2070 = vmatprep.subr.mxu0 0.0
    %2071 = vmatpush1.msra.mxu0 0.0
    %2072 = vmatprep.subr.mxu0 0.0
    %2073 = vmatpush1.msra.mxu0 0.0
    %2074 = vmatprep.subr.mxu0 0.0
    %2075 = vmatpush1.msra.mxu0 0.0
    %2076 = vmatprep.subr.mxu0 0.0
    %2077 = vmatpush1.msra.mxu0 0.0
    %2078 = vmatprep.subr.mxu0 0.0
    %2079 = vmatpush1.msra.mxu0 0.0
    %2080 = vmatprep.subr.mxu0 0.0
    %2081 = vmatpush1.msra.mxu0 0.0
    %2082 = vmatprep.subr.mxu0 0.0
    %2083 = vmatpush1.msra.mxu0 0.0
    %2084 = vmatprep.subr.mxu0 0.0
    %2085 = vmatpush1.msra.mxu0 0.0
    %2086 = vmatprep.subr.mxu0 0.0
    %2087 = vmatpush1.msra.mxu0 0.0
    %2088 = vmatprep.subr.mxu0 0.0
    %2089 = vmatpush1.msra.mxu0 0.0
    %2090 = vmatprep.subr.mxu0 0.0
    %2091 = vmatpush1.msra.mxu0 0.0
    %2092 = vmatprep.subr.mxu0 0.0
    %2093 = vmatpush1.msra.mxu0 0.0
    %2094 = vmatprep.mubr.f32.mxu0 0.0
    %v2095 = vand.u32 %v1574, 4294901760
    %2096 = vmatmul.mubr.f32.gmra.mrb[0].mxu0 %v2095
    %v2097 = vpop.f32.mrb[0].mxu0
    %v2098 = vadd.f32 %v2017, %v2097
    %v2099 = vpop.f32.mrb[0].mxu0
    %2100 = vmatprep.mubr.f32.mxu0 0.0
    %v2101 = vand.u32 %v1577, 4294901760
    %2102 = vmatmul.mubr.f32.gmra.mrb[0].mxu0 %v2101
    %v2103 = vpop.f32.mrb[0].mxu0
    %v2104 = vadd.f32 %v2023, %v2103
    %v2105 = vpop.f32.mrb[0].mxu0
    %2106 = vdwg.mxu0
    %v2110 = vunpack.c.l.s4 1966171168
    %v2111 = vunpack.c.0.s8 %v2110
    %v2112 = vlaneseq
    %v2113 = vshrl.u32 %v2112, 7
    %v2114 = vsub.s32 %v2111, %v2113
    %v2115 = vrot.slane %v548, %v2114
    %v2116 = vcombine.high %v2115, %v2115
    %v2118 = vunpack.c.l.s4 1966171168
    %v2119 = vunpack.c.0.s8 %v2118
    %v2120 = vlaneseq
    %v2121 = vshrl.u32 %v2120, 7
    %v2122 = vsub.s32 %v2119, %v2121
    %v2123 = vrot.slane %v2115, %v2122
    %v2125 = vunpack.c.l.s4 1966171168
    %v2126 = vunpack.c.0.s8 %v2125
    %v2127 = vlaneseq
    %v2128 = vshrl.u32 %v2127, 7
    %v2129 = vsub.s32 %v2126, %v2128
    %v2130 = vrot.slane %v2116, %v2129
    %v2131 = vcombine.high %v2123, %v2123
    %v2132 = vcombine.high %v2130, %v2130
    %v2134 = vunpack.c.l.s4 1966171168
    %v2135 = vunpack.c.0.s8 %v2134
    %v2136 = vlaneseq
    %v2137 = vshrl.u32 %v2136, 7
    %v2138 = vsub.s32 %v2135, %v2137
    %v2139 = vrot.slane %v1036, %v2138
    %v2140 = vcombine.high %v2139, %v2139
    %v2142 = vunpack.c.l.s4 1966171168
    %v2143 = vunpack.c.0.s8 %v2142
    %v2144 = vlaneseq
    %v2145 = vshrl.u32 %v2144, 7
    %v2146 = vsub.s32 %v2143, %v2145
    %v2147 = vrot.slane %v2139, %v2146
    %v2149 = vunpack.c.l.s4 1966171168
    %v2150 = vunpack.c.0.s8 %v2149
    %v2151 = vlaneseq
    %v2152 = vshrl.u32 %v2151, 7
    %v2153 = vsub.s32 %v2150, %v2152
    %v2154 = vrot.slane %v2140, %v2153
    %v2155 = vcombine.high %v2147, %v2147
    %v2156 = vcombine.high %v2154, %v2154
    %v2157 = vlaneseq
    %v2158 = vshrl.u32 %v2157, 7
    %v2159 = vsub.s32 0, %v2158
    %v2160 = vrot.slane %v2123, %v2159
    %v2161 = vlaneseq
    %v2162 = vshrl.u32 %v2161, 7
    %v2163 = vsub.s32 0, %v2162
    %v2164 = vrot.slane %v2130, %v2163
    %v2165 = vlaneseq
    %v2166 = vshrl.u32 %v2165, 7
    %v2167 = vsub.s32 0, %v2166
    %v2168 = vrot.slane %v2131, %v2167
    %v2169 = vlaneseq
    %v2170 = vshrl.u32 %v2169, 7
    %v2171 = vsub.s32 0, %v2170
    %v2172 = vrot.slane %v2132, %v2171
    %v2173 = vlaneseq
    %v2174 = vshrl.u32 %v2173, 7
    %v2175 = vsub.s32 0, %v2174
    %v2176 = vrot.slane %v2147, %v2175
    %v2177 = vlaneseq
    %v2178 = vshrl.u32 %v2177, 7
    %v2179 = vsub.s32 0, %v2178
    %v2180 = vrot.slane %v2154, %v2179
    %v2181 = vlaneseq
    %v2182 = vshrl.u32 %v2181, 7
    %v2183 = vsub.s32 0, %v2182
    %v2184 = vrot.slane %v2155, %v2183
    %v2185 = vlaneseq
    %v2186 = vshrl.u32 %v2185, 7
    %v2187 = vsub.s32 0, %v2186
    %v2188 = vrot.slane %v2156, %v2187
    %v2197 = vadd.f32 %v2160, %v1564
    %v2198 = vadd.f32 %v2160, %v1570
    %v2199 = vadd.f32 %v2164, %v1564
    %v2200 = vadd.f32 %v2164, %v1570
    %v2201 = vadd.f32 %v2168, %v1564
    %v2202 = vadd.f32 %v2168, %v1570
    %v2203 = vadd.f32 %v2172, %v1564
    %v2204 = vadd.f32 %v2172, %v1570
    %v2205 = vadd.f32 %v2176, %v2098
    %v2206 = vadd.f32 %v2176, %v2104
    %v2207 = vadd.f32 %v2180, %v2098
    %v2208 = vadd.f32 %v2180, %v2104
    %v2209 = vadd.f32 %v2184, %v2098
    %v2210 = vadd.f32 %v2184, %v2104
    %v2211 = vadd.f32 %v2188, %v2098
    %v2212 = vadd.f32 %v2188, %v2104
    %v2213 = vtanh.pop %v2197
    %v2214 = vtanh.pop %v2198
    %v2215 = vtanh.pop %v2199
    %v2216 = vtanh.pop %v2200
    %v2217 = vtanh.pop %v2201
    %v2218 = vtanh.pop %v2202
    %v2219 = vtanh.pop %v2203
    %v2220 = vtanh.pop %v2204
    %v2221 = vtanh.pop %v2205
    %v2222 = vtanh.pop %v2206
    %v2223 = vtanh.pop %v2207
    %v2224 = vtanh.pop %v2208
    %v2225 = vtanh.pop %v2209
    %v2226 = vtanh.pop %v2210
    %v2227 = vtanh.pop %v2211
    %v2228 = vtanh.pop %v2212
    %v2229 = vlaneseq
    %v2230 = vshrl.u32 %v2229, 7
    %v2231 = vsub.s32 0, %v2230
    %v2232 = vrot.slane %v56, %v2231
    %v2233 = vmul.f32 %v2213, %v2232
    %v2234 = vmul.f32 %v2214, %v2232
    %v2235 = vmul.f32 %v2215, %v2232
    %v2236 = vmul.f32 %v2216, %v2232
    %v2237 = vmul.f32 %v2217, %v2232
    %v2238 = vmul.f32 %v2218, %v2232
    %v2239 = vmul.f32 %v2219, %v2232
    %v2240 = vmul.f32 %v2220, %v2232
    %v2241 = vmul.f32 %v2221, %v2232
    %v2242 = vmul.f32 %v2222, %v2232
    %v2243 = vmul.f32 %v2223, %v2232
    %v2244 = vmul.f32 %v2224, %v2232
    %v2245 = vmul.f32 %v2225, %v2232
    %v2246 = vmul.f32 %v2226, %v2232
    %v2247 = vmul.f32 %v2227, %v2232
    %v2248 = vmul.f32 %v2228, %v2232
    %v2249 = vsel %vm62, %v2233, 0.0
    %2250 = vadd.xlane.f32.xlu0 %v2249
    %v2251 = vpop.xlane.xlu0 %2250
    %vm2252 = vcmask 258048
    %v2253 = vsel %vm2252, %v2234, 0.0
    %2254 = vadd.xlane.f32.xlu0 %v2253
    %v2255 = vpop.xlane.xlu0 %2254
    %v2256 = vsel %vm62, %v2235, 0.0
    %2257 = vadd.xlane.f32.xlu0 %v2256
    %v2258 = vpop.xlane.xlu0 %2257
    %v2259 = vsel %vm2252, %v2236, 0.0
    %2260 = vadd.xlane.f32.xlu0 %v2259
    %v2261 = vpop.xlane.xlu0 %2260
    %v2262 = vsel %vm62, %v2237, 0.0
    %2263 = vadd.xlane.f32.xlu0 %v2262
    %v2264 = vpop.xlane.xlu0 %2263
    %v2265 = vsel %vm2252, %v2238, 0.0
    %2266 = vadd.xlane.f32.xlu0 %v2265
    %v2267 = vpop.xlane.xlu0 %2266
    %v2268 = vsel %vm62, %v2239, 0.0
    %2269 = vadd.xlane.f32.xlu0 %v2268
    %v2270 = vpop.xlane.xlu0 %2269
    %v2271 = vsel %vm2252, %v2240, 0.0
    %2272 = vadd.xlane.f32.xlu0 %v2271
    %v2273 = vpop.xlane.xlu0 %2272
    %v2274 = vsel %vm62, %v2241, 0.0
    %2275 = vadd.xlane.f32.xlu0 %v2274
    %v2276 = vpop.xlane.xlu0 %2275
    %v2277 = vsel %vm2252, %v2242, 0.0
    %2278 = vadd.xlane.f32.xlu0 %v2277
    %v2279 = vpop.xlane.xlu0 %2278
    %v2280 = vsel %vm62, %v2243, 0.0
    %2281 = vadd.xlane.f32.xlu0 %v2280
    %v2282 = vpop.xlane.xlu0 %2281
    %v2283 = vsel %vm2252, %v2244, 0.0
    %2284 = vadd.xlane.f32.xlu0 %v2283
    %v2285 = vpop.xlane.xlu0 %2284
    %v2286 = vsel %vm62, %v2245, 0.0
    %2287 = vadd.xlane.f32.xlu0 %v2286
    %v2288 = vpop.xlane.xlu0 %2287
    %v2289 = vsel %vm2252, %v2246, 0.0
    %2290 = vadd.xlane.f32.xlu0 %v2289
    %v2291 = vpop.xlane.xlu0 %2290
    %v2292 = vsel %vm62, %v2247, 0.0
    %2293 = vadd.xlane.f32.xlu0 %v2292
    %v2294 = vpop.xlane.xlu0 %2293
    %v2295 = vsel %vm2252, %v2248, 0.0
    %2296 = vadd.xlane.f32.xlu0 %v2295
    %v2297 = vpop.xlane.xlu0 %2296
    %v2314 = vlaneseq
    %v2315 = vand.u32 %v2314, 127
    %v2316 = vlaneseq
    %v2317 = vshrl.u32 %v2316, 7
    %v2318 = vsub.s32 %v2315, %v2317
    %v2319 = vrot.slane %v2251, %v2318
    %v2320 = vadd.s32 %v2315, 4294967288
    %v2321 = vlaneseq
    %v2322 = vshrl.u32 %v2321, 7
    %v2323 = vsub.s32 %v2320, %v2322
    %v2324 = vrot.slane %v2255, %v2323
    %vm2325 = vcmask 130112
    %v2326 = vsel %vm2325, %v2324, %v2319
    %v2327 = vlaneseq
    %v2328 = vshrl.u32 %v2327, 7
    %v2329 = vsub.s32 %v2315, %v2328
    %v2330 = vrot.slane %v2258, %v2329
    %v2331 = vlaneseq
    %v2332 = vshrl.u32 %v2331, 7
    %v2333 = vsub.s32 %v2320, %v2332
    %v2334 = vrot.slane %v2261, %v2333
    %v2335 = vsel %vm2325, %v2334, %v2330
    %v2336 = vlaneseq
    %v2337 = vshrl.u32 %v2336, 7
    %v2338 = vsub.s32 %v2315, %v2337
    %v2339 = vrot.slane %v2264, %v2338
    %v2340 = vlaneseq
    %v2341 = vshrl.u32 %v2340, 7
    %v2342 = vsub.s32 %v2320, %v2341
    %v2343 = vrot.slane %v2267, %v2342
    %v2344 = vsel %vm2325, %v2343, %v2339
    %v2345 = vlaneseq
    %v2346 = vshrl.u32 %v2345, 7
    %v2347 = vsub.s32 %v2315, %v2346
    %v2348 = vrot.slane %v2270, %v2347
    %v2349 = vlaneseq
    %v2350 = vshrl.u32 %v2349, 7
    %v2351 = vsub.s32 %v2320, %v2350
    %v2352 = vrot.slane %v2273, %v2351
    %v2353 = vsel %vm2325, %v2352, %v2348
    %v2354 = vlaneseq
    %v2355 = vshrl.u32 %v2354, 7
    %v2356 = vsub.s32 %v2315, %v2355
    %v2357 = vrot.slane %v2276, %v2356
    %v2358 = vlaneseq
    %v2359 = vshrl.u32 %v2358, 7
    %v2360 = vsub.s32 %v2320, %v2359
    %v2361 = vrot.slane %v2279, %v2360
    %v2362 = vsel %vm2325, %v2361, %v2357
    %v2363 = vlaneseq
    %v2364 = vshrl.u32 %v2363, 7
    %v2365 = vsub.s32 %v2315, %v2364
    %v2366 = vrot.slane %v2282, %v2365
    %v2367 = vlaneseq
    %v2368 = vshrl.u32 %v2367, 7
    %v2369 = vsub.s32 %v2320, %v2368
    %v2370 = vrot.slane %v2285, %v2369
    %v2371 = vsel %vm2325, %v2370, %v2366
    %v2372 = vlaneseq
    %v2373 = vshrl.u32 %v2372, 7
    %v2374 = vsub.s32 %v2315, %v2373
    %v2375 = vrot.slane %v2288, %v2374
    %v2376 = vlaneseq
    %v2377 = vshrl.u32 %v2376, 7
    %v2378 = vsub.s32 %v2320, %v2377
    %v2379 = vrot.slane %v2291, %v2378
    %v2380 = vsel %vm2325, %v2379, %v2375
    %v2381 = vlaneseq
    %v2382 = vshrl.u32 %v2381, 7
    %v2383 = vsub.s32 %v2315, %v2382
    %v2384 = vrot.slane %v2294, %v2383
    %v2385 = vlaneseq
    %v2386 = vshrl.u32 %v2385, 7
    %v2387 = vsub.s32 %v2320, %v2386
    %v2388 = vrot.slane %v2297, %v2387
    %v2389 = vsel %vm2325, %v2388, %v2384
    %vm2390 = vcmask 1041409
    %v2391 = vsel %vm2390, %v2335, %v2326
    %vm2392 = vcmask 1042434
    %v2393 = vsel %vm2392, %v2344, %v2391
    %vm2394 = vcmask 1043459
    %v2395 = vsel %vm2394, %v2353, %v2393
    %v2396 = vsel %vm2390, %v2371, %v2362
    %v2397 = vsel %vm2392, %v2380, %v2396
    %v2398 = vsel %vm2394, %v2389, %v2397
    %vm2401 = vcmask 101376
    %v2402 = vsel %vm2401, %v2395, -inf
    %2403 = vmax.xlane.f32.xlu0 %v2402
    %v2404 = vpop.xlane.xlu0 %2403
    %v2405 = vsel %vm2401, %v2398, -inf
    %2406 = vmax.xlane.f32.xlu0 %v2405
    %v2407 = vpop.xlane.xlu0 %2406
    %v2410 = vlaneseq
    %v2411 = vshrl.u32 %v2410, 7
    %v2412 = vsub.s32 0, %v2411
    %v2413 = vrot.slane %v2404, %v2412
    %v2414 = vlaneseq
    %v2415 = vshrl.u32 %v2414, 7
    %v2416 = vsub.s32 1, %v2415
    %v2417 = vrot.slane %v2404, %v2416
    %v2418 = vlaneseq
    %v2419 = vshrl.u32 %v2418, 7
    %v2420 = vsub.s32 2, %v2419
    %v2421 = vrot.slane %v2404, %v2420
    %v2422 = vlaneseq
    %v2423 = vshrl.u32 %v2422, 7
    %v2424 = vsub.s32 3, %v2423
    %v2425 = vrot.slane %v2404, %v2424
    %v2426 = vlaneseq
    %v2427 = vshrl.u32 %v2426, 7
    %v2428 = vsub.s32 0, %v2427
    %v2429 = vrot.slane %v2407, %v2428
    %v2430 = vlaneseq
    %v2431 = vshrl.u32 %v2430, 7
    %v2432 = vsub.s32 1, %v2431
    %v2433 = vrot.slane %v2407, %v2432
    %v2434 = vlaneseq
    %v2435 = vshrl.u32 %v2434, 7
    %v2436 = vsub.s32 2, %v2435
    %v2437 = vrot.slane %v2407, %v2436
    %v2438 = vlaneseq
    %v2439 = vshrl.u32 %v2438, 7
    %v2440 = vsub.s32 3, %v2439
    %v2441 = vrot.slane %v2407, %v2440
    %v2450 = vsub.f32 %v2251, %v2413
    %v2451 = vsub.f32 %v2255, %v2413
    %v2452 = vsub.f32 %v2258, %v2417
    %v2453 = vsub.f32 %v2261, %v2417
    %v2454 = vsub.f32 %v2264, %v2421
    %v2455 = vsub.f32 %v2267, %v2421
    %v2456 = vsub.f32 %v2270, %v2425
    %v2457 = vsub.f32 %v2273, %v2425
    %v2458 = vsub.f32 %v2276, %v2429
    %v2459 = vsub.f32 %v2279, %v2429
    %v2460 = vsub.f32 %v2282, %v2433
    %v2461 = vsub.f32 %v2285, %v2433
    %v2462 = vsub.f32 %v2288, %v2437
    %v2463 = vsub.f32 %v2291, %v2437
    %v2464 = vsub.f32 %v2294, %v2441
    %v2465 = vsub.f32 %v2297, %v2441
    %v2466 = vmul.f32 %v2450, 1.442695
    %v2467 = vpow.pop %v2466
    %v2468 = vmul.f32 %v2451, 1.442695
    %v2469 = vpow.pop %v2468
    %v2470 = vmul.f32 %v2452, 1.442695
    %v2471 = vpow.pop %v2470
    %v2472 = vmul.f32 %v2453, 1.442695
    %v2473 = vpow.pop %v2472
    %v2474 = vmul.f32 %v2454, 1.442695
    %v2475 = vpow.pop %v2474
    %v2476 = vmul.f32 %v2455, 1.442695
    %v2477 = vpow.pop %v2476
    %v2478 = vmul.f32 %v2456, 1.442695
    %v2479 = vpow.pop %v2478
    %v2480 = vmul.f32 %v2457, 1.442695
    %v2481 = vpow.pop %v2480
    %v2482 = vmul.f32 %v2458, 1.442695
    %v2483 = vpow.pop %v2482
    %v2484 = vmul.f32 %v2459, 1.442695
    %v2485 = vpow.pop %v2484
    %v2486 = vmul.f32 %v2460, 1.442695
    %v2487 = vpow.pop %v2486
    %v2488 = vmul.f32 %v2461, 1.442695
    %v2489 = vpow.pop %v2488
    %v2490 = vmul.f32 %v2462, 1.442695
    %v2491 = vpow.pop %v2490
    %v2492 = vmul.f32 %v2463, 1.442695
    %v2493 = vpow.pop %v2492
    %v2494 = vmul.f32 %v2464, 1.442695
    %v2495 = vpow.pop %v2494
    %v2496 = vmul.f32 %v2465, 1.442695
    %v2497 = vpow.pop %v2496
    %2514 = vset.pattern.permute.xlu0 0
    %2515 = vperm.xlu0 %2514, %v2467
    %v2516 = vpop.permute.xlu0 %2515
    %2517 = vset.pattern.permute.xlu0 0
    %2518 = vperm.xlu0 %2517, %v2469
    %v2519 = vpop.permute.xlu0 %2518
    %2520 = vset.pattern.permute.xlu0 0
    %2521 = vperm.xlu0 %2520, %v2471
    %v2522 = vpop.permute.xlu0 %2521
    %2523 = vset.pattern.permute.xlu0 0
    %2524 = vperm.xlu0 %2523, %v2473
    %v2525 = vpop.permute.xlu0 %2524
    %2526 = vset.pattern.permute.xlu0 0
    %2527 = vperm.xlu0 %2526, %v2475
    %v2528 = vpop.permute.xlu0 %2527
    %2529 = vset.pattern.permute.xlu0 0
    %2530 = vperm.xlu0 %2529, %v2477
    %v2531 = vpop.permute.xlu0 %2530
    %2532 = vset.pattern.permute.xlu0 0
    %2533 = vperm.xlu0 %2532, %v2479
    %v2534 = vpop.permute.xlu0 %2533
    %2535 = vset.pattern.permute.xlu0 0
    %2536 = vperm.xlu0 %2535, %v2481
    %v2537 = vpop.permute.xlu0 %2536
    %2538 = vset.pattern.permute.xlu0 0
    %2539 = vperm.xlu0 %2538, %v2483
    %v2540 = vpop.permute.xlu0 %2539
    %2541 = vset.pattern.permute.xlu0 0
    %2542 = vperm.xlu0 %2541, %v2485
    %v2543 = vpop.permute.xlu0 %2542
    %2544 = vset.pattern.permute.xlu0 0
    %2545 = vperm.xlu0 %2544, %v2487
    %v2546 = vpop.permute.xlu0 %2545
    %2547 = vset.pattern.permute.xlu0 0
    %2548 = vperm.xlu0 %2547, %v2489
    %v2549 = vpop.permute.xlu0 %2548
    %2550 = vset.pattern.permute.xlu0 0
    %2551 = vperm.xlu0 %2550, %v2491
    %v2552 = vpop.permute.xlu0 %2551
    %2553 = vset.pattern.permute.xlu0 0
    %2554 = vperm.xlu0 %2553, %v2493
    %v2555 = vpop.permute.xlu0 %2554
    %2556 = vset.pattern.permute.xlu0 0
    %2557 = vperm.xlu0 %2556, %v2495
    %v2558 = vpop.permute.xlu0 %2557
    %2559 = vset.pattern.permute.xlu0 0
    %2560 = vperm.xlu0 %2559, %v2497
    %v2561 = vpop.permute.xlu0 %2560
    %v2562 = vlaneseq
    %v2563 = vshrl.u32 %v2562, 7
    %v2564 = vsub.s32 %v2315, %v2563
    %v2565 = vrot.slane %v2516, %v2564
    %v2566 = vlaneseq
    %v2567 = vshrl.u32 %v2566, 7
    %v2568 = vsub.s32 %v2320, %v2567
    %v2569 = vrot.slane %v2519, %v2568
    %v2570 = vsel %vm2325, %v2569, %v2565
    %v2571 = vlaneseq
    %v2572 = vshrl.u32 %v2571, 7
    %v2573 = vsub.s32 %v2315, %v2572
    %v2574 = vrot.slane %v2522, %v2573
    %v2575 = vlaneseq
    %v2576 = vshrl.u32 %v2575, 7
    %v2577 = vsub.s32 %v2320, %v2576
    %v2578 = vrot.slane %v2525, %v2577
    %v2579 = vsel %vm2325, %v2578, %v2574
    %v2580 = vlaneseq
    %v2581 = vshrl.u32 %v2580, 7
    %v2582 = vsub.s32 %v2315, %v2581
    %v2583 = vrot.slane %v2528, %v2582
    %v2584 = vlaneseq
    %v2585 = vshrl.u32 %v2584, 7
    %v2586 = vsub.s32 %v2320, %v2585
    %v2587 = vrot.slane %v2531, %v2586
    %v2588 = vsel %vm2325, %v2587, %v2583
    %v2589 = vlaneseq
    %v2590 = vshrl.u32 %v2589, 7
    %v2591 = vsub.s32 %v2315, %v2590
    %v2592 = vrot.slane %v2534, %v2591
    %v2593 = vlaneseq
    %v2594 = vshrl.u32 %v2593, 7
    %v2595 = vsub.s32 %v2320, %v2594
    %v2596 = vrot.slane %v2537, %v2595
    %v2597 = vsel %vm2325, %v2596, %v2592
    %v2598 = vlaneseq
    %v2599 = vshrl.u32 %v2598, 7
    %v2600 = vsub.s32 %v2315, %v2599
    %v2601 = vrot.slane %v2540, %v2600
    %v2602 = vlaneseq
    %v2603 = vshrl.u32 %v2602, 7
    %v2604 = vsub.s32 %v2320, %v2603
    %v2605 = vrot.slane %v2543, %v2604
    %v2606 = vsel %vm2325, %v2605, %v2601
    %v2607 = vlaneseq
    %v2608 = vshrl.u32 %v2607, 7
    %v2609 = vsub.s32 %v2315, %v2608
    %v2610 = vrot.slane %v2546, %v2609
    %v2611 = vlaneseq
    %v2612 = vshrl.u32 %v2611, 7
    %v2613 = vsub.s32 %v2320, %v2612
    %v2614 = vrot.slane %v2549, %v2613
    %v2615 = vsel %vm2325, %v2614, %v2610
    %v2616 = vlaneseq
    %v2617 = vshrl.u32 %v2616, 7
    %v2618 = vsub.s32 %v2315, %v2617
    %v2619 = vrot.slane %v2552, %v2618
    %v2620 = vlaneseq
    %v2621 = vshrl.u32 %v2620, 7
    %v2622 = vsub.s32 %v2320, %v2621
    %v2623 = vrot.slane %v2555, %v2622
    %v2624 = vsel %vm2325, %v2623, %v2619
    %v2625 = vlaneseq
    %v2626 = vshrl.u32 %v2625, 7
    %v2627 = vsub.s32 %v2315, %v2626
    %v2628 = vrot.slane %v2558, %v2627
    %v2629 = vlaneseq
    %v2630 = vshrl.u32 %v2629, 7
    %v2631 = vsub.s32 %v2320, %v2630
    %v2632 = vrot.slane %v2561, %v2631
    %v2633 = vsel %vm2325, %v2632, %v2628
    %v2634 = vsel %vm2390, %v2579, %v2570
    %v2635 = vsel %vm2392, %v2588, %v2634
    %v2636 = vsel %vm2394, %v2597, %v2635
    %v2637 = vsel %vm2390, %v2615, %v2606
    %v2638 = vsel %vm2392, %v2624, %v2637
    %v2639 = vsel %vm2394, %v2633, %v2638
    %v2642 = vsel %vm2401, %v2636, 0.0
    %2643 = vadd.xlane.f32.xlu0 %v2642
    %v2644 = vpop.xlane.xlu0 %2643
    %v2645 = vsel %vm2401, %v2639, 0.0
    %2646 = vadd.xlane.f32.xlu0 %v2645
    %v2647 = vpop.xlane.xlu0 %2646
    %v2650 = vlaneseq
    %v2651 = vshrl.u32 %v2650, 7
    %v2652 = vsub.s32 0, %v2651
    %v2653 = vrot.slane %v2644, %v2652
    %v2654 = vlaneseq
    %v2655 = vshrl.u32 %v2654, 7
    %v2656 = vsub.s32 1, %v2655
    %v2657 = vrot.slane %v2644, %v2656
    %v2658 = vlaneseq
    %v2659 = vshrl.u32 %v2658, 7
    %v2660 = vsub.s32 2, %v2659
    %v2661 = vrot.slane %v2644, %v2660
    %v2662 = vlaneseq
    %v2663 = vshrl.u32 %v2662, 7
    %v2664 = vsub.s32 3, %v2663
    %v2665 = vrot.slane %v2644, %v2664
    %v2666 = vlaneseq
    %v2667 = vshrl.u32 %v2666, 7
    %v2668 = vsub.s32 0, %v2667
    %v2669 = vrot.slane %v2647, %v2668
    %v2670 = vlaneseq
    %v2671 = vshrl.u32 %v2670, 7
    %v2672 = vsub.s32 1, %v2671
    %v2673 = vrot.slane %v2647, %v2672
    %v2674 = vlaneseq
    %v2675 = vshrl.u32 %v2674, 7
    %v2676 = vsub.s32 2, %v2675
    %v2677 = vrot.slane %v2647, %v2676
    %v2678 = vlaneseq
    %v2679 = vshrl.u32 %v2678, 7
    %v2680 = vsub.s32 3, %v2679
    %v2681 = vrot.slane %v2647, %v2680
    %v2690 = vrcp.pop %v2653
    %v2691 = vmul.f32 %v2467, %v2690
    %v2692 = vmul.f32 %v2469, %v2690
    %v2693 = vrcp.pop %v2657
    %v2694 = vmul.f32 %v2471, %v2693
    %v2695 = vmul.f32 %v2473, %v2693
    %v2696 = vrcp.pop %v2661
    %v2697 = vmul.f32 %v2475, %v2696
    %v2698 = vmul.f32 %v2477, %v2696
    %v2699 = vrcp.pop %v2665
    %v2700 = vmul.f32 %v2479, %v2699
    %v2701 = vmul.f32 %v2481, %v2699
    %v2702 = vrcp.pop %v2669
    %v2703 = vmul.f32 %v2483, %v2702
    %v2704 = vmul.f32 %v2485, %v2702
    %v2705 = vrcp.pop %v2673
    %v2706 = vmul.f32 %v2487, %v2705
    %v2707 = vmul.f32 %v2489, %v2705
    %v2708 = vrcp.pop %v2677
    %v2709 = vmul.f32 %v2491, %v2708
    %v2710 = vmul.f32 %v2493, %v2708
    %v2711 = vrcp.pop %v2681
    %v2712 = vmul.f32 %v2495, %v2711
    %v2713 = vmul.f32 %v2497, %v2711
    %2722 = vset.pattern.permute.xlu0 0
    %2723 = vperm.xlu0 %2722, %v2691
    %v2724 = vpop.permute.xlu0 %2723
    %2725 = vset.pattern.permute.xlu0 0
    %2726 = vperm.xlu0 %2725, %v2692
    %v2727 = vpop.permute.xlu0 %2726
    %2728 = vset.pattern.permute.xlu0 0
    %2729 = vperm.xlu0 %2728, %v2694
    %v2730 = vpop.permute.xlu0 %2729
    %2731 = vset.pattern.permute.xlu0 0
    %2732 = vperm.xlu0 %2731, %v2695
    %v2733 = vpop.permute.xlu0 %2732
    %2734 = vset.pattern.permute.xlu0 0
    %2735 = vperm.xlu0 %2734, %v2697
    %v2736 = vpop.permute.xlu0 %2735
    %2737 = vset.pattern.permute.xlu0 0
    %2738 = vperm.xlu0 %2737, %v2698
    %v2739 = vpop.permute.xlu0 %2738
    %2740 = vset.pattern.permute.xlu0 0
    %2741 = vperm.xlu0 %2740, %v2700
    %v2742 = vpop.permute.xlu0 %2741
    %2743 = vset.pattern.permute.xlu0 0
    %2744 = vperm.xlu0 %2743, %v2701
    %v2745 = vpop.permute.xlu0 %2744
    %v2746 = vlaneseq
    %v2747 = vshrl.u32 %v2746, 7
    %v2748 = vsub.s32 %v2315, %v2747
    %v2749 = vrot.slane %v2724, %v2748
    %v2750 = vlaneseq
    %v2751 = vshrl.u32 %v2750, 7
    %v2752 = vsub.s32 %v2320, %v2751
    %v2753 = vrot.slane %v2727, %v2752
    %v2754 = vsel %vm2325, %v2753, %v2749
    %v2755 = vlaneseq
    %v2756 = vshrl.u32 %v2755, 7
    %v2757 = vsub.s32 %v2315, %v2756
    %v2758 = vrot.slane %v2730, %v2757
    %v2759 = vlaneseq
    %v2760 = vshrl.u32 %v2759, 7
    %v2761 = vsub.s32 %v2320, %v2760
    %v2762 = vrot.slane %v2733, %v2761
    %v2763 = vsel %vm2325, %v2762, %v2758
    %v2764 = vlaneseq
    %v2765 = vshrl.u32 %v2764, 7
    %v2766 = vsub.s32 %v2315, %v2765
    %v2767 = vrot.slane %v2736, %v2766
    %v2768 = vlaneseq
    %v2769 = vshrl.u32 %v2768, 7
    %v2770 = vsub.s32 %v2320, %v2769
    %v2771 = vrot.slane %v2739, %v2770
    %v2772 = vsel %vm2325, %v2771, %v2767
    %v2773 = vlaneseq
    %v2774 = vshrl.u32 %v2773, 7
    %v2775 = vsub.s32 %v2315, %v2774
    %v2776 = vrot.slane %v2742, %v2775
    %v2777 = vlaneseq
    %v2778 = vshrl.u32 %v2777, 7
    %v2779 = vsub.s32 %v2320, %v2778
    %v2780 = vrot.slane %v2745, %v2779
    %v2781 = vsel %vm2325, %v2780, %v2776
    %v2782 = vsel %vm2390, %v2763, %v2754
    %v2783 = vsel %vm2392, %v2772, %v2782
    %v2784 = vsel %vm2394, %v2781, %v2783
    %vm2785 = vcmask 105472
    %v2786 = vsel %vm2785, %v2784, 0
    %vm2788 = vcmask 1044480
    %v2789 = vsel %vm2788, %v32, 0
    %2791 = vmatprep.subr.mxu0 0.0
    %v2792 = vand.u32 %v31, 4294901760
    %2793 = vmatpush1.msra.mxu0 %v2792
    %2794 = vmatprep.subr.mxu0 0.0
    %v2795 = vand.u32 %v2789, 4294901760
    %2796 = vmatpush1.msra.mxu0 %v2795
    %2797 = vmatprep.subr.mxu0 0.0
    %2798 = vmatpush1.msra.mxu0 0.0
    %2799 = vmatprep.subr.mxu0 0.0
    %2800 = vmatpush1.msra.mxu0 0.0
    %2801 = vmatprep.subr.mxu0 0.0
    %2802 = vmatpush1.msra.mxu0 0.0
    %2803 = vmatprep.subr.mxu0 0.0
    %2804 = vmatpush1.msra.mxu0 0.0
    %2805 = vmatprep.subr.mxu0 0.0
    %2806 = vmatpush1.msra.mxu0 0.0
    %2807 = vmatprep.subr.mxu0 0.0
    %2808 = vmatpush1.msra.mxu0 0.0
    %2809 = vmatprep.subr.mxu0 0.0
    %2810 = vmatpush1.msra.mxu0 0.0
    %2811 = vmatprep.subr.mxu0 0.0
    %2812 = vmatpush1.msra.mxu0 0.0
    %2813 = vmatprep.subr.mxu0 0.0
    %2814 = vmatpush1.msra.mxu0 0.0
    %2815 = vmatprep.subr.mxu0 0.0
    %2816 = vmatpush1.msra.mxu0 0.0
    %2817 = vmatprep.subr.mxu0 0.0
    %2818 = vmatpush1.msra.mxu0 0.0
    %2819 = vmatprep.subr.mxu0 0.0
    %2820 = vmatpush1.msra.mxu0 0.0
    %2821 = vmatprep.subr.mxu0 0.0
    %2822 = vmatpush1.msra.mxu0 0.0
    %2823 = vmatprep.subr.mxu0 0.0
    %2824 = vmatpush1.msra.mxu0 0.0
    %2825 = vmatprep.subr.mxu0 0.0
    %2826 = vmatpush1.msra.mxu0 0.0
    %2827 = vmatprep.subr.mxu0 0.0
    %2828 = vmatpush1.msra.mxu0 0.0
    %2829 = vmatprep.subr.mxu0 0.0
    %2830 = vmatpush1.msra.mxu0 0.0
    %2831 = vmatprep.subr.mxu0 0.0
    %2832 = vmatpush1.msra.mxu0 0.0
    %2833 = vmatprep.subr.mxu0 0.0
    %2834 = vmatpush1.msra.mxu0 0.0
    %2835 = vmatprep.subr.mxu0 0.0
    %2836 = vmatpush1.msra.mxu0 0.0
    %2837 = vmatprep.subr.mxu0 0.0
    %2838 = vmatpush1.msra.mxu0 0.0
    %2839 = vmatprep.subr.mxu0 0.0
    %2840 = vmatpush1.msra.mxu0 0.0
    %2841 = vmatprep.subr.mxu0 0.0
    %2842 = vmatpush1.msra.mxu0 0.0
    %2843 = vmatprep.subr.mxu0 0.0
    %2844 = vmatpush1.msra.mxu0 0.0
    %2845 = vmatprep.subr.mxu0 0.0
    %2846 = vmatpush1.msra.mxu0 0.0
    %2847 = vmatprep.subr.mxu0 0.0
    %2848 = vmatpush1.msra.mxu0 0.0
    %2849 = vmatprep.subr.mxu0 0.0
    %2850 = vmatpush1.msra.mxu0 0.0
    %2851 = vmatprep.subr.mxu0 0.0
    %2852 = vmatpush1.msra.mxu0 0.0
    %2853 = vmatprep.subr.mxu0 0.0
    %2854 = vmatpush1.msra.mxu0 0.0
    %2855 = vmatprep.subr.mxu0 0.0
    %2856 = vmatpush1.msra.mxu0 0.0
    %2857 = vmatprep.mubr.f32.mxu0 0.0
    %v2858 = vand.u32 %v2786, 4294901760
    %v2859 = vsub.f32 %v2786, %v2858
    %v2860 = vand.u32 %v2859, 4294901760
    %v2861 = vsub.f32 %v2859, %v2860
    %v2862 = vand.u32 %v2861, 4294901760
    %2863 = vmatmul.mubr.f32.gmra.mrb[0].mxu0 %v2862
    %v2864 = vpop.f32.mrb[0].mxu0
    %v2865 = vadd.f32 0.0, %v2864
    %v2866 = vpop.f32.mrb[0].mxu0
    %2867 = vdwg.mxu0
    %2868 = vmatprep.subr.mxu0 0.0
    %v2869 = vand.u32 %v31, 4294901760
    %v2870 = vsub.f32 %v31, %v2869
    %v2871 = vand.u32 %v2870, 4294901760
    %v2872 = vsub.f32 %v2870, %v2871
    %v2873 = vand.u32 %v2872, 4294901760
    %2874 = vmatpush1.msra.mxu0 %v2873
    %2875 = vmatprep.subr.mxu0 0.0
    %v2876 = vand.u32 %v2789, 4294901760
    %v2877 = vsub.f32 %v2789, %v2876
    %v2878 = vand.u32 %v2877, 4294901760
    %v2879 = vsub.f32 %v2877, %v2878
    %v2880 = vand.u32 %v2879, 4294901760
    %2881 = vmatpush1.msra.mxu0 %v2880
    %2882 = vmatprep.subr.mxu0 0.0
    %2883 = vmatpush1.msra.mxu0 0.0
    %2884 = vmatprep.subr.mxu0 0.0
    %2885 = vmatpush1.msra.mxu0 0.0
    %2886 = vmatprep.subr.mxu0 0.0
    %2887 = vmatpush1.msra.mxu0 0.0
    %2888 = vmatprep.subr.mxu0 0.0
    %2889 = vmatpush1.msra.mxu0 0.0
    %2890 = vmatprep.subr.mxu0 0.0
    %2891 = vmatpush1.msra.mxu0 0.0
    %2892 = vmatprep.subr.mxu0 0.0
    %2893 = vmatpush1.msra.mxu0 0.0
    %2894 = vmatprep.subr.mxu0 0.0
    %2895 = vmatpush1.msra.mxu0 0.0
    %2896 = vmatprep.subr.mxu0 0.0
    %2897 = vmatpush1.msra.mxu0 0.0
    %2898 = vmatprep.subr.mxu0 0.0
    %2899 = vmatpush1.msra.mxu0 0.0
    %2900 = vmatprep.subr.mxu0 0.0
    %2901 = vmatpush1.msra.mxu0 0.0
    %2902 = vmatprep.subr.mxu0 0.0
    %2903 = vmatpush1.msra.mxu0 0.0
    %2904 = vmatprep.subr.mxu0 0.0
    %2905 = vmatpush1.msra.mxu0 0.0
    %2906 = vmatprep.subr.mxu0 0.0
    %2907 = vmatpush1.msra.mxu0 0.0
    %2908 = vmatprep.subr.mxu0 0.0
    %2909 = vmatpush1.msra.mxu0 0.0
    %2910 = vmatprep.subr.mxu0 0.0
    %2911 = vmatpush1.msra.mxu0 0.0
    %2912 = vmatprep.subr.mxu0 0.0
    %2913 = vmatpush1.msra.mxu0 0.0
    %2914 = vmatprep.subr.mxu0 0.0
    %2915 = vmatpush1.msra.mxu0 0.0
    %2916 = vmatprep.subr.mxu0 0.0
    %2917 = vmatpush1.msra.mxu0 0.0
    %2918 = vmatprep.subr.mxu0 0.0
    %2919 = vmatpush1.msra.mxu0 0.0
    %2920 = vmatprep.subr.mxu0 0.0
    %2921 = vmatpush1.msra.mxu0 0.0
    %2922 = vmatprep.subr.mxu0 0.0
    %2923 = vmatpush1.msra.mxu0 0.0
    %2924 = vmatprep.subr.mxu0 0.0
    %2925 = vmatpush1.msra.mxu0 0.0
    %2926 = vmatprep.subr.mxu0 0.0
    %2927 = vmatpush1.msra.mxu0 0.0
    %2928 = vmatprep.subr.mxu0 0.0
    %2929 = vmatpush1.msra.mxu0 0.0
    %2930 = vmatprep.subr.mxu0 0.0
    %2931 = vmatpush1.msra.mxu0 0.0
    %2932 = vmatprep.subr.mxu0 0.0
    %2933 = vmatpush1.msra.mxu0 0.0
    %2934 = vmatprep.subr.mxu0 0.0
    %2935 = vmatpush1.msra.mxu0 0.0
    %2936 = vmatprep.subr.mxu0 0.0
    %2937 = vmatpush1.msra.mxu0 0.0
    %2938 = vmatprep.subr.mxu0 0.0
    %2939 = vmatpush1.msra.mxu0 0.0
    %2940 = vmatprep.subr.mxu0 0.0
    %2941 = vmatpush1.msra.mxu0 0.0
    %2942 = vmatprep.mubr.f32.mxu0 0.0
    %v2943 = vand.u32 %v2786, 4294901760
    %2944 = vmatmul.mubr.f32.gmra.mrb[0].mxu0 %v2943
    %v2945 = vpop.f32.mrb[0].mxu0
    %v2946 = vadd.f32 %v2865, %v2945
    %v2947 = vpop.f32.mrb[0].mxu0
    %2948 = vdwg.mxu0
    %2949 = vmatprep.subr.mxu0 0.0
    %v2950 = vand.u32 %v31, 4294901760
    %v2951 = vsub.f32 %v31, %v2950
    %2952 = vmatpush1.msra.mxu0 %v2951
    %2953 = vmatprep.subr.mxu0 0.0
    %v2954 = vand.u32 %v2789, 4294901760
    %v2955 = vsub.f32 %v2789, %v2954
    %2956 = vmatpush1.msra.mxu0 %v2955
    %2957 = vmatprep.subr.mxu0 0.0
    %2958 = vmatpush1.msra.mxu0 0.0
    %2959 = vmatprep.subr.mxu0 0.0
    %2960 = vmatpush1.msra.mxu0 0.0
    %2961 = vmatprep.subr.mxu0 0.0
    %2962 = vmatpush1.msra.mxu0 0.0
    %2963 = vmatprep.subr.mxu0 0.0
    %2964 = vmatpush1.msra.mxu0 0.0
    %2965 = vmatprep.subr.mxu0 0.0
    %2966 = vmatpush1.msra.mxu0 0.0
    %2967 = vmatprep.subr.mxu0 0.0
    %2968 = vmatpush1.msra.mxu0 0.0
    %2969 = vmatprep.subr.mxu0 0.0
    %2970 = vmatpush1.msra.mxu0 0.0
    %2971 = vmatprep.subr.mxu0 0.0
    %2972 = vmatpush1.msra.mxu0 0.0
    %2973 = vmatprep.subr.mxu0 0.0
    %2974 = vmatpush1.msra.mxu0 0.0
    %2975 = vmatprep.subr.mxu0 0.0
    %2976 = vmatpush1.msra.mxu0 0.0
    %2977 = vmatprep.subr.mxu0 0.0
    %2978 = vmatpush1.msra.mxu0 0.0
    %2979 = vmatprep.subr.mxu0 0.0
    %2980 = vmatpush1.msra.mxu0 0.0
    %2981 = vmatprep.subr.mxu0 0.0
    %2982 = vmatpush1.msra.mxu0 0.0
    %2983 = vmatprep.subr.mxu0 0.0
    %2984 = vmatpush1.msra.mxu0 0.0
    %2985 = vmatprep.subr.mxu0 0.0
    %2986 = vmatpush1.msra.mxu0 0.0
    %2987 = vmatprep.subr.mxu0 0.0
    %2988 = vmatpush1.msra.mxu0 0.0
    %2989 = vmatprep.subr.mxu0 0.0
    %2990 = vmatpush1.msra.mxu0 0.0
    %2991 = vmatprep.subr.mxu0 0.0
    %2992 = vmatpush1.msra.mxu0 0.0
    %2993 = vmatprep.subr.mxu0 0.0
    %2994 = vmatpush1.msra.mxu0 0.0
    %2995 = vmatprep.subr.mxu0 0.0
    %2996 = vmatpush1.msra.mxu0 0.0
    %2997 = vmatprep.subr.mxu0 0.0
    %2998 = vmatpush1.msra.mxu0 0.0
    %2999 = vmatprep.subr.mxu0 0.0
    %3000 = vmatpush1.msra.mxu0 0.0
    %3001 = vmatprep.subr.mxu0 0.0
    %3002 = vmatpush1.msra.mxu0 0.0
    %3003 = vmatprep.subr.mxu0 0.0
    %3004 = vmatpush1.msra.mxu0 0.0
    %3005 = vmatprep.subr.mxu0 0.0
    %3006 = vmatpush1.msra.mxu0 0.0
    %3007 = vmatprep.subr.mxu0 0.0
    %3008 = vmatpush1.msra.mxu0 0.0
    %3009 = vmatprep.subr.mxu0 0.0
    %3010 = vmatpush1.msra.mxu0 0.0
    %3011 = vmatprep.subr.mxu0 0.0
    %3012 = vmatpush1.msra.mxu0 0.0
    %3013 = vmatprep.subr.mxu0 0.0
    %3014 = vmatpush1.msra.mxu0 0.0
    %3015 = vmatprep.subr.mxu0 0.0
    %3016 = vmatpush1.msra.mxu0 0.0
    %3017 = vmatprep.mubr.f32.mxu0 0.0
    %v3018 = vand.u32 %v2786, 4294901760
    %v3019 = vsub.f32 %v2786, %v3018
    %3020 = vmatmul.mubr.f32.gmra.mrb[0].mxu0 %v3019
    %v3021 = vpop.f32.mrb[0].mxu0
    %v3022 = vadd.f32 %v2946, %v3021
    %v3023 = vpop.f32.mrb[0].mxu0
    %3024 = vdwg.mxu0
    %3025 = vmatprep.subr.mxu0 0.0
    %v3026 = vand.u32 %v31, 4294901760
    %3027 = vmatpush1.msra.mxu0 %v3026
    %3028 = vmatprep.subr.mxu0 0.0
    %v3029 = vand.u32 %v2789, 4294901760
    %3030 = vmatpush1.msra.mxu0 %v3029
    %3031 = vmatprep.subr.mxu0 0.0
    %3032 = vmatpush1.msra.mxu0 0.0
    %3033 = vmatprep.subr.mxu0 0.0
    %3034 = vmatpush1.msra.mxu0 0.0
    %3035 = vmatprep.subr.mxu0 0.0
    %3036 = vmatpush1.msra.mxu0 0.0
    %3037 = vmatprep.subr.mxu0 0.0
    %3038 = vmatpush1.msra.mxu0 0.0
    %3039 = vmatprep.subr.mxu0 0.0
    %3040 = vmatpush1.msra.mxu0 0.0
    %3041 = vmatprep.subr.mxu0 0.0
    %3042 = vmatpush1.msra.mxu0 0.0
    %3043 = vmatprep.subr.mxu0 0.0
    %3044 = vmatpush1.msra.mxu0 0.0
    %3045 = vmatprep.subr.mxu0 0.0
    %3046 = vmatpush1.msra.mxu0 0.0
    %3047 = vmatprep.subr.mxu0 0.0
    %3048 = vmatpush1.msra.mxu0 0.0
    %3049 = vmatprep.subr.mxu0 0.0
    %3050 = vmatpush1.msra.mxu0 0.0
    %3051 = vmatprep.subr.mxu0 0.0
    %3052 = vmatpush1.msra.mxu0 0.0
    %3053 = vmatprep.subr.mxu0 0.0
    %3054 = vmatpush1.msra.mxu0 0.0
    %3055 = vmatprep.subr.mxu0 0.0
    %3056 = vmatpush1.msra.mxu0 0.0
    %3057 = vmatprep.subr.mxu0 0.0
    %3058 = vmatpush1.msra.mxu0 0.0
    %3059 = vmatprep.subr.mxu0 0.0
    %3060 = vmatpush1.msra.mxu0 0.0
    %3061 = vmatprep.subr.mxu0 0.0
    %3062 = vmatpush1.msra.mxu0 0.0
    %3063 = vmatprep.subr.mxu0 0.0
    %3064 = vmatpush1.msra.mxu0 0.0
    %3065 = vmatprep.subr.mxu0 0.0
    %3066 = vmatpush1.msra.mxu0 0.0
    %3067 = vmatprep.subr.mxu0 0.0
    %3068 = vmatpush1.msra.mxu0 0.0
    %3069 = vmatprep.subr.mxu0 0.0
    %3070 = vmatpush1.msra.mxu0 0.0
    %3071 = vmatprep.subr.mxu0 0.0
    %3072 = vmatpush1.msra.mxu0 0.0
    %3073 = vmatprep.subr.mxu0 0.0
    %3074 = vmatpush1.msra.mxu0 0.0
    %3075 = vmatprep.subr.mxu0 0.0
    %3076 = vmatpush1.msra.mxu0 0.0
    %3077 = vmatprep.subr.mxu0 0.0
    %3078 = vmatpush1.msra.mxu0 0.0
    %3079 = vmatprep.subr.mxu0 0.0
    %3080 = vmatpush1.msra.mxu0 0.0
    %3081 = vmatprep.subr.mxu0 0.0
    %3082 = vmatpush1.msra.mxu0 0.0
    %3083 = vmatprep.subr.mxu0 0.0
    %3084 = vmatpush1.msra.mxu0 0.0
    %3085 = vmatprep.subr.mxu0 0.0
    %3086 = vmatpush1.msra.mxu0 0.0
    %3087 = vmatprep.subr.mxu0 0.0
    %3088 = vmatpush1.msra.mxu0 0.0
    %3089 = vmatprep.subr.mxu0 0.0
    %3090 = vmatpush1.msra.mxu0 0.0
    %3091 = vmatprep.mubr.f32.mxu0 0.0
    %v3092 = vand.u32 %v2786, 4294901760
    %v3093 = vsub.f32 %v2786, %v3092
    %v3094 = vand.u32 %v3093, 4294901760
    %3095 = vmatmul.mubr.f32.gmra.mrb[0].mxu0 %v3094
    %v3096 = vpop.f32.mrb[0].mxu0
    %v3097 = vadd.f32 %v3022, %v3096
    %v3098 = vpop.f32.mrb[0].mxu0
    %3099 = vdwg.mxu0
    %3100 = vmatprep.subr.mxu0 0.0
    %v3101 = vand.u32 %v31, 4294901760
    %v3102 = vsub.f32 %v31, %v3101
    %v3103 = vand.u32 %v3102, 4294901760
    %3104 = vmatpush1.msra.mxu0 %v3103
    %3105 = vmatprep.subr.mxu0 0.0
    %v3106 = vand.u32 %v2789, 4294901760
    %v3107 = vsub.f32 %v2789, %v3106
    %v3108 = vand.u32 %v3107, 4294901760
    %3109 = vmatpush1.msra.mxu0 %v3108
    %3110 = vmatprep.subr.mxu0 0.0
    %3111 = vmatpush1.msra.mxu0 0.0
    %3112 = vmatprep.subr.mxu0 0.0
    %3113 = vmatpush1.msra.mxu0 0.0
    %3114 = vmatprep.subr.mxu0 0.0
    %3115 = vmatpush1.msra.mxu0 0.0
    %3116 = vmatprep.subr.mxu0 0.0
    %3117 = vmatpush1.msra.mxu0 0.0
    %3118 = vmatprep.subr.mxu0 0.0
    %3119 = vmatpush1.msra.mxu0 0.0
    %3120 = vmatprep.subr.mxu0 0.0
    %3121 = vmatpush1.msra.mxu0 0.0
    %3122 = vmatprep.subr.mxu0 0.0
    %3123 = vmatpush1.msra.mxu0 0.0
    %3124 = vmatprep.subr.mxu0 0.0
    %3125 = vmatpush1.msra.mxu0 0.0
    %3126 = vmatprep.subr.mxu0 0.0
    %3127 = vmatpush1.msra.mxu0 0.0
    %3128 = vmatprep.subr.mxu0 0.0
    %3129 = vmatpush1.msra.mxu0 0.0
    %3130 = vmatprep.subr.mxu0 0.0
    %3131 = vmatpush1.msra.mxu0 0.0
    %3132 = vmatprep.subr.mxu0 0.0
    %3133 = vmatpush1.msra.mxu0 0.0
    %3134 = vmatprep.subr.mxu0 0.0
    %3135 = vmatpush1.msra.mxu0 0.0
    %3136 = vmatprep.subr.mxu0 0.0
    %3137 = vmatpush1.msra.mxu0 0.0
    %3138 = vmatprep.subr.mxu0 0.0
    %3139 = vmatpush1.msra.mxu0 0.0
    %3140 = vmatprep.subr.mxu0 0.0
    %3141 = vmatpush1.msra.mxu0 0.0
    %3142 = vmatprep.subr.mxu0 0.0
    %3143 = vmatpush1.msra.mxu0 0.0
    %3144 = vmatprep.subr.mxu0 0.0
    %3145 = vmatpush1.msra.mxu0 0.0
    %3146 = vmatprep.subr.mxu0 0.0
    %3147 = vmatpush1.msra.mxu0 0.0
    %3148 = vmatprep.subr.mxu0 0.0
    %3149 = vmatpush1.msra.mxu0 0.0
    %3150 = vmatprep.subr.mxu0 0.0
    %3151 = vmatpush1.msra.mxu0 0.0
    %3152 = vmatprep.subr.mxu0 0.0
    %3153 = vmatpush1.msra.mxu0 0.0
    %3154 = vmatprep.subr.mxu0 0.0
    %3155 = vmatpush1.msra.mxu0 0.0
    %3156 = vmatprep.subr.mxu0 0.0
    %3157 = vmatpush1.msra.mxu0 0.0
    %3158 = vmatprep.subr.mxu0 0.0
    %3159 = vmatpush1.msra.mxu0 0.0
    %3160 = vmatprep.subr.mxu0 0.0
    %3161 = vmatpush1.msra.mxu0 0.0
    %3162 = vmatprep.subr.mxu0 0.0
    %3163 = vmatpush1.msra.mxu0 0.0
    %3164 = vmatprep.subr.mxu0 0.0
    %3165 = vmatpush1.msra.mxu0 0.0
    %3166 = vmatprep.subr.mxu0 0.0
    %3167 = vmatpush1.msra.mxu0 0.0
    %3168 = vmatprep.subr.mxu0 0.0
    %3169 = vmatpush1.msra.mxu0 0.0
    %3170 = vmatprep.mubr.f32.mxu0 0.0
    %v3171 = vand.u32 %v2786, 4294901760
    %3172 = vmatmul.mubr.f32.gmra.mrb[0].mxu0 %v3171
    %v3173 = vpop.f32.mrb[0].mxu0
    %v3174 = vadd.f32 %v3097, %v3173
    %v3175 = vpop.f32.mrb[0].mxu0
    %3176 = vdwg.mxu0
    %3177 = vmatprep.subr.mxu0 0.0
    %v3178 = vand.u32 %v31, 4294901760
    %3179 = vmatpush1.msra.mxu0 %v3178
    %3180 = vmatprep.subr.mxu0 0.0
    %v3181 = vand.u32 %v2789, 4294901760
    %3182 = vmatpush1.msra.mxu0 %v3181
    %3183 = vmatprep.subr.mxu0 0.0
    %3184 = vmatpush1.msra.mxu0 0.0
    %3185 = vmatprep.subr.mxu0 0.0
    %3186 = vmatpush1.msra.mxu0 0.0
    %3187 = vmatprep.subr.mxu0 0.0
    %3188 = vmatpush1.msra.mxu0 0.0
    %3189 = vmatprep.subr.mxu0 0.0
    %3190 = vmatpush1.msra.mxu0 0.0
    %3191 = vmatprep.subr.mxu0 0.0
    %3192 = vmatpush1.msra.mxu0 0.0
    %3193 = vmatprep.subr.mxu0 0.0
    %3194 = vmatpush1.msra.mxu0 0.0
    %3195 = vmatprep.subr.mxu0 0.0
    %3196 = vmatpush1.msra.mxu0 0.0
    %3197 = vmatprep.subr.mxu0 0.0
    %3198 = vmatpush1.msra.mxu0 0.0
    %3199 = vmatprep.subr.mxu0 0.0
    %3200 = vmatpush1.msra.mxu0 0.0
    %3201 = vmatprep.subr.mxu0 0.0
    %3202 = vmatpush1.msra.mxu0 0.0
    %3203 = vmatprep.subr.mxu0 0.0
    %3204 = vmatpush1.msra.mxu0 0.0
    %3205 = vmatprep.subr.mxu0 0.0
    %3206 = vmatpush1.msra.mxu0 0.0
    %3207 = vmatprep.subr.mxu0 0.0
    %3208 = vmatpush1.msra.mxu0 0.0
    %3209 = vmatprep.subr.mxu0 0.0
    %3210 = vmatpush1.msra.mxu0 0.0
    %3211 = vmatprep.subr.mxu0 0.0
    %3212 = vmatpush1.msra.mxu0 0.0
    %3213 = vmatprep.subr.mxu0 0.0
    %3214 = vmatpush1.msra.mxu0 0.0
    %3215 = vmatprep.subr.mxu0 0.0
    %3216 = vmatpush1.msra.mxu0 0.0
    %3217 = vmatprep.subr.mxu0 0.0
    %3218 = vmatpush1.msra.mxu0 0.0
    %3219 = vmatprep.subr.mxu0 0.0
    %3220 = vmatpush1.msra.mxu0 0.0
    %3221 = vmatprep.subr.mxu0 0.0
    %3222 = vmatpush1.msra.mxu0 0.0
    %3223 = vmatprep.subr.mxu0 0.0
    %3224 = vmatpush1.msra.mxu0 0.0
    %3225 = vmatprep.subr.mxu0 0.0
    %3226 = vmatpush1.msra.mxu0 0.0
    %3227 = vmatprep.subr.mxu0 0.0
    %3228 = vmatpush1.msra.mxu0 0.0
    %3229 = vmatprep.subr.mxu0 0.0
    %3230 = vmatpush1.msra.mxu0 0.0
    %3231 = vmatprep.subr.mxu0 0.0
    %3232 = vmatpush1.msra.mxu0 0.0
    %3233 = vmatprep.subr.mxu0 0.0
    %3234 = vmatpush1.msra.mxu0 0.0
    %3235 = vmatprep.subr.mxu0 0.0
    %3236 = vmatpush1.msra.mxu0 0.0
    %3237 = vmatprep.subr.mxu0 0.0
    %3238 = vmatpush1.msra.mxu0 0.0
    %3239 = vmatprep.subr.mxu0 0.0
    %3240 = vmatpush1.msra.mxu0 0.0
    %3241 = vmatprep.subr.mxu0 0.0
    %3242 = vmatpush1.msra.mxu0 0.0
    %3243 = vmatprep.mubr.f32.mxu0 0.0
    %v3244 = vand.u32 %v2786, 4294901760
    %3245 = vmatmul.mubr.f32.gmra.mrb[0].mxu0 %v3244
    %v3246 = vpop.f32.mrb[0].mxu0
    %v3247 = vadd.f32 %v3174, %v3246
    %v3248 = vpop.f32.mrb[0].mxu0
    %3249 = vdwg.mxu0
    %3258 = vset.pattern.permute.xlu0 0
    %3259 = vperm.xlu0 %3258, %v2703
    %v3260 = vpop.permute.xlu0 %3259
    %3261 = vset.pattern.permute.xlu0 0
    %3262 = vperm.xlu0 %3261, %v2704
    %v3263 = vpop.permute.xlu0 %3262
    %3264 = vset.pattern.permute.xlu0 0
    %3265 = vperm.xlu0 %3264, %v2706
    %v3266 = vpop.permute.xlu0 %3265
    %3267 = vset.pattern.permute.xlu0 0
    %3268 = vperm.xlu0 %3267, %v2707
    %v3269 = vpop.permute.xlu0 %3268
    %3270 = vset.pattern.permute.xlu0 0
    %3271 = vperm.xlu0 %3270, %v2709
    %v3272 = vpop.permute.xlu0 %3271
    %3273 = vset.pattern.permute.xlu0 0
    %3274 = vperm.xlu0 %3273, %v2710
    %v3275 = vpop.permute.xlu0 %3274
    %3276 = vset.pattern.permute.xlu0 0
    %3277 = vperm.xlu0 %3276, %v2712
    %v3278 = vpop.permute.xlu0 %3277
    %3279 = vset.pattern.permute.xlu0 0
    %3280 = vperm.xlu0 %3279, %v2713
    %v3281 = vpop.permute.xlu0 %3280
    %v3282 = vlaneseq
    %v3283 = vshrl.u32 %v3282, 7
    %v3284 = vsub.s32 %v2315, %v3283
    %v3285 = vrot.slane %v3260, %v3284
    %v3286 = vlaneseq
    %v3287 = vshrl.u32 %v3286, 7
    %v3288 = vsub.s32 %v2320, %v3287
    %v3289 = vrot.slane %v3263, %v3288
    %v3290 = vsel %vm2325, %v3289, %v3285
    %v3291 = vlaneseq
    %v3292 = vshrl.u32 %v3291, 7
    %v3293 = vsub.s32 %v2315, %v3292
    %v3294 = vrot.slane %v3266, %v3293
    %v3295 = vlaneseq
    %v3296 = vshrl.u32 %v3295, 7
    %v3297 = vsub.s32 %v2320, %v3296
    %v3298 = vrot.slane %v3269, %v3297
    %v3299 = vsel %vm2325, %v3298, %v3294
    %v3300 = vlaneseq
    %v3301 = vshrl.u32 %v3300, 7
    %v3302 = vsub.s32 %v2315, %v3301
    %v3303 = vrot.slane %v3272, %v3302
    %v3304 = vlaneseq
    %v3305 = vshrl.u32 %v3304, 7
    %v3306 = vsub.s32 %v2320, %v3305
    %v3307 = vrot.slane %v3275, %v3306
    %v3308 = vsel %vm2325, %v3307, %v3303
    %v3309 = vlaneseq
    %v3310 = vshrl.u32 %v3309, 7
    %v3311 = vsub.s32 %v2315, %v3310
    %v3312 = vrot.slane %v3278, %v3311
    %v3313 = vlaneseq
    %v3314 = vshrl.u32 %v3313, 7
    %v3315 = vsub.s32 %v2320, %v3314
    %v3316 = vrot.slane %v3281, %v3315
    %v3317 = vsel %vm2325, %v3316, %v3312
    %v3318 = vsel %vm2390, %v3299, %v3290
    %v3319 = vsel %vm2392, %v3308, %v3318
    %v3320 = vsel %vm2394, %v3317, %v3319
    %v3321 = vsel %vm2785, %v3320, 0
    %v3323 = vsel %vm2788, %v34, 0
    %3325 = vmatprep.subr.mxu0 0.0
    %v3326 = vand.u32 %v33, 4294901760
    %3327 = vmatpush1.msra.mxu0 %v3326
    %3328 = vmatprep.subr.mxu0 0.0
    %v3329 = vand.u32 %v3323, 4294901760
    %3330 = vmatpush1.msra.mxu0 %v3329
    %3331 = vmatprep.subr.mxu0 0.0
    %3332 = vmatpush1.msra.mxu0 0.0
    %3333 = vmatprep.subr.mxu0 0.0
    %3334 = vmatpush1.msra.mxu0 0.0
    %3335 = vmatprep.subr.mxu0 0.0
    %3336 = vmatpush1.msra.mxu0 0.0
    %3337 = vmatprep.subr.mxu0 0.0
    %3338 = vmatpush1.msra.mxu0 0.0
    %3339 = vmatprep.subr.mxu0 0.0
    %3340 = vmatpush1.msra.mxu0 0.0
    %3341 = vmatprep.subr.mxu0 0.0
    %3342 = vmatpush1.msra.mxu0 0.0
    %3343 = vmatprep.subr.mxu0 0.0
    %3344 = vmatpush1.msra.mxu0 0.0
    %3345 = vmatprep.subr.mxu0 0.0
    %3346 = vmatpush1.msra.mxu0 0.0
    %3347 = vmatprep.subr.mxu0 0.0
    %3348 = vmatpush1.msra.mxu0 0.0
    %3349 = vmatprep.subr.mxu0 0.0
    %3350 = vmatpush1.msra.mxu0 0.0
    %3351 = vmatprep.subr.mxu0 0.0
    %3352 = vmatpush1.msra.mxu0 0.0
    %3353 = vmatprep.subr.mxu0 0.0
    %3354 = vmatpush1.msra.mxu0 0.0
    %3355 = vmatprep.subr.mxu0 0.0
    %3356 = vmatpush1.msra.mxu0 0.0
    %3357 = vmatprep.subr.mxu0 0.0
    %3358 = vmatpush1.msra.mxu0 0.0
    %3359 = vmatprep.subr.mxu0 0.0
    %3360 = vmatpush1.msra.mxu0 0.0
    %3361 = vmatprep.subr.mxu0 0.0
    %3362 = vmatpush1.msra.mxu0 0.0
    %3363 = vmatprep.subr.mxu0 0.0
    %3364 = vmatpush1.msra.mxu0 0.0
    %3365 = vmatprep.subr.mxu0 0.0
    %3366 = vmatpush1.msra.mxu0 0.0
    %3367 = vmatprep.subr.mxu0 0.0
    %3368 = vmatpush1.msra.mxu0 0.0
    %3369 = vmatprep.subr.mxu0 0.0
    %3370 = vmatpush1.msra.mxu0 0.0
    %3371 = vmatprep.subr.mxu0 0.0
    %3372 = vmatpush1.msra.mxu0 0.0
    %3373 = vmatprep.subr.mxu0 0.0
    %3374 = vmatpush1.msra.mxu0 0.0
    %3375 = vmatprep.subr.mxu0 0.0
    %3376 = vmatpush1.msra.mxu0 0.0
    %3377 = vmatprep.subr.mxu0 0.0
    %3378 = vmatpush1.msra.mxu0 0.0
    %3379 = vmatprep.subr.mxu0 0.0
    %3380 = vmatpush1.msra.mxu0 0.0
    %3381 = vmatprep.subr.mxu0 0.0
    %3382 = vmatpush1.msra.mxu0 0.0
    %3383 = vmatprep.subr.mxu0 0.0
    %3384 = vmatpush1.msra.mxu0 0.0
    %3385 = vmatprep.subr.mxu0 0.0
    %3386 = vmatpush1.msra.mxu0 0.0
    %3387 = vmatprep.subr.mxu0 0.0
    %3388 = vmatpush1.msra.mxu0 0.0
    %3389 = vmatprep.subr.mxu0 0.0
    %3390 = vmatpush1.msra.mxu0 0.0
    %3391 = vmatprep.mubr.f32.mxu0 0.0
    %v3392 = vand.u32 %v3321, 4294901760
    %v3393 = vsub.f32 %v3321, %v3392
    %v3394 = vand.u32 %v3393, 4294901760
    %v3395 = vsub.f32 %v3393, %v3394
    %v3396 = vand.u32 %v3395, 4294901760
    %3397 = vmatmul.mubr.f32.gmra.mrb[0].mxu0 %v3396
    %v3398 = vpop.f32.mrb[0].mxu0
    %v3399 = vadd.f32 0.0, %v3398
    %v3400 = vpop.f32.mrb[0].mxu0
    %3401 = vdwg.mxu0
    %3402 = vmatprep.subr.mxu0 0.0
    %v3403 = vand.u32 %v33, 4294901760
    %v3404 = vsub.f32 %v33, %v3403
    %v3405 = vand.u32 %v3404, 4294901760
    %v3406 = vsub.f32 %v3404, %v3405
    %v3407 = vand.u32 %v3406, 4294901760
    %3408 = vmatpush1.msra.mxu0 %v3407
    %3409 = vmatprep.subr.mxu0 0.0
    %v3410 = vand.u32 %v3323, 4294901760
    %v3411 = vsub.f32 %v3323, %v3410
    %v3412 = vand.u32 %v3411, 4294901760
    %v3413 = vsub.f32 %v3411, %v3412
    %v3414 = vand.u32 %v3413, 4294901760
    %3415 = vmatpush1.msra.mxu0 %v3414
    %3416 = vmatprep.subr.mxu0 0.0
    %3417 = vmatpush1.msra.mxu0 0.0
    %3418 = vmatprep.subr.mxu0 0.0
    %3419 = vmatpush1.msra.mxu0 0.0
    %3420 = vmatprep.subr.mxu0 0.0
    %3421 = vmatpush1.msra.mxu0 0.0
    %3422 = vmatprep.subr.mxu0 0.0
    %3423 = vmatpush1.msra.mxu0 0.0
    %3424 = vmatprep.subr.mxu0 0.0
    %3425 = vmatpush1.msra.mxu0 0.0
    %3426 = vmatprep.subr.mxu0 0.0
    %3427 = vmatpush1.msra.mxu0 0.0
    %3428 = vmatprep.subr.mxu0 0.0
    %3429 = vmatpush1.msra.mxu0 0.0
    %3430 = vmatprep.subr.mxu0 0.0
    %3431 = vmatpush1.msra.mxu0 0.0
    %3432 = vmatprep.subr.mxu0 0.0
    %3433 = vmatpush1.msra.mxu0 0.0
    %3434 = vmatprep.subr.mxu0 0.0
    %3435 = vmatpush1.msra.mxu0 0.0
    %3436 = vmatprep.subr.mxu0 0.0
    %3437 = vmatpush1.msra.mxu0 0.0
    %3438 = vmatprep.subr.mxu0 0.0
    %3439 = vmatpush1.msra.mxu0 0.0
    %3440 = vmatprep.subr.mxu0 0.0
    %3441 = vmatpush1.msra.mxu0 0.0
    %3442 = vmatprep.subr.mxu0 0.0
    %3443 = vmatpush1.msra.mxu0 0.0
    %3444 = vmatprep.subr.mxu0 0.0
    %3445 = vmatpush1.msra.mxu0 0.0
    %3446 = vmatprep.subr.mxu0 0.0
    %3447 = vmatpush1.msra.mxu0 0.0
    %3448 = vmatprep.subr.mxu0 0.0
    %3449 = vmatpush1.msra.mxu0 0.0
    %3450 = vmatprep.subr.mxu0 0.0
    %3451 = vmatpush1.msra.mxu0 0.0
    %3452 = vmatprep.subr.mxu0 0.0
    %3453 = vmatpush1.msra.mxu0 0.0
    %3454 = vmatprep.subr.mxu0 0.0
    %3455 = vmatpush1.msra.mxu0 0.0
    %3456 = vmatprep.subr.mxu0 0.0
    %3457 = vmatpush1.msra.mxu0 0.0
    %3458 = vmatprep.subr.mxu0 0.0
    %3459 = vmatpush1.msra.mxu0 0.0
    %3460 = vmatprep.subr.mxu0 0.0
    %3461 = vmatpush1.msra.mxu0 0.0
    %3462 = vmatprep.subr.mxu0 0.0
    %3463 = vmatpush1.msra.mxu0 0.0
    %3464 = vmatprep.subr.mxu0 0.0
    %3465 = vmatpush1.msra.mxu0 0.0
    %3466 = vmatprep.subr.mxu0 0.0
    %3467 = vmatpush1.msra.mxu0 0.0
    %3468 = vmatprep.subr.mxu0 0.0
    %3469 = vmatpush1.msra.mxu0 0.0
    %3470 = vmatprep.subr.mxu0 0.0
    %3471 = vmatpush1.msra.mxu0 0.0
    %3472 = vmatprep.subr.mxu0 0.0
    %3473 = vmatpush1.msra.mxu0 0.0
    %3474 = vmatprep.subr.mxu0 0.0
    %3475 = vmatpush1.msra.mxu0 0.0
    %3476 = vmatprep.mubr.f32.mxu0 0.0
    %v3477 = vand.u32 %v3321, 4294901760
    %3478 = vmatmul.mubr.f32.gmra.mrb[0].mxu0 %v3477
    %v3479 = vpop.f32.mrb[0].mxu0
    %v3480 = vadd.f32 %v3399, %v3479
    %v3481 = vpop.f32.mrb[0].mxu0
    %3482 = vdwg.mxu0
    %3483 = vmatprep.subr.mxu0 0.0
    %v3484 = vand.u32 %v33, 4294901760
    %v3485 = vsub.f32 %v33, %v3484
    %3486 = vmatpush1.msra.mxu0 %v3485
    %3487 = vmatprep.subr.mxu0 0.0
    %v3488 = vand.u32 %v3323, 4294901760
    %v3489 = vsub.f32 %v3323, %v3488
    %3490 = vmatpush1.msra.mxu0 %v3489
    %3491 = vmatprep.subr.mxu0 0.0
    %3492 = vmatpush1.msra.mxu0 0.0
    %3493 = vmatprep.subr.mxu0 0.0
    %3494 = vmatpush1.msra.mxu0 0.0
    %3495 = vmatprep.subr.mxu0 0.0
    %3496 = vmatpush1.msra.mxu0 0.0
    %3497 = vmatprep.subr.mxu0 0.0
    %3498 = vmatpush1.msra.mxu0 0.0
    %3499 = vmatprep.subr.mxu0 0.0
    %3500 = vmatpush1.msra.mxu0 0.0
    %3501 = vmatprep.subr.mxu0 0.0
    %3502 = vmatpush1.msra.mxu0 0.0
    %3503 = vmatprep.subr.mxu0 0.0
    %3504 = vmatpush1.msra.mxu0 0.0
    %3505 = vmatprep.subr.mxu0 0.0
    %3506 = vmatpush1.msra.mxu0 0.0
    %3507 = vmatprep.subr.mxu0 0.0
    %3508 = vmatpush1.msra.mxu0 0.0
    %3509 = vmatprep.subr.mxu0 0.0
    %3510 = vmatpush1.msra.mxu0 0.0
    %3511 = vmatprep.subr.mxu0 0.0
    %3512 = vmatpush1.msra.mxu0 0.0
    %3513 = vmatprep.subr.mxu0 0.0
    %3514 = vmatpush1.msra.mxu0 0.0
    %3515 = vmatprep.subr.mxu0 0.0
    %3516 = vmatpush1.msra.mxu0 0.0
    %3517 = vmatprep.subr.mxu0 0.0
    %3518 = vmatpush1.msra.mxu0 0.0
    %3519 = vmatprep.subr.mxu0 0.0
    %3520 = vmatpush1.msra.mxu0 0.0
    %3521 = vmatprep.subr.mxu0 0.0
    %3522 = vmatpush1.msra.mxu0 0.0
    %3523 = vmatprep.subr.mxu0 0.0
    %3524 = vmatpush1.msra.mxu0 0.0
    %3525 = vmatprep.subr.mxu0 0.0
    %3526 = vmatpush1.msra.mxu0 0.0
    %3527 = vmatprep.subr.mxu0 0.0
    %3528 = vmatpush1.msra.mxu0 0.0
    %3529 = vmatprep.subr.mxu0 0.0
    %3530 = vmatpush1.msra.mxu0 0.0
    %3531 = vmatprep.subr.mxu0 0.0
    %3532 = vmatpush1.msra.mxu0 0.0
    %3533 = vmatprep.subr.mxu0 0.0
    %3534 = vmatpush1.msra.mxu0 0.0
    %3535 = vmatprep.subr.mxu0 0.0
    %3536 = vmatpush1.msra.mxu0 0.0
    %3537 = vmatprep.subr.mxu0 0.0
    %3538 = vmatpush1.msra.mxu0 0.0
    %3539 = vmatprep.subr.mxu0 0.0
    %3540 = vmatpush1.msra.mxu0 0.0
    %3541 = vmatprep.subr.mxu0 0.0
    %3542 = vmatpush1.msra.mxu0 0.0
    %3543 = vmatprep.subr.mxu0 0.0
    %3544 = vmatpush1.msra.mxu0 0.0
    %3545 = vmatprep.subr.mxu0 0.0
    %3546 = vmatpush1.msra.mxu0 0.0
    %3547 = vmatprep.subr.mxu0 0.0
    %3548 = vmatpush1.msra.mxu0 0.0
    %3549 = vmatprep.subr.mxu0 0.0
    %3550 = vmatpush1.msra.mxu0 0.0
    %3551 = vmatprep.mubr.f32.mxu0 0.0
    %v3552 = vand.u32 %v3321, 4294901760
    %v3553 = vsub.f32 %v3321, %v3552
    %3554 = vmatmul.mubr.f32.gmra.mrb[0].mxu0 %v3553
    %v3555 = vpop.f32.mrb[0].mxu0
    %v3556 = vadd.f32 %v3480, %v3555
    %v3557 = vpop.f32.mrb[0].mxu0
    %3558 = vdwg.mxu0
    %3559 = vmatprep.subr.mxu0 0.0
    %v3560 = vand.u32 %v33, 4294901760
    %3561 = vmatpush1.msra.mxu0 %v3560
    %3562 = vmatprep.subr.mxu0 0.0
    %v3563 = vand.u32 %v3323, 4294901760
    %3564 = vmatpush1.msra.mxu0 %v3563
    %3565 = vmatprep.subr.mxu0 0.0
    %3566 = vmatpush1.msra.mxu0 0.0
    %3567 = vmatprep.subr.mxu0 0.0
    %3568 = vmatpush1.msra.mxu0 0.0
    %3569 = vmatprep.subr.mxu0 0.0
    %3570 = vmatpush1.msra.mxu0 0.0
    %3571 = vmatprep.subr.mxu0 0.0
    %3572 = vmatpush1.msra.mxu0 0.0
    %3573 = vmatprep.subr.mxu0 0.0
    %3574 = vmatpush1.msra.mxu0 0.0
    %3575 = vmatprep.subr.mxu0 0.0
    %3576 = vmatpush1.msra.mxu0 0.0
    %3577 = vmatprep.subr.mxu0 0.0
    %3578 = vmatpush1.msra.mxu0 0.0
    %3579 = vmatprep.subr.mxu0 0.0
    %3580 = vmatpush1.msra.mxu0 0.0
    %3581 = vmatprep.subr.mxu0 0.0
    %3582 = vmatpush1.msra.mxu0 0.0
    %3583 = vmatprep.subr.mxu0 0.0
    %3584 = vmatpush1.msra.mxu0 0.0
    %3585 = vmatprep.subr.mxu0 0.0
    %3586 = vmatpush1.msra.mxu0 0.0
    %3587 = vmatprep.subr.mxu0 0.0
    %3588 = vmatpush1.msra.mxu0 0.0
    %3589 = vmatprep.subr.mxu0 0.0
    %3590 = vmatpush1.msra.mxu0 0.0
    %3591 = vmatprep.subr.mxu0 0.0
    %3592 = vmatpush1.msra.mxu0 0.0
    %3593 = vmatprep.subr.mxu0 0.0
    %3594 = vmatpush1.msra.mxu0 0.0
    %3595 = vmatprep.subr.mxu0 0.0
    %3596 = vmatpush1.msra.mxu0 0.0
    %3597 = vmatprep.subr.mxu0 0.0
    %3598 = vmatpush1.msra.mxu0 0.0
    %3599 = vmatprep.subr.mxu0 0.0
    %3600 = vmatpush1.msra.mxu0 0.0
    %3601 = vmatprep.subr.mxu0 0.0
    %3602 = vmatpush1.msra.mxu0 0.0
    %3603 = vmatprep.subr.mxu0 0.0
    %3604 = vmatpush1.msra.mxu0 0.0
    %3605 = vmatprep.subr.mxu0 0.0
    %3606 = vmatpush1.msra.mxu0 0.0
    %3607 = vmatprep.subr.mxu0 0.0
    %3608 = vmatpush1.msra.mxu0 0.0
    %3609 = vmatprep.subr.mxu0 0.0
    %3610 = vmatpush1.msra.mxu0 0.0
    %3611 = vmatprep.subr.mxu0 0.0
    %3612 = vmatpush1.msra.mxu0 0.0
    %3613 = vmatprep.subr.mxu0 0.0
    %3614 = vmatpush1.msra.mxu0 0.0
    %3615 = vmatprep.subr.mxu0 0.0
    %3616 = vmatpush1.msra.mxu0 0.0
    %3617 = vmatprep.subr.mxu0 0.0
    %3618 = vmatpush1.msra.mxu0 0.0
    %3619 = vmatprep.subr.mxu0 0.0
    %3620 = vmatpush1.msra.mxu0 0.0
    %3621 = vmatprep.subr.mxu0 0.0
    %3622 = vmatpush1.msra.mxu0 0.0
    %3623 = vmatprep.subr.mxu0 0.0
    %3624 = vmatpush1.msra.mxu0 0.0
    %3625 = vmatprep.mubr.f32.mxu0 0.0
    %v3626 = vand.u32 %v3321, 4294901760
    %v3627 = vsub.f32 %v3321, %v3626
    %v3628 = vand.u32 %v3627, 4294901760
    %3629 = vmatmul.mubr.f32.gmra.mrb[0].mxu0 %v3628
    %v3630 = vpop.f32.mrb[0].mxu0
    %v3631 = vadd.f32 %v3556, %v3630
    %v3632 = vpop.f32.mrb[0].mxu0
    %3633 = vdwg.mxu0
    %3634 = vmatprep.subr.mxu0 0.0
    %v3635 = vand.u32 %v33, 4294901760
    %v3636 = vsub.f32 %v33, %v3635
    %v3637 = vand.u32 %v3636, 4294901760
    %3638 = vmatpush1.msra.mxu0 %v3637
    %3639 = vmatprep.subr.mxu0 0.0
    %v3640 = vand.u32 %v3323, 4294901760
    %v3641 = vsub.f32 %v3323, %v3640
    %v3642 = vand.u32 %v3641, 4294901760
    %3643 = vmatpush1.msra.mxu0 %v3642
    %3644 = vmatprep.subr.mxu0 0.0
    %3645 = vmatpush1.msra.mxu0 0.0
    %3646 = vmatprep.subr.mxu0 0.0
    %3647 = vmatpush1.msra.mxu0 0.0
    %3648 = vmatprep.subr.mxu0 0.0
    %3649 = vmatpush1.msra.mxu0 0.0
    %3650 = vmatprep.subr.mxu0 0.0
    %3651 = vmatpush1.msra.mxu0 0.0
    %3652 = vmatprep.subr.mxu0 0.0
    %3653 = vmatpush1.msra.mxu0 0.0
    %3654 = vmatprep.subr.mxu0 0.0
    %3655 = vmatpush1.msra.mxu0 0.0
    %3656 = vmatprep.subr.mxu0 0.0
    %3657 = vmatpush1.msra.mxu0 0.0
    %3658 = vmatprep.subr.mxu0 0.0
    %3659 = vmatpush1.msra.mxu0 0.0
    %3660 = vmatprep.subr.mxu0 0.0
    %3661 = vmatpush1.msra.mxu0 0.0
    %3662 = vmatprep.subr.mxu0 0.0
    %3663 = vmatpush1.msra.mxu0 0.0
    %3664 = vmatprep.subr.mxu0 0.0
    %3665 = vmatpush1.msra.mxu0 0.0
    %3666 = vmatprep.subr.mxu0 0.0
    %3667 = vmatpush1.msra.mxu0 0.0
    %3668 = vmatprep.subr.mxu0 0.0
    %3669 = vmatpush1.msra.mxu0 0.0
    %3670 = vmatprep.subr.mxu0 0.0
    %3671 = vmatpush1.msra.mxu0 0.0
    %3672 = vmatprep.subr.mxu0 0.0
    %3673 = vmatpush1.msra.mxu0 0.0
    %3674 = vmatprep.subr.mxu0 0.0
    %3675 = vmatpush1.msra.mxu0 0.0
    %3676 = vmatprep.subr.mxu0 0.0
    %3677 = vmatpush1.msra.mxu0 0.0
    %3678 = vmatprep.subr.mxu0 0.0
    %3679 = vmatpush1.msra.mxu0 0.0
    %3680 = vmatprep.subr.mxu0 0.0
    %3681 = vmatpush1.msra.mxu0 0.0
    %3682 = vmatprep.subr.mxu0 0.0
    %3683 = vmatpush1.msra.mxu0 0.0
    %3684 = vmatprep.subr.mxu0 0.0
    %3685 = vmatpush1.msra.mxu0 0.0
    %3686 = vmatprep.subr.mxu0 0.0
    %3687 = vmatpush1.msra.mxu0 0.0
    %3688 = vmatprep.subr.mxu0 0.0
    %3689 = vmatpush1.msra.mxu0 0.0
    %3690 = vmatprep.subr.mxu0 0.0
    %3691 = vmatpush1.msra.mxu0 0.0
    %3692 = vmatprep.subr.mxu0 0.0
    %3693 = vmatpush1.msra.mxu0 0.0
    %3694 = vmatprep.subr.mxu0 0.0
    %3695 = vmatpush1.msra.mxu0 0.0
    %3696 = vmatprep.subr.mxu0 0.0
    %3697 = vmatpush1.msra.mxu0 0.0
    %3698 = vmatprep.subr.mxu0 0.0
    %3699 = vmatpush1.msra.mxu0 0.0
    %3700 = vmatprep.subr.mxu0 0.0
    %3701 = vmatpush1.msra.mxu0 0.0
    %3702 = vmatprep.subr.mxu0 0.0
    %3703 = vmatpush1.msra.mxu0 0.0
    %3704 = vmatprep.mubr.f32.mxu0 0.0
    %v3705 = vand.u32 %v3321, 4294901760
    %3706 = vmatmul.mubr.f32.gmra.mrb[0].mxu0 %v3705
    %v3707 = vpop.f32.mrb[0].mxu0
    %v3708 = vadd.f32 %v3631, %v3707
    %v3709 = vpop.f32.mrb[0].mxu0
    %3710 = vdwg.mxu0
    %3711 = vmatprep.subr.mxu0 0.0
    %v3712 = vand.u32 %v33, 4294901760
    %3713 = vmatpush1.msra.mxu0 %v3712
    %3714 = vmatprep.subr.mxu0 0.0
    %v3715 = vand.u32 %v3323, 4294901760
    %3716 = vmatpush1.msra.mxu0 %v3715
    %3717 = vmatprep.subr.mxu0 0.0
    %3718 = vmatpush1.msra.mxu0 0.0
    %3719 = vmatprep.subr.mxu0 0.0
    %3720 = vmatpush1.msra.mxu0 0.0
    %3721 = vmatprep.subr.mxu0 0.0
    %3722 = vmatpush1.msra.mxu0 0.0
    %3723 = vmatprep.subr.mxu0 0.0
    %3724 = vmatpush1.msra.mxu0 0.0
    %3725 = vmatprep.subr.mxu0 0.0
    %3726 = vmatpush1.msra.mxu0 0.0
    %3727 = vmatprep.subr.mxu0 0.0
    %3728 = vmatpush1.msra.mxu0 0.0
    %3729 = vmatprep.subr.mxu0 0.0
    %3730 = vmatpush1.msra.mxu0 0.0
    %3731 = vmatprep.subr.mxu0 0.0
    %3732 = vmatpush1.msra.mxu0 0.0
    %3733 = vmatprep.subr.mxu0 0.0
    %3734 = vmatpush1.msra.mxu0 0.0
    %3735 = vmatprep.subr.mxu0 0.0
    %3736 = vmatpush1.msra.mxu0 0.0
    %3737 = vmatprep.subr.mxu0 0.0
    %3738 = vmatpush1.msra.mxu0 0.0
    %3739 = vmatprep.subr.mxu0 0.0
    %3740 = vmatpush1.msra.mxu0 0.0
    %3741 = vmatprep.subr.mxu0 0.0
    %3742 = vmatpush1.msra.mxu0 0.0
    %3743 = vmatprep.subr.mxu0 0.0
    %3744 = vmatpush1.msra.mxu0 0.0
    %3745 = vmatprep.subr.mxu0 0.0
    %3746 = vmatpush1.msra.mxu0 0.0
    %3747 = vmatprep.subr.mxu0 0.0
    %3748 = vmatpush1.msra.mxu0 0.0
    %3749 = vmatprep.subr.mxu0 0.0
    %3750 = vmatpush1.msra.mxu0 0.0
    %3751 = vmatprep.subr.mxu0 0.0
    %3752 = vmatpush1.msra.mxu0 0.0
    %3753 = vmatprep.subr.mxu0 0.0
    %3754 = vmatpush1.msra.mxu0 0.0
    %3755 = vmatprep.subr.mxu0 0.0
    %3756 = vmatpush1.msra.mxu0 0.0
    %3757 = vmatprep.subr.mxu0 0.0
    %3758 = vmatpush1.msra.mxu0 0.0
    %3759 = vmatprep.subr.mxu0 0.0
    %3760 = vmatpush1.msra.mxu0 0.0
    %3761 = vmatprep.subr.mxu0 0.0
    %3762 = vmatpush1.msra.mxu0 0.0
    %3763 = vmatprep.subr.mxu0 0.0
    %3764 = vmatpush1.msra.mxu0 0.0
    %3765 = vmatprep.subr.mxu0 0.0
    %3766 = vmatpush1.msra.mxu0 0.0
    %3767 = vmatprep.subr.mxu0 0.0
    %3768 = vmatpush1.msra.mxu0 0.0
    %3769 = vmatprep.subr.mxu0 0.0
    %3770 = vmatpush1.msra.mxu0 0.0
    %3771 = vmatprep.subr.mxu0 0.0
    %3772 = vmatpush1.msra.mxu0 0.0
    %3773 = vmatprep.subr.mxu0 0.0
    %3774 = vmatpush1.msra.mxu0 0.0
    %3775 = vmatprep.subr.mxu0 0.0
    %3776 = vmatpush1.msra.mxu0 0.0
    %3777 = vmatprep.mubr.f32.mxu0 0.0
    %v3778 = vand.u32 %v3321, 4294901760
    %3779 = vmatmul.mubr.f32.gmra.mrb[0].mxu0 %v3778
    %v3780 = vpop.f32.mrb[0].mxu0
    %v3781 = vadd.f32 %v3708, %v3780
    %v3782 = vpop.f32.mrb[0].mxu0
    %3783 = vdwg.mxu0
    %vm3784 = vcmask 523264
    %v3785 = vsel %vm3784, %v29, 0
    %3787 = vmatprep.subr.mxu0 0.0
    %v3788 = vand.u32 %v43, 4294901760
    %3789 = vmatpush1.msra.mxu0 %v3788
    %3790 = vmatprep.subr.mxu0 0.0
    %v3791 = vand.u32 %v44, 4294901760
    %3792 = vmatpush1.msra.mxu0 %v3791
    %3793 = vmatprep.subr.mxu0 0.0
    %v3794 = vand.u32 %v45, 4294901760
    %3795 = vmatpush1.msra.mxu0 %v3794
    %3796 = vmatprep.subr.mxu0 0.0
    %v3797 = vand.u32 %v46, 4294901760
    %3798 = vmatpush1.msra.mxu0 %v3797
    %3799 = vmatprep.subr.mxu0 0.0
    %v3800 = vand.u32 %v47, 4294901760
    %3801 = vmatpush1.msra.mxu0 %v3800
    %3802 = vmatprep.subr.mxu0 0.0
    %v3803 = vand.u32 %v48, 4294901760
    %3804 = vmatpush1.msra.mxu0 %v3803
    %3805 = vmatprep.subr.mxu0 0.0
    %v3806 = vand.u32 %v49, 4294901760
    %3807 = vmatpush1.msra.mxu0 %v3806
    %3808 = vmatprep.subr.mxu0 0.0
    %v3809 = vand.u32 %v50, 4294901760
    %3810 = vmatpush1.msra.mxu0 %v3809
    %3811 = vmatprep.subr.mxu0 0.0
    %3812 = vmatpush1.msra.mxu0 0.0
    %3813 = vmatprep.subr.mxu0 0.0
    %3814 = vmatpush1.msra.mxu0 0.0
    %3815 = vmatprep.subr.mxu0 0.0
    %3816 = vmatpush1.msra.mxu0 0.0
    %3817 = vmatprep.subr.mxu0 0.0
    %3818 = vmatpush1.msra.mxu0 0.0
    %3819 = vmatprep.subr.mxu0 0.0
    %3820 = vmatpush1.msra.mxu0 0.0
    %3821 = vmatprep.subr.mxu0 0.0
    %3822 = vmatpush1.msra.mxu0 0.0
    %3823 = vmatprep.subr.mxu0 0.0
    %3824 = vmatpush1.msra.mxu0 0.0
    %3825 = vmatprep.subr.mxu0 0.0
    %3826 = vmatpush1.msra.mxu0 0.0
    %3827 = vmatprep.subr.mxu0 0.0
    %3828 = vmatpush1.msra.mxu0 0.0
    %3829 = vmatprep.subr.mxu0 0.0
    %3830 = vmatpush1.msra.mxu0 0.0
    %3831 = vmatprep.subr.mxu0 0.0
    %3832 = vmatpush1.msra.mxu0 0.0
    %3833 = vmatprep.subr.mxu0 0.0
    %3834 = vmatpush1.msra.mxu0 0.0
    %3835 = vmatprep.subr.mxu0 0.0
    %3836 = vmatpush1.msra.mxu0 0.0
    %3837 = vmatprep.subr.mxu0 0.0
    %3838 = vmatpush1.msra.mxu0 0.0
    %3839 = vmatprep.subr.mxu0 0.0
    %3840 = vmatpush1.msra.mxu0 0.0
    %3841 = vmatprep.subr.mxu0 0.0
    %3842 = vmatpush1.msra.mxu0 0.0
    %3843 = vmatprep.subr.mxu0 0.0
    %3844 = vmatpush1.msra.mxu0 0.0
    %3845 = vmatprep.subr.mxu0 0.0
    %3846 = vmatpush1.msra.mxu0 0.0
    %3847 = vmatprep.subr.mxu0 0.0
    %3848 = vmatpush1.msra.mxu0 0.0
    %3849 = vmatprep.subr.mxu0 0.0
    %3850 = vmatpush1.msra.mxu0 0.0
    %3851 = vmatprep.subr.mxu0 0.0
    %3852 = vmatpush1.msra.mxu0 0.0
    %3853 = vmatprep.subr.mxu0 0.0
    %3854 = vmatpush1.msra.mxu0 0.0
    %3855 = vmatprep.subr.mxu0 0.0
    %3856 = vmatpush1.msra.mxu0 0.0
    %3857 = vmatprep.subr.mxu0 0.0
    %3858 = vmatpush1.msra.mxu0 0.0
    %3859 = vmatprep.mubr.f32.mxu0 0.0
    %v3860 = vand.u32 %v3785, 4294901760
    %v3861 = vsub.f32 %v3785, %v3860
    %v3862 = vand.u32 %v3861, 4294901760
    %v3863 = vsub.f32 %v3861, %v3862
    %v3864 = vand.u32 %v3863, 4294901760
    %3865 = vmatmul.mubr.f32.gmra.mrb[0].mxu0 %v3864
    %v3866 = vpop.f32.mrb[0].mxu0
    %v3867 = vadd.f32 0.0, %v3866
    %v3868 = vpop.f32.mrb[0].mxu0
    %3869 = vdwg.mxu0
    %3870 = vmatprep.subr.mxu0 0.0
    %v3871 = vand.u32 %v43, 4294901760
    %v3872 = vsub.f32 %v43, %v3871
    %v3873 = vand.u32 %v3872, 4294901760
    %v3874 = vsub.f32 %v3872, %v3873
    %v3875 = vand.u32 %v3874, 4294901760
    %3876 = vmatpush1.msra.mxu0 %v3875
    %3877 = vmatprep.subr.mxu0 0.0
    %v3878 = vand.u32 %v44, 4294901760
    %v3879 = vsub.f32 %v44, %v3878
    %v3880 = vand.u32 %v3879, 4294901760
    %v3881 = vsub.f32 %v3879, %v3880
    %v3882 = vand.u32 %v3881, 4294901760
    %3883 = vmatpush1.msra.mxu0 %v3882
    %3884 = vmatprep.subr.mxu0 0.0
    %v3885 = vand.u32 %v45, 4294901760
    %v3886 = vsub.f32 %v45, %v3885
    %v3887 = vand.u32 %v3886, 4294901760
    %v3888 = vsub.f32 %v3886, %v3887
    %v3889 = vand.u32 %v3888, 4294901760
    %3890 = vmatpush1.msra.mxu0 %v3889
    %3891 = vmatprep.subr.mxu0 0.0
    %v3892 = vand.u32 %v46, 4294901760
    %v3893 = vsub.f32 %v46, %v3892
    %v3894 = vand.u32 %v3893, 4294901760
    %v3895 = vsub.f32 %v3893, %v3894
    %v3896 = vand.u32 %v3895, 4294901760
    %3897 = vmatpush1.msra.mxu0 %v3896
    %3898 = vmatprep.subr.mxu0 0.0
    %v3899 = vand.u32 %v47, 4294901760
    %v3900 = vsub.f32 %v47, %v3899
    %v3901 = vand.u32 %v3900, 4294901760
    %v3902 = vsub.f32 %v3900, %v3901
    %v3903 = vand.u32 %v3902, 4294901760
    %3904 = vmatpush1.msra.mxu0 %v3903
    %3905 = vmatprep.subr.mxu0 0.0
    %v3906 = vand.u32 %v48, 4294901760
    %v3907 = vsub.f32 %v48, %v3906
    %v3908 = vand.u32 %v3907, 4294901760
    %v3909 = vsub.f32 %v3907, %v3908
    %v3910 = vand.u32 %v3909, 4294901760
    %3911 = vmatpush1.msra.mxu0 %v3910
    %3912 = vmatprep.subr.mxu0 0.0
    %v3913 = vand.u32 %v49, 4294901760
    %v3914 = vsub.f32 %v49, %v3913
    %v3915 = vand.u32 %v3914, 4294901760
    %v3916 = vsub.f32 %v3914, %v3915
    %v3917 = vand.u32 %v3916, 4294901760
    %3918 = vmatpush1.msra.mxu0 %v3917
    %3919 = vmatprep.subr.mxu0 0.0
    %v3920 = vand.u32 %v50, 4294901760
    %v3921 = vsub.f32 %v50, %v3920
    %v3922 = vand.u32 %v3921, 4294901760
    %v3923 = vsub.f32 %v3921, %v3922
    %v3924 = vand.u32 %v3923, 4294901760
    %3925 = vmatpush1.msra.mxu0 %v3924
    %3926 = vmatprep.subr.mxu0 0.0
    %3927 = vmatpush1.msra.mxu0 0.0
    %3928 = vmatprep.subr.mxu0 0.0
    %3929 = vmatpush1.msra.mxu0 0.0
    %3930 = vmatprep.subr.mxu0 0.0
    %3931 = vmatpush1.msra.mxu0 0.0
    %3932 = vmatprep.subr.mxu0 0.0
    %3933 = vmatpush1.msra.mxu0 0.0
    %3934 = vmatprep.subr.mxu0 0.0
    %3935 = vmatpush1.msra.mxu0 0.0
    %3936 = vmatprep.subr.mxu0 0.0
    %3937 = vmatpush1.msra.mxu0 0.0
    %3938 = vmatprep.subr.mxu0 0.0
    %3939 = vmatpush1.msra.mxu0 0.0
    %3940 = vmatprep.subr.mxu0 0.0
    %3941 = vmatpush1.msra.mxu0 0.0
    %3942 = vmatprep.subr.mxu0 0.0
    %3943 = vmatpush1.msra.mxu0 0.0
    %3944 = vmatprep.subr.mxu0 0.0
    %3945 = vmatpush1.msra.mxu0 0.0
    %3946 = vmatprep.subr.mxu0 0.0
    %3947 = vmatpush1.msra.mxu0 0.0
    %3948 = vmatprep.subr.mxu0 0.0
    %3949 = vmatpush1.msra.mxu0 0.0
    %3950 = vmatprep.subr.mxu0 0.0
    %3951 = vmatpush1.msra.mxu0 0.0
    %3952 = vmatprep.subr.mxu0 0.0
    %3953 = vmatpush1.msra.mxu0 0.0
    %3954 = vmatprep.subr.mxu0 0.0
    %3955 = vmatpush1.msra.mxu0 0.0
    %3956 = vmatprep.subr.mxu0 0.0
    %3957 = vmatpush1.msra.mxu0 0.0
    %3958 = vmatprep.subr.mxu0 0.0
    %3959 = vmatpush1.msra.mxu0 0.0
    %3960 = vmatprep.subr.mxu0 0.0
    %3961 = vmatpush1.msra.mxu0 0.0
    %3962 = vmatprep.subr.mxu0 0.0
    %3963 = vmatpush1.msra.mxu0 0.0
    %3964 = vmatprep.subr.mxu0 0.0
    %3965 = vmatpush1.msra.mxu0 0.0
    %3966 = vmatprep.subr.mxu0 0.0
    %3967 = vmatpush1.msra.mxu0 0.0
    %3968 = vmatprep.subr.mxu0 0.0
    %3969 = vmatpush1.msra.mxu0 0.0
    %3970 = vmatprep.subr.mxu0 0.0
    %3971 = vmatpush1.msra.mxu0 0.0
    %3972 = vmatprep.subr.mxu0 0.0
    %3973 = vmatpush1.msra.mxu0 0.0
    %3974 = vmatprep.mubr.f32.mxu0 0.0
    %v3975 = vand.u32 %v3785, 4294901760
    %3976 = vmatmul.mubr.f32.gmra.mrb[0].mxu0 %v3975
    %v3977 = vpop.f32.mrb[0].mxu0
    %v3978 = vadd.f32 %v3867, %v3977
    %v3979 = vpop.f32.mrb[0].mxu0
    %3980 = vdwg.mxu0
    %3981 = vmatprep.subr.mxu0 0.0
    %v3982 = vand.u32 %v43, 4294901760
    %v3983 = vsub.f32 %v43, %v3982
    %3984 = vmatpush1.msra.mxu0 %v3983
    %3985 = vmatprep.subr.mxu0 0.0
    %v3986 = vand.u32 %v44, 4294901760
    %v3987 = vsub.f32 %v44, %v3986
    %3988 = vmatpush1.msra.mxu0 %v3987
    %3989 = vmatprep.subr.mxu0 0.0
    %v3990 = vand.u32 %v45, 4294901760
    %v3991 = vsub.f32 %v45, %v3990
    %3992 = vmatpush1.msra.mxu0 %v3991
    %3993 = vmatprep.subr.mxu0 0.0
    %v3994 = vand.u32 %v46, 4294901760
    %v3995 = vsub.f32 %v46, %v3994
    %3996 = vmatpush1.msra.mxu0 %v3995
    %3997 = vmatprep.subr.mxu0 0.0
    %v3998 = vand.u32 %v47, 4294901760
    %v3999 = vsub.f32 %v47, %v3998
    %4000 = vmatpush1.msra.mxu0 %v3999
    %4001 = vmatprep.subr.mxu0 0.0
    %v4002 = vand.u32 %v48, 4294901760
    %v4003 = vsub.f32 %v48, %v4002
    %4004 = vmatpush1.msra.mxu0 %v4003
    %4005 = vmatprep.subr.mxu0 0.0
    %v4006 = vand.u32 %v49, 4294901760
    %v4007 = vsub.f32 %v49, %v4006
    %4008 = vmatpush1.msra.mxu0 %v4007
    %4009 = vmatprep.subr.mxu0 0.0
    %v4010 = vand.u32 %v50, 4294901760
    %v4011 = vsub.f32 %v50, %v4010
    %4012 = vmatpush1.msra.mxu0 %v4011
    %4013 = vmatprep.subr.mxu0 0.0
    %4014 = vmatpush1.msra.mxu0 0.0
    %4015 = vmatprep.subr.mxu0 0.0
    %4016 = vmatpush1.msra.mxu0 0.0
    %4017 = vmatprep.subr.mxu0 0.0
    %4018 = vmatpush1.msra.mxu0 0.0
    %4019 = vmatprep.subr.mxu0 0.0
    %4020 = vmatpush1.msra.mxu0 0.0
    %4021 = vmatprep.subr.mxu0 0.0
    %4022 = vmatpush1.msra.mxu0 0.0
    %4023 = vmatprep.subr.mxu0 0.0
    %4024 = vmatpush1.msra.mxu0 0.0
    %4025 = vmatprep.subr.mxu0 0.0
    %4026 = vmatpush1.msra.mxu0 0.0
    %4027 = vmatprep.subr.mxu0 0.0
    %4028 = vmatpush1.msra.mxu0 0.0
    %4029 = vmatprep.subr.mxu0 0.0
    %4030 = vmatpush1.msra.mxu0 0.0
    %4031 = vmatprep.subr.mxu0 0.0
    %4032 = vmatpush1.msra.mxu0 0.0
    %4033 = vmatprep.subr.mxu0 0.0
    %4034 = vmatpush1.msra.mxu0 0.0
    %4035 = vmatprep.subr.mxu0 0.0
    %4036 = vmatpush1.msra.mxu0 0.0
    %4037 = vmatprep.subr.mxu0 0.0
    %4038 = vmatpush1.msra.mxu0 0.0
    %4039 = vmatprep.subr.mxu0 0.0
    %4040 = vmatpush1.msra.mxu0 0.0
    %4041 = vmatprep.subr.mxu0 0.0
    %4042 = vmatpush1.msra.mxu0 0.0
    %4043 = vmatprep.subr.mxu0 0.0
    %4044 = vmatpush1.msra.mxu0 0.0
    %4045 = vmatprep.subr.mxu0 0.0
    %4046 = vmatpush1.msra.mxu0 0.0
    %4047 = vmatprep.subr.mxu0 0.0
    %4048 = vmatpush1.msra.mxu0 0.0
    %4049 = vmatprep.subr.mxu0 0.0
    %4050 = vmatpush1.msra.mxu0 0.0
    %4051 = vmatprep.subr.mxu0 0.0
    %4052 = vmatpush1.msra.mxu0 0.0
    %4053 = vmatprep.subr.mxu0 0.0
    %4054 = vmatpush1.msra.mxu0 0.0
    %4055 = vmatprep.subr.mxu0 0.0
    %4056 = vmatpush1.msra.mxu0 0.0
    %4057 = vmatprep.subr.mxu0 0.0
    %4058 = vmatpush1.msra.mxu0 0.0
    %4059 = vmatprep.subr.mxu0 0.0
    %4060 = vmatpush1.msra.mxu0 0.0
    %4061 = vmatprep.mubr.f32.mxu0 0.0
    %v4062 = vand.u32 %v3785, 4294901760
    %v4063 = vsub.f32 %v3785, %v4062
    %4064 = vmatmul.mubr.f32.gmra.mrb[0].mxu0 %v4063
    %v4065 = vpop.f32.mrb[0].mxu0
    %v4066 = vadd.f32 %v3978, %v4065
    %v4067 = vpop.f32.mrb[0].mxu0
    %4068 = vdwg.mxu0
    %4069 = vmatprep.subr.mxu0 0.0
    %v4070 = vand.u32 %v43, 4294901760
    %4071 = vmatpush1.msra.mxu0 %v4070
    %4072 = vmatprep.subr.mxu0 0.0
    %v4073 = vand.u32 %v44, 4294901760
    %4074 = vmatpush1.msra.mxu0 %v4073
    %4075 = vmatprep.subr.mxu0 0.0
    %v4076 = vand.u32 %v45, 4294901760
    %4077 = vmatpush1.msra.mxu0 %v4076
    %4078 = vmatprep.subr.mxu0 0.0
    %v4079 = vand.u32 %v46, 4294901760
    %4080 = vmatpush1.msra.mxu0 %v4079
    %4081 = vmatprep.subr.mxu0 0.0
    %v4082 = vand.u32 %v47, 4294901760
    %4083 = vmatpush1.msra.mxu0 %v4082
    %4084 = vmatprep.subr.mxu0 0.0
    %v4085 = vand.u32 %v48, 4294901760
    %4086 = vmatpush1.msra.mxu0 %v4085
    %4087 = vmatprep.subr.mxu0 0.0
    %v4088 = vand.u32 %v49, 4294901760
    %4089 = vmatpush1.msra.mxu0 %v4088
    %4090 = vmatprep.subr.mxu0 0.0
    %v4091 = vand.u32 %v50, 4294901760
    %4092 = vmatpush1.msra.mxu0 %v4091
    %4093 = vmatprep.subr.mxu0 0.0
    %4094 = vmatpush1.msra.mxu0 0.0
    %4095 = vmatprep.subr.mxu0 0.0
    %4096 = vmatpush1.msra.mxu0 0.0
    %4097 = vmatprep.subr.mxu0 0.0
    %4098 = vmatpush1.msra.mxu0 0.0
    %4099 = vmatprep.subr.mxu0 0.0
    %4100 = vmatpush1.msra.mxu0 0.0
    %4101 = vmatprep.subr.mxu0 0.0
    %4102 = vmatpush1.msra.mxu0 0.0
    %4103 = vmatprep.subr.mxu0 0.0
    %4104 = vmatpush1.msra.mxu0 0.0
    %4105 = vmatprep.subr.mxu0 0.0
    %4106 = vmatpush1.msra.mxu0 0.0
    %4107 = vmatprep.subr.mxu0 0.0
    %4108 = vmatpush1.msra.mxu0 0.0
    %4109 = vmatprep.subr.mxu0 0.0
    %4110 = vmatpush1.msra.mxu0 0.0
    %4111 = vmatprep.subr.mxu0 0.0
    %4112 = vmatpush1.msra.mxu0 0.0
    %4113 = vmatprep.subr.mxu0 0.0
    %4114 = vmatpush1.msra.mxu0 0.0
    %4115 = vmatprep.subr.mxu0 0.0
    %4116 = vmatpush1.msra.mxu0 0.0
    %4117 = vmatprep.subr.mxu0 0.0
    %4118 = vmatpush1.msra.mxu0 0.0
    %4119 = vmatprep.subr.mxu0 0.0
    %4120 = vmatpush1.msra.mxu0 0.0
    %4121 = vmatprep.subr.mxu0 0.0
    %4122 = vmatpush1.msra.mxu0 0.0
    %4123 = vmatprep.subr.mxu0 0.0
    %4124 = vmatpush1.msra.mxu0 0.0
    %4125 = vmatprep.subr.mxu0 0.0
    %4126 = vmatpush1.msra.mxu0 0.0
    %4127 = vmatprep.subr.mxu0 0.0
    %4128 = vmatpush1.msra.mxu0 0.0
    %4129 = vmatprep.subr.mxu0 0.0
    %4130 = vmatpush1.msra.mxu0 0.0
    %4131 = vmatprep.subr.mxu0 0.0
    %4132 = vmatpush1.msra.mxu0 0.0
    %4133 = vmatprep.subr.mxu0 0.0
    %4134 = vmatpush1.msra.mxu0 0.0
    %4135 = vmatprep.subr.mxu0 0.0
    %4136 = vmatpush1.msra.mxu0 0.0
    %4137 = vmatprep.subr.mxu0 0.0
    %4138 = vmatpush1.msra.mxu0 0.0
    %4139 = vmatprep.subr.mxu0 0.0
    %4140 = vmatpush1.msra.mxu0 0.0
    %4141 = vmatprep.mubr.f32.mxu0 0.0
    %v4142 = vand.u32 %v3785, 4294901760
    %v4143 = vsub.f32 %v3785, %v4142
    %v4144 = vand.u32 %v4143, 4294901760
    %4145 = vmatmul.mubr.f32.gmra.mrb[0].mxu0 %v4144
    %v4146 = vpop.f32.mrb[0].mxu0
    %v4147 = vadd.f32 %v4066, %v4146
    %v4148 = vpop.f32.mrb[0].mxu0
    %4149 = vdwg.mxu0
    %4150 = vmatprep.subr.mxu0 0.0
    %v4151 = vand.u32 %v43, 4294901760
    %v4152 = vsub.f32 %v43, %v4151
    %v4153 = vand.u32 %v4152, 4294901760
    %4154 = vmatpush1.msra.mxu0 %v4153
    %4155 = vmatprep.subr.mxu0 0.0
    %v4156 = vand.u32 %v44, 4294901760
    %v4157 = vsub.f32 %v44, %v4156
    %v4158 = vand.u32 %v4157, 4294901760
    %4159 = vmatpush1.msra.mxu0 %v4158
    %4160 = vmatprep.subr.mxu0 0.0
    %v4161 = vand.u32 %v45, 4294901760
    %v4162 = vsub.f32 %v45, %v4161
    %v4163 = vand.u32 %v4162, 4294901760
    %4164 = vmatpush1.msra.mxu0 %v4163
    %4165 = vmatprep.subr.mxu0 0.0
    %v4166 = vand.u32 %v46, 4294901760
    %v4167 = vsub.f32 %v46, %v4166
    %v4168 = vand.u32 %v4167, 4294901760
    %4169 = vmatpush1.msra.mxu0 %v4168
    %4170 = vmatprep.subr.mxu0 0.0
    %v4171 = vand.u32 %v47, 4294901760
    %v4172 = vsub.f32 %v47, %v4171
    %v4173 = vand.u32 %v4172, 4294901760
    %4174 = vmatpush1.msra.mxu0 %v4173
    %4175 = vmatprep.subr.mxu0 0.0
    %v4176 = vand.u32 %v48, 4294901760
    %v4177 = vsub.f32 %v48, %v4176
    %v4178 = vand.u32 %v4177, 4294901760
    %4179 = vmatpush1.msra.mxu0 %v4178
    %4180 = vmatprep.subr.mxu0 0.0
    %v4181 = vand.u32 %v49, 4294901760
    %v4182 = vsub.f32 %v49, %v4181
    %v4183 = vand.u32 %v4182, 4294901760
    %4184 = vmatpush1.msra.mxu0 %v4183
    %4185 = vmatprep.subr.mxu0 0.0
    %v4186 = vand.u32 %v50, 4294901760
    %v4187 = vsub.f32 %v50, %v4186
    %v4188 = vand.u32 %v4187, 4294901760
    %4189 = vmatpush1.msra.mxu0 %v4188
    %4190 = vmatprep.subr.mxu0 0.0
    %4191 = vmatpush1.msra.mxu0 0.0
    %4192 = vmatprep.subr.mxu0 0.0
    %4193 = vmatpush1.msra.mxu0 0.0
    %4194 = vmatprep.subr.mxu0 0.0
    %4195 = vmatpush1.msra.mxu0 0.0
    %4196 = vmatprep.subr.mxu0 0.0
    %4197 = vmatpush1.msra.mxu0 0.0
    %4198 = vmatprep.subr.mxu0 0.0
    %4199 = vmatpush1.msra.mxu0 0.0
    %4200 = vmatprep.subr.mxu0 0.0
    %4201 = vmatpush1.msra.mxu0 0.0
    %4202 = vmatprep.subr.mxu0 0.0
    %4203 = vmatpush1.msra.mxu0 0.0
    %4204 = vmatprep.subr.mxu0 0.0
    %4205 = vmatpush1.msra.mxu0 0.0
    %4206 = vmatprep.subr.mxu0 0.0
    %4207 = vmatpush1.msra.mxu0 0.0
    %4208 = vmatprep.subr.mxu0 0.0
    %4209 = vmatpush1.msra.mxu0 0.0
    %4210 = vmatprep.subr.mxu0 0.0
    %4211 = vmatpush1.msra.mxu0 0.0
    %4212 = vmatprep.subr.mxu0 0.0
    %4213 = vmatpush1.msra.mxu0 0.0
    %4214 = vmatprep.subr.mxu0 0.0
    %4215 = vmatpush1.msra.mxu0 0.0
    %4216 = vmatprep.subr.mxu0 0.0
    %4217 = vmatpush1.msra.mxu0 0.0
    %4218 = vmatprep.subr.mxu0 0.0
    %4219 = vmatpush1.msra.mxu0 0.0
    %4220 = vmatprep.subr.mxu0 0.0
    %4221 = vmatpush1.msra.mxu0 0.0
    %4222 = vmatprep.subr.mxu0 0.0
    %4223 = vmatpush1.msra.mxu0 0.0
    %4224 = vmatprep.subr.mxu0 0.0
    %4225 = vmatpush1.msra.mxu0 0.0
    %4226 = vmatprep.subr.mxu0 0.0
    %4227 = vmatpush1.msra.mxu0 0.0
    %4228 = vmatprep.subr.mxu0 0.0
    %4229 = vmatpush1.msra.mxu0 0.0
    %4230 = vmatprep.subr.mxu0 0.0
    %4231 = vmatpush1.msra.mxu0 0.0
    %4232 = vmatprep.subr.mxu0 0.0
    %4233 = vmatpush1.msra.mxu0 0.0
    %4234 = vmatprep.subr.mxu0 0.0
    %4235 = vmatpush1.msra.mxu0 0.0
    %4236 = vmatprep.subr.mxu0 0.0
    %4237 = vmatpush1.msra.mxu0 0.0
    %4238 = vmatprep.mubr.f32.mxu0 0.0
    %v4239 = vand.u32 %v3785, 4294901760
    %4240 = vmatmul.mubr.f32.gmra.mrb[0].mxu0 %v4239
    %v4241 = vpop.f32.mrb[0].mxu0
    %v4242 = vadd.f32 %v4147, %v4241
    %v4243 = vpop.f32.mrb[0].mxu0
    %4244 = vdwg.mxu0
    %4245 = vmatprep.subr.mxu0 0.0
    %v4246 = vand.u32 %v43, 4294901760
    %4247 = vmatpush1.msra.mxu0 %v4246
    %4248 = vmatprep.subr.mxu0 0.0
    %v4249 = vand.u32 %v44, 4294901760
    %4250 = vmatpush1.msra.mxu0 %v4249
    %4251 = vmatprep.subr.mxu0 0.0
    %v4252 = vand.u32 %v45, 4294901760
    %4253 = vmatpush1.msra.mxu0 %v4252
    %4254 = vmatprep.subr.mxu0 0.0
    %v4255 = vand.u32 %v46, 4294901760
    %4256 = vmatpush1.msra.mxu0 %v4255
    %4257 = vmatprep.subr.mxu0 0.0
    %v4258 = vand.u32 %v47, 4294901760
    %4259 = vmatpush1.msra.mxu0 %v4258
    %4260 = vmatprep.subr.mxu0 0.0
    %v4261 = vand.u32 %v48, 4294901760
    %4262 = vmatpush1.msra.mxu0 %v4261
    %4263 = vmatprep.subr.mxu0 0.0
    %v4264 = vand.u32 %v49, 4294901760
    %4265 = vmatpush1.msra.mxu0 %v4264
    %4266 = vmatprep.subr.mxu0 0.0
    %v4267 = vand.u32 %v50, 4294901760
    %4268 = vmatpush1.msra.mxu0 %v4267
    %4269 = vmatprep.subr.mxu0 0.0
    %4270 = vmatpush1.msra.mxu0 0.0
    %4271 = vmatprep.subr.mxu0 0.0
    %4272 = vmatpush1.msra.mxu0 0.0
    %4273 = vmatprep.subr.mxu0 0.0
    %4274 = vmatpush1.msra.mxu0 0.0
    %4275 = vmatprep.subr.mxu0 0.0
    %4276 = vmatpush1.msra.mxu0 0.0
    %4277 = vmatprep.subr.mxu0 0.0
    %4278 = vmatpush1.msra.mxu0 0.0
    %4279 = vmatprep.subr.mxu0 0.0
    %4280 = vmatpush1.msra.mxu0 0.0
    %4281 = vmatprep.subr.mxu0 0.0
    %4282 = vmatpush1.msra.mxu0 0.0
    %4283 = vmatprep.subr.mxu0 0.0
    %4284 = vmatpush1.msra.mxu0 0.0
    %4285 = vmatprep.subr.mxu0 0.0
    %4286 = vmatpush1.msra.mxu0 0.0
    %4287 = vmatprep.subr.mxu0 0.0
    %4288 = vmatpush1.msra.mxu0 0.0
    %4289 = vmatprep.subr.mxu0 0.0
    %4290 = vmatpush1.msra.mxu0 0.0
    %4291 = vmatprep.subr.mxu0 0.0
    %4292 = vmatpush1.msra.mxu0 0.0
    %4293 = vmatprep.subr.mxu0 0.0
    %4294 = vmatpush1.msra.mxu0 0.0
    %4295 = vmatprep.subr.mxu0 0.0
    %4296 = vmatpush1.msra.mxu0 0.0
    %4297 = vmatprep.subr.mxu0 0.0
    %4298 = vmatpush1.msra.mxu0 0.0
    %4299 = vmatprep.subr.mxu0 0.0
    %4300 = vmatpush1.msra.mxu0 0.0
    %4301 = vmatprep.subr.mxu0 0.0
    %4302 = vmatpush1.msra.mxu0 0.0
    %4303 = vmatprep.subr.mxu0 0.0
    %4304 = vmatpush1.msra.mxu0 0.0
    %4305 = vmatprep.subr.mxu0 0.0
    %4306 = vmatpush1.msra.mxu0 0.0
    %4307 = vmatprep.subr.mxu0 0.0
    %4308 = vmatpush1.msra.mxu0 0.0
    %4309 = vmatprep.subr.mxu0 0.0
    %4310 = vmatpush1.msra.mxu0 0.0
    %4311 = vmatprep.subr.mxu0 0.0
    %4312 = vmatpush1.msra.mxu0 0.0
    %4313 = vmatprep.subr.mxu0 0.0
    %4314 = vmatpush1.msra.mxu0 0.0
    %4315 = vmatprep.subr.mxu0 0.0
    %4316 = vmatpush1.msra.mxu0 0.0
    %4317 = vmatprep.mubr.f32.mxu0 0.0
    %v4318 = vand.u32 %v3785, 4294901760
    %4319 = vmatmul.mubr.f32.gmra.mrb[0].mxu0 %v4318
    %v4320 = vpop.f32.mrb[0].mxu0
    %v4321 = vadd.f32 %v4242, %v4320
    %v4322 = vpop.f32.mrb[0].mxu0
    %4323 = vdwg.mxu0
    %v4324 = vsel %vm3784, %v30, 0
    %4326 = vmatprep.subr.mxu0 0.0
    %v4327 = vand.u32 %v43, 4294901760
    %4328 = vmatpush1.msra.mxu0 %v4327
    %4329 = vmatprep.subr.mxu0 0.0
    %v4330 = vand.u32 %v44, 4294901760
    %4331 = vmatpush1.msra.mxu0 %v4330
    %4332 = vmatprep.subr.mxu0 0.0
    %v4333 = vand.u32 %v45, 4294901760
    %4334 = vmatpush1.msra.mxu0 %v4333
    %4335 = vmatprep.subr.mxu0 0.0
    %v4336 = vand.u32 %v46, 4294901760
    %4337 = vmatpush1.msra.mxu0 %v4336
    %4338 = vmatprep.subr.mxu0 0.0
    %v4339 = vand.u32 %v47, 4294901760
    %4340 = vmatpush1.msra.mxu0 %v4339
    %4341 = vmatprep.subr.mxu0 0.0
    %v4342 = vand.u32 %v48, 4294901760
    %4343 = vmatpush1.msra.mxu0 %v4342
    %4344 = vmatprep.subr.mxu0 0.0
    %v4345 = vand.u32 %v49, 4294901760
    %4346 = vmatpush1.msra.mxu0 %v4345
    %4347 = vmatprep.subr.mxu0 0.0
    %v4348 = vand.u32 %v50, 4294901760
    %4349 = vmatpush1.msra.mxu0 %v4348
    %4350 = vmatprep.subr.mxu0 0.0
    %4351 = vmatpush1.msra.mxu0 0.0
    %4352 = vmatprep.subr.mxu0 0.0
    %4353 = vmatpush1.msra.mxu0 0.0
    %4354 = vmatprep.subr.mxu0 0.0
    %4355 = vmatpush1.msra.mxu0 0.0
    %4356 = vmatprep.subr.mxu0 0.0
    %4357 = vmatpush1.msra.mxu0 0.0
    %4358 = vmatprep.subr.mxu0 0.0
    %4359 = vmatpush1.msra.mxu0 0.0
    %4360 = vmatprep.subr.mxu0 0.0
    %4361 = vmatpush1.msra.mxu0 0.0
    %4362 = vmatprep.subr.mxu0 0.0
    %4363 = vmatpush1.msra.mxu0 0.0
    %4364 = vmatprep.subr.mxu0 0.0
    %4365 = vmatpush1.msra.mxu0 0.0
    %4366 = vmatprep.subr.mxu0 0.0
    %4367 = vmatpush1.msra.mxu0 0.0
    %4368 = vmatprep.subr.mxu0 0.0
    %4369 = vmatpush1.msra.mxu0 0.0
    %4370 = vmatprep.subr.mxu0 0.0
    %4371 = vmatpush1.msra.mxu0 0.0
    %4372 = vmatprep.subr.mxu0 0.0
    %4373 = vmatpush1.msra.mxu0 0.0
    %4374 = vmatprep.subr.mxu0 0.0
    %4375 = vmatpush1.msra.mxu0 0.0
    %4376 = vmatprep.subr.mxu0 0.0
    %4377 = vmatpush1.msra.mxu0 0.0
    %4378 = vmatprep.subr.mxu0 0.0
    %4379 = vmatpush1.msra.mxu0 0.0
    %4380 = vmatprep.subr.mxu0 0.0
    %4381 = vmatpush1.msra.mxu0 0.0
    %4382 = vmatprep.subr.mxu0 0.0
    %4383 = vmatpush1.msra.mxu0 0.0
    %4384 = vmatprep.subr.mxu0 0.0
    %4385 = vmatpush1.msra.mxu0 0.0
    %4386 = vmatprep.subr.mxu0 0.0
    %4387 = vmatpush1.msra.mxu0 0.0
    %4388 = vmatprep.subr.mxu0 0.0
    %4389 = vmatpush1.msra.mxu0 0.0
    %4390 = vmatprep.subr.mxu0 0.0
    %4391 = vmatpush1.msra.mxu0 0.0
    %4392 = vmatprep.subr.mxu0 0.0
    %4393 = vmatpush1.msra.mxu0 0.0
    %4394 = vmatprep.subr.mxu0 0.0
    %4395 = vmatpush1.msra.mxu0 0.0
    %4396 = vmatprep.subr.mxu0 0.0
    %4397 = vmatpush1.msra.mxu0 0.0
    %4398 = vmatprep.mubr.f32.mxu0 0.0
    %v4399 = vand.u32 %v4324, 4294901760
    %v4400 = vsub.f32 %v4324, %v4399
    %v4401 = vand.u32 %v4400, 4294901760
    %v4402 = vsub.f32 %v4400, %v4401
    %v4403 = vand.u32 %v4402, 4294901760
    %4404 = vmatmul.mubr.f32.gmra.mrb[0].mxu0 %v4403
    %v4405 = vpop.f32.mrb[0].mxu0
    %v4406 = vadd.f32 0.0, %v4405
    %v4407 = vpop.f32.mrb[0].mxu0
    %4408 = vdwg.mxu0
    %4409 = vmatprep.subr.mxu0 0.0
    %v4410 = vand.u32 %v43, 4294901760
    %v4411 = vsub.f32 %v43, %v4410
    %v4412 = vand.u32 %v4411, 4294901760
    %v4413 = vsub.f32 %v4411, %v4412
    %v4414 = vand.u32 %v4413, 4294901760
    %4415 = vmatpush1.msra.mxu0 %v4414
    %4416 = vmatprep.subr.mxu0 0.0
    %v4417 = vand.u32 %v44, 4294901760
    %v4418 = vsub.f32 %v44, %v4417
    %v4419 = vand.u32 %v4418, 4294901760
    %v4420 = vsub.f32 %v4418, %v4419
    %v4421 = vand.u32 %v4420, 4294901760
    %4422 = vmatpush1.msra.mxu0 %v4421
    %4423 = vmatprep.subr.mxu0 0.0
    %v4424 = vand.u32 %v45, 4294901760
    %v4425 = vsub.f32 %v45, %v4424
    %v4426 = vand.u32 %v4425, 4294901760
    %v4427 = vsub.f32 %v4425, %v4426
    %v4428 = vand.u32 %v4427, 4294901760
    %4429 = vmatpush1.msra.mxu0 %v4428
    %4430 = vmatprep.subr.mxu0 0.0
    %v4431 = vand.u32 %v46, 4294901760
    %v4432 = vsub.f32 %v46, %v4431
    %v4433 = vand.u32 %v4432, 4294901760
    %v4434 = vsub.f32 %v4432, %v4433
    %v4435 = vand.u32 %v4434, 4294901760
    %4436 = vmatpush1.msra.mxu0 %v4435
    %4437 = vmatprep.subr.mxu0 0.0
    %v4438 = vand.u32 %v47, 4294901760
    %v4439 = vsub.f32 %v47, %v4438
    %v4440 = vand.u32 %v4439, 4294901760
    %v4441 = vsub.f32 %v4439, %v4440
    %v4442 = vand.u32 %v4441, 4294901760
    %4443 = vmatpush1.msra.mxu0 %v4442
    %4444 = vmatprep.subr.mxu0 0.0
    %v4445 = vand.u32 %v48, 4294901760
    %v4446 = vsub.f32 %v48, %v4445
    %v4447 = vand.u32 %v4446, 4294901760
    %v4448 = vsub.f32 %v4446, %v4447
    %v4449 = vand.u32 %v4448, 4294901760
    %4450 = vmatpush1.msra.mxu0 %v4449
    %4451 = vmatprep.subr.mxu0 0.0
    %v4452 = vand.u32 %v49, 4294901760
    %v4453 = vsub.f32 %v49, %v4452
    %v4454 = vand.u32 %v4453, 4294901760
    %v4455 = vsub.f32 %v4453, %v4454
    %v4456 = vand.u32 %v4455, 4294901760
    %4457 = vmatpush1.msra.mxu0 %v4456
    %4458 = vmatprep.subr.mxu0 0.0
    %v4459 = vand.u32 %v50, 4294901760
    %v4460 = vsub.f32 %v50, %v4459
    %v4461 = vand.u32 %v4460, 4294901760
    %v4462 = vsub.f32 %v4460, %v4461
    %v4463 = vand.u32 %v4462, 4294901760
    %4464 = vmatpush1.msra.mxu0 %v4463
    %4465 = vmatprep.subr.mxu0 0.0
    %4466 = vmatpush1.msra.mxu0 0.0
    %4467 = vmatprep.subr.mxu0 0.0
    %4468 = vmatpush1.msra.mxu0 0.0
    %4469 = vmatprep.subr.mxu0 0.0
    %4470 = vmatpush1.msra.mxu0 0.0
    %4471 = vmatprep.subr.mxu0 0.0
    %4472 = vmatpush1.msra.mxu0 0.0
    %4473 = vmatprep.subr.mxu0 0.0
    %4474 = vmatpush1.msra.mxu0 0.0
    %4475 = vmatprep.subr.mxu0 0.0
    %4476 = vmatpush1.msra.mxu0 0.0
    %4477 = vmatprep.subr.mxu0 0.0
    %4478 = vmatpush1.msra.mxu0 0.0
    %4479 = vmatprep.subr.mxu0 0.0
    %4480 = vmatpush1.msra.mxu0 0.0
    %4481 = vmatprep.subr.mxu0 0.0
    %4482 = vmatpush1.msra.mxu0 0.0
    %4483 = vmatprep.subr.mxu0 0.0
    %4484 = vmatpush1.msra.mxu0 0.0
    %4485 = vmatprep.subr.mxu0 0.0
    %4486 = vmatpush1.msra.mxu0 0.0
    %4487 = vmatprep.subr.mxu0 0.0
    %4488 = vmatpush1.msra.mxu0 0.0
    %4489 = vmatprep.subr.mxu0 0.0
    %4490 = vmatpush1.msra.mxu0 0.0
    %4491 = vmatprep.subr.mxu0 0.0
    %4492 = vmatpush1.msra.mxu0 0.0
    %4493 = vmatprep.subr.mxu0 0.0
    %4494 = vmatpush1.msra.mxu0 0.0
    %4495 = vmatprep.subr.mxu0 0.0
    %4496 = vmatpush1.msra.mxu0 0.0
    %4497 = vmatprep.subr.mxu0 0.0
    %4498 = vmatpush1.msra.mxu0 0.0
    %4499 = vmatprep.subr.mxu0 0.0
    %4500 = vmatpush1.msra.mxu0 0.0
    %4501 = vmatprep.subr.mxu0 0.0
    %4502 = vmatpush1.msra.mxu0 0.0
    %4503 = vmatprep.subr.mxu0 0.0
    %4504 = vmatpush1.msra.mxu0 0.0
    %4505 = vmatprep.subr.mxu0 0.0
    %4506 = vmatpush1.msra.mxu0 0.0
    %4507 = vmatprep.subr.mxu0 0.0
    %4508 = vmatpush1.msra.mxu0 0.0
    %4509 = vmatprep.subr.mxu0 0.0
    %4510 = vmatpush1.msra.mxu0 0.0
    %4511 = vmatprep.subr.mxu0 0.0
    %4512 = vmatpush1.msra.mxu0 0.0
    %4513 = vmatprep.mubr.f32.mxu0 0.0
    %v4514 = vand.u32 %v4324, 4294901760
    %4515 = vmatmul.mubr.f32.gmra.mrb[0].mxu0 %v4514
    %v4516 = vpop.f32.mrb[0].mxu0
    %v4517 = vadd.f32 %v4406, %v4516
    %v4518 = vpop.f32.mrb[0].mxu0
    %4519 = vdwg.mxu0
    %4520 = vmatprep.subr.mxu0 0.0
    %v4521 = vand.u32 %v43, 4294901760
    %v4522 = vsub.f32 %v43, %v4521
    %4523 = vmatpush1.msra.mxu0 %v4522
    %4524 = vmatprep.subr.mxu0 0.0
    %v4525 = vand.u32 %v44, 4294901760
    %v4526 = vsub.f32 %v44, %v4525
    %4527 = vmatpush1.msra.mxu0 %v4526
    %4528 = vmatprep.subr.mxu0 0.0
    %v4529 = vand.u32 %v45, 4294901760
    %v4530 = vsub.f32 %v45, %v4529
    %4531 = vmatpush1.msra.mxu0 %v4530
    %4532 = vmatprep.subr.mxu0 0.0
    %v4533 = vand.u32 %v46, 4294901760
    %v4534 = vsub.f32 %v46, %v4533
    %4535 = vmatpush1.msra.mxu0 %v4534
    %4536 = vmatprep.subr.mxu0 0.0
    %v4537 = vand.u32 %v47, 4294901760
    %v4538 = vsub.f32 %v47, %v4537
    %4539 = vmatpush1.msra.mxu0 %v4538
    %4540 = vmatprep.subr.mxu0 0.0
    %v4541 = vand.u32 %v48, 4294901760
    %v4542 = vsub.f32 %v48, %v4541
    %4543 = vmatpush1.msra.mxu0 %v4542
    %4544 = vmatprep.subr.mxu0 0.0
    %v4545 = vand.u32 %v49, 4294901760
    %v4546 = vsub.f32 %v49, %v4545
    %4547 = vmatpush1.msra.mxu0 %v4546
    %4548 = vmatprep.subr.mxu0 0.0
    %v4549 = vand.u32 %v50, 4294901760
    %v4550 = vsub.f32 %v50, %v4549
    %4551 = vmatpush1.msra.mxu0 %v4550
    %4552 = vmatprep.subr.mxu0 0.0
    %4553 = vmatpush1.msra.mxu0 0.0
    %4554 = vmatprep.subr.mxu0 0.0
    %4555 = vmatpush1.msra.mxu0 0.0
    %4556 = vmatprep.subr.mxu0 0.0
    %4557 = vmatpush1.msra.mxu0 0.0
    %4558 = vmatprep.subr.mxu0 0.0
    %4559 = vmatpush1.msra.mxu0 0.0
    %4560 = vmatprep.subr.mxu0 0.0
    %4561 = vmatpush1.msra.mxu0 0.0
    %4562 = vmatprep.subr.mxu0 0.0
    %4563 = vmatpush1.msra.mxu0 0.0
    %4564 = vmatprep.subr.mxu0 0.0
    %4565 = vmatpush1.msra.mxu0 0.0
    %4566 = vmatprep.subr.mxu0 0.0
    %4567 = vmatpush1.msra.mxu0 0.0
    %4568 = vmatprep.subr.mxu0 0.0
    %4569 = vmatpush1.msra.mxu0 0.0
    %4570 = vmatprep.subr.mxu0 0.0
    %4571 = vmatpush1.msra.mxu0 0.0
    %4572 = vmatprep.subr.mxu0 0.0
    %4573 = vmatpush1.msra.mxu0 0.0
    %4574 = vmatprep.subr.mxu0 0.0
    %4575 = vmatpush1.msra.mxu0 0.0
    %4576 = vmatprep.subr.mxu0 0.0
    %4577 = vmatpush1.msra.mxu0 0.0
    %4578 = vmatprep.subr.mxu0 0.0
    %4579 = vmatpush1.msra.mxu0 0.0
    %4580 = vmatprep.subr.mxu0 0.0
    %4581 = vmatpush1.msra.mxu0 0.0
    %4582 = vmatprep.subr.mxu0 0.0
    %4583 = vmatpush1.msra.mxu0 0.0
    %4584 = vmatprep.subr.mxu0 0.0
    %4585 = vmatpush1.msra.mxu0 0.0
    %4586 = vmatprep.subr.mxu0 0.0
    %4587 = vmatpush1.msra.mxu0 0.0
    %4588 = vmatprep.subr.mxu0 0.0
    %4589 = vmatpush1.msra.mxu0 0.0
    %4590 = vmatprep.subr.mxu0 0.0
    %4591 = vmatpush1.msra.mxu0 0.0
    %4592 = vmatprep.subr.mxu0 0.0
    %4593 = vmatpush1.msra.mxu0 0.0
    %4594 = vmatprep.subr.mxu0 0.0
    %4595 = vmatpush1.msra.mxu0 0.0
    %4596 = vmatprep.subr.mxu0 0.0
    %4597 = vmatpush1.msra.mxu0 0.0
    %4598 = vmatprep.subr.mxu0 0.0
    %4599 = vmatpush1.msra.mxu0 0.0
    %4600 = vmatprep.mubr.f32.mxu0 0.0
    %v4601 = vand.u32 %v4324, 4294901760
    %v4602 = vsub.f32 %v4324, %v4601
    %4603 = vmatmul.mubr.f32.gmra.mrb[0].mxu0 %v4602
    %v4604 = vpop.f32.mrb[0].mxu0
    %v4605 = vadd.f32 %v4517, %v4604
    %v4606 = vpop.f32.mrb[0].mxu0
    %4607 = vdwg.mxu0
    %4608 = vmatprep.subr.mxu0 0.0
    %v4609 = vand.u32 %v43, 4294901760
    %4610 = vmatpush1.msra.mxu0 %v4609
    %4611 = vmatprep.subr.mxu0 0.0
    %v4612 = vand.u32 %v44, 4294901760
    %4613 = vmatpush1.msra.mxu0 %v4612
    %4614 = vmatprep.subr.mxu0 0.0
    %v4615 = vand.u32 %v45, 4294901760
    %4616 = vmatpush1.msra.mxu0 %v4615
    %4617 = vmatprep.subr.mxu0 0.0
    %v4618 = vand.u32 %v46, 4294901760
    %4619 = vmatpush1.msra.mxu0 %v4618
    %4620 = vmatprep.subr.mxu0 0.0
    %v4621 = vand.u32 %v47, 4294901760
    %4622 = vmatpush1.msra.mxu0 %v4621
    %4623 = vmatprep.subr.mxu0 0.0
    %v4624 = vand.u32 %v48, 4294901760
    %4625 = vmatpush1.msra.mxu0 %v4624
    %4626 = vmatprep.subr.mxu0 0.0
    %v4627 = vand.u32 %v49, 4294901760
    %4628 = vmatpush1.msra.mxu0 %v4627
    %4629 = vmatprep.subr.mxu0 0.0
    %v4630 = vand.u32 %v50, 4294901760
    %4631 = vmatpush1.msra.mxu0 %v4630
    %4632 = vmatprep.subr.mxu0 0.0
    %4633 = vmatpush1.msra.mxu0 0.0
    %4634 = vmatprep.subr.mxu0 0.0
    %4635 = vmatpush1.msra.mxu0 0.0
    %4636 = vmatprep.subr.mxu0 0.0
    %4637 = vmatpush1.msra.mxu0 0.0
    %4638 = vmatprep.subr.mxu0 0.0
    %4639 = vmatpush1.msra.mxu0 0.0
    %4640 = vmatprep.subr.mxu0 0.0
    %4641 = vmatpush1.msra.mxu0 0.0
    %4642 = vmatprep.subr.mxu0 0.0
    %4643 = vmatpush1.msra.mxu0 0.0
    %4644 = vmatprep.subr.mxu0 0.0
    %4645 = vmatpush1.msra.mxu0 0.0
    %4646 = vmatprep.subr.mxu0 0.0
    %4647 = vmatpush1.msra.mxu0 0.0
    %4648 = vmatprep.subr.mxu0 0.0
    %4649 = vmatpush1.msra.mxu0 0.0
    %4650 = vmatprep.subr.mxu0 0.0
    %4651 = vmatpush1.msra.mxu0 0.0
    %4652 = vmatprep.subr.mxu0 0.0
    %4653 = vmatpush1.msra.mxu0 0.0
    %4654 = vmatprep.subr.mxu0 0.0
    %4655 = vmatpush1.msra.mxu0 0.0
    %4656 = vmatprep.subr.mxu0 0.0
    %4657 = vmatpush1.msra.mxu0 0.0
    %4658 = vmatprep.subr.mxu0 0.0
    %4659 = vmatpush1.msra.mxu0 0.0
    %4660 = vmatprep.subr.mxu0 0.0
    %4661 = vmatpush1.msra.mxu0 0.0
    %4662 = vmatprep.subr.mxu0 0.0
    %4663 = vmatpush1.msra.mxu0 0.0
    %4664 = vmatprep.subr.mxu0 0.0
    %4665 = vmatpush1.msra.mxu0 0.0
    %4666 = vmatprep.subr.mxu0 0.0
    %4667 = vmatpush1.msra.mxu0 0.0
    %4668 = vmatprep.subr.mxu0 0.0
    %4669 = vmatpush1.msra.mxu0 0.0
    %4670 = vmatprep.subr.mxu0 0.0
    %4671 = vmatpush1.msra.mxu0 0.0
    %4672 = vmatprep.subr.mxu0 0.0
    %4673 = vmatpush1.msra.mxu0 0.0
    %4674 = vmatprep.subr.mxu0 0.0
    %4675 = vmatpush1.msra.mxu0 0.0
    %4676 = vmatprep.subr.mxu0 0.0
    %4677 = vmatpush1.msra.mxu0 0.0
    %4678 = vmatprep.subr.mxu0 0.0
    %4679 = vmatpush1.msra.mxu0 0.0
    %4680 = vmatprep.mubr.f32.mxu0 0.0
    %v4681 = vand.u32 %v4324, 4294901760
    %v4682 = vsub.f32 %v4324, %v4681
    %v4683 = vand.u32 %v4682, 4294901760
    %4684 = vmatmul.mubr.f32.gmra.mrb[0].mxu0 %v4683
    %v4685 = vpop.f32.mrb[0].mxu0
    %v4686 = vadd.f32 %v4605, %v4685
    %v4687 = vpop.f32.mrb[0].mxu0
    %4688 = vdwg.mxu0
    %4689 = vmatprep.subr.mxu0 0.0
    %v4690 = vand.u32 %v43, 4294901760
    %v4691 = vsub.f32 %v43, %v4690
    %v4692 = vand.u32 %v4691, 4294901760
    %4693 = vmatpush1.msra.mxu0 %v4692
    %4694 = vmatprep.subr.mxu0 0.0
    %v4695 = vand.u32 %v44, 4294901760
    %v4696 = vsub.f32 %v44, %v4695
    %v4697 = vand.u32 %v4696, 4294901760
    %4698 = vmatpush1.msra.mxu0 %v4697
    %4699 = vmatprep.subr.mxu0 0.0
    %v4700 = vand.u32 %v45, 4294901760
    %v4701 = vsub.f32 %v45, %v4700
    %v4702 = vand.u32 %v4701, 4294901760
    %4703 = vmatpush1.msra.mxu0 %v4702
    %4704 = vmatprep.subr.mxu0 0.0
    %v4705 = vand.u32 %v46, 4294901760
    %v4706 = vsub.f32 %v46, %v4705
    %v4707 = vand.u32 %v4706, 4294901760
    %4708 = vmatpush1.msra.mxu0 %v4707
    %4709 = vmatprep.subr.mxu0 0.0
    %v4710 = vand.u32 %v47, 4294901760
    %v4711 = vsub.f32 %v47, %v4710
    %v4712 = vand.u32 %v4711, 4294901760
    %4713 = vmatpush1.msra.mxu0 %v4712
    %4714 = vmatprep.subr.mxu0 0.0
    %v4715 = vand.u32 %v48, 4294901760
    %v4716 = vsub.f32 %v48, %v4715
    %v4717 = vand.u32 %v4716, 4294901760
    %4718 = vmatpush1.msra.mxu0 %v4717
    %4719 = vmatprep.subr.mxu0 0.0
    %v4720 = vand.u32 %v49, 4294901760
    %v4721 = vsub.f32 %v49, %v4720
    %v4722 = vand.u32 %v4721, 4294901760
    %4723 = vmatpush1.msra.mxu0 %v4722
    %4724 = vmatprep.subr.mxu0 0.0
    %v4725 = vand.u32 %v50, 4294901760
    %v4726 = vsub.f32 %v50, %v4725
    %v4727 = vand.u32 %v4726, 4294901760
    %4728 = vmatpush1.msra.mxu0 %v4727
    %4729 = vmatprep.subr.mxu0 0.0
    %4730 = vmatpush1.msra.mxu0 0.0
    %4731 = vmatprep.subr.mxu0 0.0
    %4732 = vmatpush1.msra.mxu0 0.0
    %4733 = vmatprep.subr.mxu0 0.0
    %4734 = vmatpush1.msra.mxu0 0.0
    %4735 = vmatprep.subr.mxu0 0.0
    %4736 = vmatpush1.msra.mxu0 0.0
    %4737 = vmatprep.subr.mxu0 0.0
    %4738 = vmatpush1.msra.mxu0 0.0
    %4739 = vmatprep.subr.mxu0 0.0
    %4740 = vmatpush1.msra.mxu0 0.0
    %4741 = vmatprep.subr.mxu0 0.0
    %4742 = vmatpush1.msra.mxu0 0.0
    %4743 = vmatprep.subr.mxu0 0.0
    %4744 = vmatpush1.msra.mxu0 0.0
    %4745 = vmatprep.subr.mxu0 0.0
    %4746 = vmatpush1.msra.mxu0 0.0
    %4747 = vmatprep.subr.mxu0 0.0
    %4748 = vmatpush1.msra.mxu0 0.0
    %4749 = vmatprep.subr.mxu0 0.0
    %4750 = vmatpush1.msra.mxu0 0.0
    %4751 = vmatprep.subr.mxu0 0.0
    %4752 = vmatpush1.msra.mxu0 0.0
    %4753 = vmatprep.subr.mxu0 0.0
    %4754 = vmatpush1.msra.mxu0 0.0
    %4755 = vmatprep.subr.mxu0 0.0
    %4756 = vmatpush1.msra.mxu0 0.0
    %4757 = vmatprep.subr.mxu0 0.0
    %4758 = vmatpush1.msra.mxu0 0.0
    %4759 = vmatprep.subr.mxu0 0.0
    %4760 = vmatpush1.msra.mxu0 0.0
    %4761 = vmatprep.subr.mxu0 0.0
    %4762 = vmatpush1.msra.mxu0 0.0
    %4763 = vmatprep.subr.mxu0 0.0
    %4764 = vmatpush1.msra.mxu0 0.0
    %4765 = vmatprep.subr.mxu0 0.0
    %4766 = vmatpush1.msra.mxu0 0.0
    %4767 = vmatprep.subr.mxu0 0.0
    %4768 = vmatpush1.msra.mxu0 0.0
    %4769 = vmatprep.subr.mxu0 0.0
    %4770 = vmatpush1.msra.mxu0 0.0
    %4771 = vmatprep.subr.mxu0 0.0
    %4772 = vmatpush1.msra.mxu0 0.0
    %4773 = vmatprep.subr.mxu0 0.0
    %4774 = vmatpush1.msra.mxu0 0.0
    %4775 = vmatprep.subr.mxu0 0.0
    %4776 = vmatpush1.msra.mxu0 0.0
    %4777 = vmatprep.mubr.f32.mxu0 0.0
    %v4778 = vand.u32 %v4324, 4294901760
    %4779 = vmatmul.mubr.f32.gmra.mrb[0].mxu0 %v4778
    %v4780 = vpop.f32.mrb[0].mxu0
    %v4781 = vadd.f32 %v4686, %v4780
    %v4782 = vpop.f32.mrb[0].mxu0
    %4783 = vdwg.mxu0
    %4784 = vmatprep.subr.mxu0 0.0
    %v4785 = vand.u32 %v43, 4294901760
    %4786 = vmatpush1.msra.mxu0 %v4785
    %4787 = vmatprep.subr.mxu0 0.0
    %v4788 = vand.u32 %v44, 4294901760
    %4789 = vmatpush1.msra.mxu0 %v4788
    %4790 = vmatprep.subr.mxu0 0.0
    %v4791 = vand.u32 %v45, 4294901760
    %4792 = vmatpush1.msra.mxu0 %v4791
    %4793 = vmatprep.subr.mxu0 0.0
    %v4794 = vand.u32 %v46, 4294901760
    %4795 = vmatpush1.msra.mxu0 %v4794
    %4796 = vmatprep.subr.mxu0 0.0
    %v4797 = vand.u32 %v47, 4294901760
    %4798 = vmatpush1.msra.mxu0 %v4797
    %4799 = vmatprep.subr.mxu0 0.0
    %v4800 = vand.u32 %v48, 4294901760
    %4801 = vmatpush1.msra.mxu0 %v4800
    %4802 = vmatprep.subr.mxu0 0.0
    %v4803 = vand.u32 %v49, 4294901760
    %4804 = vmatpush1.msra.mxu0 %v4803
    %4805 = vmatprep.subr.mxu0 0.0
    %v4806 = vand.u32 %v50, 4294901760
    %4807 = vmatpush1.msra.mxu0 %v4806
    %4808 = vmatprep.subr.mxu0 0.0
    %4809 = vmatpush1.msra.mxu0 0.0
    %4810 = vmatprep.subr.mxu0 0.0
    %4811 = vmatpush1.msra.mxu0 0.0
    %4812 = vmatprep.subr.mxu0 0.0
    %4813 = vmatpush1.msra.mxu0 0.0
    %4814 = vmatprep.subr.mxu0 0.0
    %4815 = vmatpush1.msra.mxu0 0.0
    %4816 = vmatprep.subr.mxu0 0.0
    %4817 = vmatpush1.msra.mxu0 0.0
    %4818 = vmatprep.subr.mxu0 0.0
    %4819 = vmatpush1.msra.mxu0 0.0
    %4820 = vmatprep.subr.mxu0 0.0
    %4821 = vmatpush1.msra.mxu0 0.0
    %4822 = vmatprep.subr.mxu0 0.0
    %4823 = vmatpush1.msra.mxu0 0.0
    %4824 = vmatprep.subr.mxu0 0.0
    %4825 = vmatpush1.msra.mxu0 0.0
    %4826 = vmatprep.subr.mxu0 0.0
    %4827 = vmatpush1.msra.mxu0 0.0
    %4828 = vmatprep.subr.mxu0 0.0
    %4829 = vmatpush1.msra.mxu0 0.0
    %4830 = vmatprep.subr.mxu0 0.0
    %4831 = vmatpush1.msra.mxu0 0.0
    %4832 = vmatprep.subr.mxu0 0.0
    %4833 = vmatpush1.msra.mxu0 0.0
    %4834 = vmatprep.subr.mxu0 0.0
    %4835 = vmatpush1.msra.mxu0 0.0
    %4836 = vmatprep.subr.mxu0 0.0
    %4837 = vmatpush1.msra.mxu0 0.0
    %4838 = vmatprep.subr.mxu0 0.0
    %4839 = vmatpush1.msra.mxu0 0.0
    %4840 = vmatprep.subr.mxu0 0.0
    %4841 = vmatpush1.msra.mxu0 0.0
    %4842 = vmatprep.subr.mxu0 0.0
    %4843 = vmatpush1.msra.mxu0 0.0
    %4844 = vmatprep.subr.mxu0 0.0
    %4845 = vmatpush1.msra.mxu0 0.0
    %4846 = vmatprep.subr.mxu0 0.0
    %4847 = vmatpush1.msra.mxu0 0.0
    %4848 = vmatprep.subr.mxu0 0.0
    %4849 = vmatpush1.msra.mxu0 0.0
    %4850 = vmatprep.subr.mxu0 0.0
    %4851 = vmatpush1.msra.mxu0 0.0
    %4852 = vmatprep.subr.mxu0 0.0
    %4853 = vmatpush1.msra.mxu0 0.0
    %4854 = vmatprep.subr.mxu0 0.0
    %4855 = vmatpush1.msra.mxu0 0.0
    %4856 = vmatprep.mubr.f32.mxu0 0.0
    %v4857 = vand.u32 %v4324, 4294901760
    %4858 = vmatmul.mubr.f32.gmra.mrb[0].mxu0 %v4857
    %v4859 = vpop.f32.mrb[0].mxu0
    %v4860 = vadd.f32 %v4781, %v4859
    %v4861 = vpop.f32.mrb[0].mxu0
    %4862 = vdwg.mxu0
    %v4864 = vsel %vm62, %v3247, 0
    %4866 = vmatprep.subr.mxu0 0.0
    %v4867 = vand.u32 %v51, 4294901760
    %4868 = vmatpush1.msra.mxu0 %v4867
    %4869 = vmatprep.subr.mxu0 0.0
    %v4870 = vand.u32 %v52, 4294901760
    %4871 = vmatpush1.msra.mxu0 %v4870
    %4872 = vmatprep.subr.mxu0 0.0
    %v4873 = vand.u32 %v53, 4294901760
    %4874 = vmatpush1.msra.mxu0 %v4873
    %4875 = vmatprep.subr.mxu0 0.0
    %v4876 = vand.u32 %v54, 4294901760
    %4877 = vmatpush1.msra.mxu0 %v4876
    %4878 = vmatprep.subr.mxu0 0.0
    %4879 = vmatpush1.msra.mxu0 0.0
    %4880 = vmatprep.subr.mxu0 0.0
    %4881 = vmatpush1.msra.mxu0 0.0
    %4882 = vmatprep.subr.mxu0 0.0
    %4883 = vmatpush1.msra.mxu0 0.0
    %4884 = vmatprep.subr.mxu0 0.0
    %4885 = vmatpush1.msra.mxu0 0.0
    %4886 = vmatprep.subr.mxu0 0.0
    %4887 = vmatpush1.msra.mxu0 0.0
    %4888 = vmatprep.subr.mxu0 0.0
    %4889 = vmatpush1.msra.mxu0 0.0
    %4890 = vmatprep.subr.mxu0 0.0
    %4891 = vmatpush1.msra.mxu0 0.0
    %4892 = vmatprep.subr.mxu0 0.0
    %4893 = vmatpush1.msra.mxu0 0.0
    %4894 = vmatprep.subr.mxu0 0.0
    %4895 = vmatpush1.msra.mxu0 0.0
    %4896 = vmatprep.subr.mxu0 0.0
    %4897 = vmatpush1.msra.mxu0 0.0
    %4898 = vmatprep.subr.mxu0 0.0
    %4899 = vmatpush1.msra.mxu0 0.0
    %4900 = vmatprep.subr.mxu0 0.0
    %4901 = vmatpush1.msra.mxu0 0.0
    %4902 = vmatprep.subr.mxu0 0.0
    %4903 = vmatpush1.msra.mxu0 0.0
    %4904 = vmatprep.subr.mxu0 0.0
    %4905 = vmatpush1.msra.mxu0 0.0
    %4906 = vmatprep.subr.mxu0 0.0
    %4907 = vmatpush1.msra.mxu0 0.0
    %4908 = vmatprep.subr.mxu0 0.0
    %4909 = vmatpush1.msra.mxu0 0.0
    %4910 = vmatprep.subr.mxu0 0.0
    %4911 = vmatpush1.msra.mxu0 0.0
    %4912 = vmatprep.subr.mxu0 0.0
    %4913 = vmatpush1.msra.mxu0 0.0
    %4914 = vmatprep.subr.mxu0 0.0
    %4915 = vmatpush1.msra.mxu0 0.0
    %4916 = vmatprep.subr.mxu0 0.0
    %4917 = vmatpush1.msra.mxu0 0.0
    %4918 = vmatprep.subr.mxu0 0.0
    %4919 = vmatpush1.msra.mxu0 0.0
    %4920 = vmatprep.subr.mxu0 0.0
    %4921 = vmatpush1.msra.mxu0 0.0
    %4922 = vmatprep.subr.mxu0 0.0
    %4923 = vmatpush1.msra.mxu0 0.0
    %4924 = vmatprep.subr.mxu0 0.0
    %4925 = vmatpush1.msra.mxu0 0.0
    %4926 = vmatprep.subr.mxu0 0.0
    %4927 = vmatpush1.msra.mxu0 0.0
    %4928 = vmatprep.subr.mxu0 0.0
    %4929 = vmatpush1.msra.mxu0 0.0
    %4930 = vmatprep.subr.mxu0 0.0
    %4931 = vmatpush1.msra.mxu0 0.0
    %4932 = vmatprep.subr.mxu0 0.0
    %4933 = vmatpush1.msra.mxu0 0.0
    %4934 = vmatprep.mubr.f32.mxu0 0.0
    %v4935 = vand.u32 %v4864, 4294901760
    %v4936 = vsub.f32 %v4864, %v4935
    %v4937 = vand.u32 %v4936, 4294901760
    %v4938 = vsub.f32 %v4936, %v4937
    %v4939 = vand.u32 %v4938, 4294901760
    %4940 = vmatmul.mubr.f32.gmra.mrb[0].mxu0 %v4939
    %v4941 = vpop.f32.mrb[0].mxu0
    %v4942 = vadd.f32 %v4321, %v4941
    %v4943 = vpop.f32.mrb[0].mxu0
    %4944 = vdwg.mxu0
    %4945 = vmatprep.subr.mxu0 0.0
    %v4946 = vand.u32 %v51, 4294901760
    %v4947 = vsub.f32 %v51, %v4946
    %v4948 = vand.u32 %v4947, 4294901760
    %v4949 = vsub.f32 %v4947, %v4948
    %v4950 = vand.u32 %v4949, 4294901760
    %4951 = vmatpush1.msra.mxu0 %v4950
    %4952 = vmatprep.subr.mxu0 0.0
    %v4953 = vand.u32 %v52, 4294901760
    %v4954 = vsub.f32 %v52, %v4953
    %v4955 = vand.u32 %v4954, 4294901760
    %v4956 = vsub.f32 %v4954, %v4955
    %v4957 = vand.u32 %v4956, 4294901760
    %4958 = vmatpush1.msra.mxu0 %v4957
    %4959 = vmatprep.subr.mxu0 0.0
    %v4960 = vand.u32 %v53, 4294901760
    %v4961 = vsub.f32 %v53, %v4960
    %v4962 = vand.u32 %v4961, 4294901760
    %v4963 = vsub.f32 %v4961, %v4962
    %v4964 = vand.u32 %v4963, 4294901760
    %4965 = vmatpush1.msra.mxu0 %v4964
    %4966 = vmatprep.subr.mxu0 0.0
    %v4967 = vand.u32 %v54, 4294901760
    %v4968 = vsub.f32 %v54, %v4967
    %v4969 = vand.u32 %v4968, 4294901760
    %v4970 = vsub.f32 %v4968, %v4969
    %v4971 = vand.u32 %v4970, 4294901760
    %4972 = vmatpush1.msra.mxu0 %v4971
    %4973 = vmatprep.subr.mxu0 0.0
    %4974 = vmatpush1.msra.mxu0 0.0
    %4975 = vmatprep.subr.mxu0 0.0
    %4976 = vmatpush1.msra.mxu0 0.0
    %4977 = vmatprep.subr.mxu0 0.0
    %4978 = vmatpush1.msra.mxu0 0.0
    %4979 = vmatprep.subr.mxu0 0.0
    %4980 = vmatpush1.msra.mxu0 0.0
    %4981 = vmatprep.subr.mxu0 0.0
    %4982 = vmatpush1.msra.mxu0 0.0
    %4983 = vmatprep.subr.mxu0 0.0
    %4984 = vmatpush1.msra.mxu0 0.0
    %4985 = vmatprep.subr.mxu0 0.0
    %4986 = vmatpush1.msra.mxu0 0.0
    %4987 = vmatprep.subr.mxu0 0.0
    %4988 = vmatpush1.msra.mxu0 0.0
    %4989 = vmatprep.subr.mxu0 0.0
    %4990 = vmatpush1.msra.mxu0 0.0
    %4991 = vmatprep.subr.mxu0 0.0
    %4992 = vmatpush1.msra.mxu0 0.0
    %4993 = vmatprep.subr.mxu0 0.0
    %4994 = vmatpush1.msra.mxu0 0.0
    %4995 = vmatprep.subr.mxu0 0.0
    %4996 = vmatpush1.msra.mxu0 0.0
    %4997 = vmatprep.subr.mxu0 0.0
    %4998 = vmatpush1.msra.mxu0 0.0
    %4999 = vmatprep.subr.mxu0 0.0
    %5000 = vmatpush1.msra.mxu0 0.0
    %5001 = vmatprep.subr.mxu0 0.0
    %5002 = vmatpush1.msra.mxu0 0.0
    %5003 = vmatprep.subr.mxu0 0.0
    %5004 = vmatpush1.msra.mxu0 0.0
    %5005 = vmatprep.subr.mxu0 0.0
    %5006 = vmatpush1.msra.mxu0 0.0
    %5007 = vmatprep.subr.mxu0 0.0
    %5008 = vmatpush1.msra.mxu0 0.0
    %5009 = vmatprep.subr.mxu0 0.0
    %5010 = vmatpush1.msra.mxu0 0.0
    %5011 = vmatprep.subr.mxu0 0.0
    %5012 = vmatpush1.msra.mxu0 0.0
    %5013 = vmatprep.subr.mxu0 0.0
    %5014 = vmatpush1.msra.mxu0 0.0
    %5015 = vmatprep.subr.mxu0 0.0
    %5016 = vmatpush1.msra.mxu0 0.0
    %5017 = vmatprep.subr.mxu0 0.0
    %5018 = vmatpush1.msra.mxu0 0.0
    %5019 = vmatprep.subr.mxu0 0.0
    %5020 = vmatpush1.msra.mxu0 0.0
    %5021 = vmatprep.subr.mxu0 0.0
    %5022 = vmatpush1.msra.mxu0 0.0
    %5023 = vmatprep.subr.mxu0 0.0
    %5024 = vmatpush1.msra.mxu0 0.0
    %5025 = vmatprep.subr.mxu0 0.0
    %5026 = vmatpush1.msra.mxu0 0.0
    %5027 = vmatprep.subr.mxu0 0.0
    %5028 = vmatpush1.msra.mxu0 0.0
    %5029 = vmatprep.mubr.f32.mxu0 0.0
    %v5030 = vand.u32 %v4864, 4294901760
    %5031 = vmatmul.mubr.f32.gmra.mrb[0].mxu0 %v5030
    %v5032 = vpop.f32.mrb[0].mxu0
    %v5033 = vadd.f32 %v4942, %v5032
    %v5034 = vpop.f32.mrb[0].mxu0
    %5035 = vdwg.mxu0
    %5036 = vmatprep.subr.mxu0 0.0
    %v5037 = vand.u32 %v51, 4294901760
    %v5038 = vsub.f32 %v51, %v5037
    %5039 = vmatpush1.msra.mxu0 %v5038
    %5040 = vmatprep.subr.mxu0 0.0
    %v5041 = vand.u32 %v52, 4294901760
    %v5042 = vsub.f32 %v52, %v5041
    %5043 = vmatpush1.msra.mxu0 %v5042
    %5044 = vmatprep.subr.mxu0 0.0
    %v5045 = vand.u32 %v53, 4294901760
    %v5046 = vsub.f32 %v53, %v5045
    %5047 = vmatpush1.msra.mxu0 %v5046
    %5048 = vmatprep.subr.mxu0 0.0
    %v5049 = vand.u32 %v54, 4294901760
    %v5050 = vsub.f32 %v54, %v5049
    %5051 = vmatpush1.msra.mxu0 %v5050
    %5052 = vmatprep.subr.mxu0 0.0
    %5053 = vmatpush1.msra.mxu0 0.0
    %5054 = vmatprep.subr.mxu0 0.0
    %5055 = vmatpush1.msra.mxu0 0.0
    %5056 = vmatprep.subr.mxu0 0.0
    %5057 = vmatpush1.msra.mxu0 0.0
    %5058 = vmatprep.subr.mxu0 0.0
    %5059 = vmatpush1.msra.mxu0 0.0
    %5060 = vmatprep.subr.mxu0 0.0
    %5061 = vmatpush1.msra.mxu0 0.0
    %5062 = vmatprep.subr.mxu0 0.0
    %5063 = vmatpush1.msra.mxu0 0.0
    %5064 = vmatprep.subr.mxu0 0.0
    %5065 = vmatpush1.msra.mxu0 0.0
    %5066 = vmatprep.subr.mxu0 0.0
    %5067 = vmatpush1.msra.mxu0 0.0
    %5068 = vmatprep.subr.mxu0 0.0
    %5069 = vmatpush1.msra.mxu0 0.0
    %5070 = vmatprep.subr.mxu0 0.0
    %5071 = vmatpush1.msra.mxu0 0.0
    %5072 = vmatprep.subr.mxu0 0.0
    %5073 = vmatpush1.msra.mxu0 0.0
    %5074 = vmatprep.subr.mxu0 0.0
    %5075 = vmatpush1.msra.mxu0 0.0
    %5076 = vmatprep.subr.mxu0 0.0
    %5077 = vmatpush1.msra.mxu0 0.0
    %5078 = vmatprep.subr.mxu0 0.0
    %5079 = vmatpush1.msra.mxu0 0.0
    %5080 = vmatprep.subr.mxu0 0.0
    %5081 = vmatpush1.msra.mxu0 0.0
    %5082 = vmatprep.subr.mxu0 0.0
    %5083 = vmatpush1.msra.mxu0 0.0
    %5084 = vmatprep.subr.mxu0 0.0
    %5085 = vmatpush1.msra.mxu0 0.0
    %5086 = vmatprep.subr.mxu0 0.0
    %5087 = vmatpush1.msra.mxu0 0.0
    %5088 = vmatprep.subr.mxu0 0.0
    %5089 = vmatpush1.msra.mxu0 0.0
    %5090 = vmatprep.subr.mxu0 0.0
    %5091 = vmatpush1.msra.mxu0 0.0
    %5092 = vmatprep.subr.mxu0 0.0
    %5093 = vmatpush1.msra.mxu0 0.0
    %5094 = vmatprep.subr.mxu0 0.0
    %5095 = vmatpush1.msra.mxu0 0.0
    %5096 = vmatprep.subr.mxu0 0.0
    %5097 = vmatpush1.msra.mxu0 0.0
    %5098 = vmatprep.subr.mxu0 0.0
    %5099 = vmatpush1.msra.mxu0 0.0
    %5100 = vmatprep.subr.mxu0 0.0
    %5101 = vmatpush1.msra.mxu0 0.0
    %5102 = vmatprep.subr.mxu0 0.0
    %5103 = vmatpush1.msra.mxu0 0.0
    %5104 = vmatprep.subr.mxu0 0.0
    %5105 = vmatpush1.msra.mxu0 0.0
    %5106 = vmatprep.subr.mxu0 0.0
    %5107 = vmatpush1.msra.mxu0 0.0
    %5108 = vmatprep.mubr.f32.mxu0 0.0
    %v5109 = vand.u32 %v4864, 4294901760
    %v5110 = vsub.f32 %v4864, %v5109
    %5111 = vmatmul.mubr.f32.gmra.mrb[0].mxu0 %v5110
    %v5112 = vpop.f32.mrb[0].mxu0
    %v5113 = vadd.f32 %v5033, %v5112
    %v5114 = vpop.f32.mrb[0].mxu0
    %5115 = vdwg.mxu0
    %5116 = vmatprep.subr.mxu0 0.0
    %v5117 = vand.u32 %v51, 4294901760
    %5118 = vmatpush1.msra.mxu0 %v5117
    %5119 = vmatprep.subr.mxu0 0.0
    %v5120 = vand.u32 %v52, 4294901760
    %5121 = vmatpush1.msra.mxu0 %v5120
    %5122 = vmatprep.subr.mxu0 0.0
    %v5123 = vand.u32 %v53, 4294901760
    %5124 = vmatpush1.msra.mxu0 %v5123
    %5125 = vmatprep.subr.mxu0 0.0
    %v5126 = vand.u32 %v54, 4294901760
    %5127 = vmatpush1.msra.mxu0 %v5126
    %5128 = vmatprep.subr.mxu0 0.0
    %5129 = vmatpush1.msra.mxu0 0.0
    %5130 = vmatprep.subr.mxu0 0.0
    %5131 = vmatpush1.msra.mxu0 0.0
    %5132 = vmatprep.subr.mxu0 0.0
    %5133 = vmatpush1.msra.mxu0 0.0
    %5134 = vmatprep.subr.mxu0 0.0
    %5135 = vmatpush1.msra.mxu0 0.0
    %5136 = vmatprep.subr.mxu0 0.0
    %5137 = vmatpush1.msra.mxu0 0.0
    %5138 = vmatprep.subr.mxu0 0.0
    %5139 = vmatpush1.msra.mxu0 0.0
    %5140 = vmatprep.subr.mxu0 0.0
    %5141 = vmatpush1.msra.mxu0 0.0
    %5142 = vmatprep.subr.mxu0 0.0
    %5143 = vmatpush1.msra.mxu0 0.0
    %5144 = vmatprep.subr.mxu0 0.0
    %5145 = vmatpush1.msra.mxu0 0.0
    %5146 = vmatprep.subr.mxu0 0.0
    %5147 = vmatpush1.msra.mxu0 0.0
    %5148 = vmatprep.subr.mxu0 0.0
    %5149 = vmatpush1.msra.mxu0 0.0
    %5150 = vmatprep.subr.mxu0 0.0
    %5151 = vmatpush1.msra.mxu0 0.0
    %5152 = vmatprep.subr.mxu0 0.0
    %5153 = vmatpush1.msra.mxu0 0.0
    %5154 = vmatprep.subr.mxu0 0.0
    %5155 = vmatpush1.msra.mxu0 0.0
    %5156 = vmatprep.subr.mxu0 0.0
    %5157 = vmatpush1.msra.mxu0 0.0
    %5158 = vmatprep.subr.mxu0 0.0
    %5159 = vmatpush1.msra.mxu0 0.0
    %5160 = vmatprep.subr.mxu0 0.0
    %5161 = vmatpush1.msra.mxu0 0.0
    %5162 = vmatprep.subr.mxu0 0.0
    %5163 = vmatpush1.msra.mxu0 0.0
    %5164 = vmatprep.subr.mxu0 0.0
    %5165 = vmatpush1.msra.mxu0 0.0
    %5166 = vmatprep.subr.mxu0 0.0
    %5167 = vmatpush1.msra.mxu0 0.0
    %5168 = vmatprep.subr.mxu0 0.0
    %5169 = vmatpush1.msra.mxu0 0.0
    %5170 = vmatprep.subr.mxu0 0.0
    %5171 = vmatpush1.msra.mxu0 0.0
    %5172 = vmatprep.subr.mxu0 0.0
    %5173 = vmatpush1.msra.mxu0 0.0
    %5174 = vmatprep.subr.mxu0 0.0
    %5175 = vmatpush1.msra.mxu0 0.0
    %5176 = vmatprep.subr.mxu0 0.0
    %5177 = vmatpush1.msra.mxu0 0.0
    %5178 = vmatprep.subr.mxu0 0.0
    %5179 = vmatpush1.msra.mxu0 0.0
    %5180 = vmatprep.subr.mxu0 0.0
    %5181 = vmatpush1.msra.mxu0 0.0
    %5182 = vmatprep.subr.mxu0 0.0
    %5183 = vmatpush1.msra.mxu0 0.0
    %5184 = vmatprep.mubr.f32.mxu0 0.0
    %v5185 = vand.u32 %v4864, 4294901760
    %v5186 = vsub.f32 %v4864, %v5185
    %v5187 = vand.u32 %v5186, 4294901760
    %5188 = vmatmul.mubr.f32.gmra.mrb[0].mxu0 %v5187
    %v5189 = vpop.f32.mrb[0].mxu0
    %v5190 = vadd.f32 %v5113, %v5189
    %v5191 = vpop.f32.mrb[0].mxu0
    %5192 = vdwg.mxu0
    %5193 = vmatprep.subr.mxu0 0.0
    %v5194 = vand.u32 %v51, 4294901760
    %v5195 = vsub.f32 %v51, %v5194
    %v5196 = vand.u32 %v5195, 4294901760
    %5197 = vmatpush1.msra.mxu0 %v5196
    %5198 = vmatprep.subr.mxu0 0.0
    %v5199 = vand.u32 %v52, 4294901760
    %v5200 = vsub.f32 %v52, %v5199
    %v5201 = vand.u32 %v5200, 4294901760
    %5202 = vmatpush1.msra.mxu0 %v5201
    %5203 = vmatprep.subr.mxu0 0.0
    %v5204 = vand.u32 %v53, 4294901760
    %v5205 = vsub.f32 %v53, %v5204
    %v5206 = vand.u32 %v5205, 4294901760
    %5207 = vmatpush1.msra.mxu0 %v5206
    %5208 = vmatprep.subr.mxu0 0.0
    %v5209 = vand.u32 %v54, 4294901760
    %v5210 = vsub.f32 %v54, %v5209
    %v5211 = vand.u32 %v5210, 4294901760
    %5212 = vmatpush1.msra.mxu0 %v5211
    %5213 = vmatprep.subr.mxu0 0.0
    %5214 = vmatpush1.msra.mxu0 0.0
    %5215 = vmatprep.subr.mxu0 0.0
    %5216 = vmatpush1.msra.mxu0 0.0
    %5217 = vmatprep.subr.mxu0 0.0
    %5218 = vmatpush1.msra.mxu0 0.0
    %5219 = vmatprep.subr.mxu0 0.0
    %5220 = vmatpush1.msra.mxu0 0.0
    %5221 = vmatprep.subr.mxu0 0.0
    %5222 = vmatpush1.msra.mxu0 0.0
    %5223 = vmatprep.subr.mxu0 0.0
    %5224 = vmatpush1.msra.mxu0 0.0
    %5225 = vmatprep.subr.mxu0 0.0
    %5226 = vmatpush1.msra.mxu0 0.0
    %5227 = vmatprep.subr.mxu0 0.0
    %5228 = vmatpush1.msra.mxu0 0.0
    %5229 = vmatprep.subr.mxu0 0.0
    %5230 = vmatpush1.msra.mxu0 0.0
    %5231 = vmatprep.subr.mxu0 0.0
    %5232 = vmatpush1.msra.mxu0 0.0
    %5233 = vmatprep.subr.mxu0 0.0
    %5234 = vmatpush1.msra.mxu0 0.0
    %5235 = vmatprep.subr.mxu0 0.0
    %5236 = vmatpush1.msra.mxu0 0.0
    %5237 = vmatprep.subr.mxu0 0.0
    %5238 = vmatpush1.msra.mxu0 0.0
    %5239 = vmatprep.subr.mxu0 0.0
    %5240 = vmatpush1.msra.mxu0 0.0
    %5241 = vmatprep.subr.mxu0 0.0
    %5242 = vmatpush1.msra.mxu0 0.0
    %5243 = vmatprep.subr.mxu0 0.0
    %5244 = vmatpush1.msra.mxu0 0.0
    %5245 = vmatprep.subr.mxu0 0.0
    %5246 = vmatpush1.msra.mxu0 0.0
    %5247 = vmatprep.subr.mxu0 0.0
    %5248 = vmatpush1.msra.mxu0 0.0
    %5249 = vmatprep.subr.mxu0 0.0
    %5250 = vmatpush1.msra.mxu0 0.0
    %5251 = vmatprep.subr.mxu0 0.0
    %5252 = vmatpush1.msra.mxu0 0.0
    %5253 = vmatprep.subr.mxu0 0.0
    %5254 = vmatpush1.msra.mxu0 0.0
    %5255 = vmatprep.subr.mxu0 0.0
    %5256 = vmatpush1.msra.mxu0 0.0
    %5257 = vmatprep.subr.mxu0 0.0
    %5258 = vmatpush1.msra.mxu0 0.0
    %5259 = vmatprep.subr.mxu0 0.0
    %5260 = vmatpush1.msra.mxu0 0.0
    %5261 = vmatprep.subr.mxu0 0.0
    %5262 = vmatpush1.msra.mxu0 0.0
    %5263 = vmatprep.subr.mxu0 0.0
    %5264 = vmatpush1.msra.mxu0 0.0
    %5265 = vmatprep.subr.mxu0 0.0
    %5266 = vmatpush1.msra.mxu0 0.0
    %5267 = vmatprep.subr.mxu0 0.0
    %5268 = vmatpush1.msra.mxu0 0.0
    %5269 = vmatprep.mubr.f32.mxu0 0.0
    %v5270 = vand.u32 %v4864, 4294901760
    %5271 = vmatmul.mubr.f32.gmra.mrb[0].mxu0 %v5270
    %v5272 = vpop.f32.mrb[0].mxu0
    %v5273 = vadd.f32 %v5190, %v5272
    %v5274 = vpop.f32.mrb[0].mxu0
    %5275 = vdwg.mxu0
    %5276 = vmatprep.subr.mxu0 0.0
    %v5277 = vand.u32 %v51, 4294901760
    %5278 = vmatpush1.msra.mxu0 %v5277
    %5279 = vmatprep.subr.mxu0 0.0
    %v5280 = vand.u32 %v52, 4294901760
    %5281 = vmatpush1.msra.mxu0 %v5280
    %5282 = vmatprep.subr.mxu0 0.0
    %v5283 = vand.u32 %v53, 4294901760
    %5284 = vmatpush1.msra.mxu0 %v5283
    %5285 = vmatprep.subr.mxu0 0.0
    %v5286 = vand.u32 %v54, 4294901760
    %5287 = vmatpush1.msra.mxu0 %v5286
    %5288 = vmatprep.subr.mxu0 0.0
    %5289 = vmatpush1.msra.mxu0 0.0
    %5290 = vmatprep.subr.mxu0 0.0
    %5291 = vmatpush1.msra.mxu0 0.0
    %5292 = vmatprep.subr.mxu0 0.0
    %5293 = vmatpush1.msra.mxu0 0.0
    %5294 = vmatprep.subr.mxu0 0.0
    %5295 = vmatpush1.msra.mxu0 0.0
    %5296 = vmatprep.subr.mxu0 0.0
    %5297 = vmatpush1.msra.mxu0 0.0
    %5298 = vmatprep.subr.mxu0 0.0
    %5299 = vmatpush1.msra.mxu0 0.0
    %5300 = vmatprep.subr.mxu0 0.0
    %5301 = vmatpush1.msra.mxu0 0.0
    %5302 = vmatprep.subr.mxu0 0.0
    %5303 = vmatpush1.msra.mxu0 0.0
    %5304 = vmatprep.subr.mxu0 0.0
    %5305 = vmatpush1.msra.mxu0 0.0
    %5306 = vmatprep.subr.mxu0 0.0
    %5307 = vmatpush1.msra.mxu0 0.0
    %5308 = vmatprep.subr.mxu0 0.0
    %5309 = vmatpush1.msra.mxu0 0.0
    %5310 = vmatprep.subr.mxu0 0.0
    %5311 = vmatpush1.msra.mxu0 0.0
    %5312 = vmatprep.subr.mxu0 0.0
    %5313 = vmatpush1.msra.mxu0 0.0
    %5314 = vmatprep.subr.mxu0 0.0
    %5315 = vmatpush1.msra.mxu0 0.0
    %5316 = vmatprep.subr.mxu0 0.0
    %5317 = vmatpush1.msra.mxu0 0.0
    %5318 = vmatprep.subr.mxu0 0.0
    %5319 = vmatpush1.msra.mxu0 0.0
    %5320 = vmatprep.subr.mxu0 0.0
    %5321 = vmatpush1.msra.mxu0 0.0
    %5322 = vmatprep.subr.mxu0 0.0
    %5323 = vmatpush1.msra.mxu0 0.0
    %5324 = vmatprep.subr.mxu0 0.0
    %5325 = vmatpush1.msra.mxu0 0.0
    %5326 = vmatprep.subr.mxu0 0.0
    %5327 = vmatpush1.msra.mxu0 0.0
    %5328 = vmatprep.subr.mxu0 0.0
    %5329 = vmatpush1.msra.mxu0 0.0
    %5330 = vmatprep.subr.mxu0 0.0
    %5331 = vmatpush1.msra.mxu0 0.0
    %5332 = vmatprep.subr.mxu0 0.0
    %5333 = vmatpush1.msra.mxu0 0.0
    %5334 = vmatprep.subr.mxu0 0.0
    %5335 = vmatpush1.msra.mxu0 0.0
    %5336 = vmatprep.subr.mxu0 0.0
    %5337 = vmatpush1.msra.mxu0 0.0
    %5338 = vmatprep.subr.mxu0 0.0
    %5339 = vmatpush1.msra.mxu0 0.0
    %5340 = vmatprep.subr.mxu0 0.0
    %5341 = vmatpush1.msra.mxu0 0.0
    %5342 = vmatprep.subr.mxu0 0.0
    %5343 = vmatpush1.msra.mxu0 0.0
    %5344 = vmatprep.mubr.f32.mxu0 0.0
    %v5345 = vand.u32 %v4864, 4294901760
    %5346 = vmatmul.mubr.f32.gmra.mrb[0].mxu0 %v5345
    %v5347 = vpop.f32.mrb[0].mxu0
    %v5348 = vadd.f32 %v5273, %v5347
    %v5349 = vpop.f32.mrb[0].mxu0
    %5350 = vdwg.mxu0
    %v5352 = vsel %vm62, %v3781, 0
    %5354 = vmatprep.subr.mxu0 0.0
    %v5355 = vand.u32 %v51, 4294901760
    %5356 = vmatpush1.msra.mxu0 %v5355
    %5357 = vmatprep.subr.mxu0 0.0
    %v5358 = vand.u32 %v52, 4294901760
    %5359 = vmatpush1.msra.mxu0 %v5358
    %5360 = vmatprep.subr.mxu0 0.0
    %v5361 = vand.u32 %v53, 4294901760
    %5362 = vmatpush1.msra.mxu0 %v5361
    %5363 = vmatprep.subr.mxu0 0.0
    %v5364 = vand.u32 %v54, 4294901760
    %5365 = vmatpush1.msra.mxu0 %v5364
    %5366 = vmatprep.subr.mxu0 0.0
    %5367 = vmatpush1.msra.mxu0 0.0
    %5368 = vmatprep.subr.mxu0 0.0
    %5369 = vmatpush1.msra.mxu0 0.0
    %5370 = vmatprep.subr.mxu0 0.0
    %5371 = vmatpush1.msra.mxu0 0.0
    %5372 = vmatprep.subr.mxu0 0.0
    %5373 = vmatpush1.msra.mxu0 0.0
    %5374 = vmatprep.subr.mxu0 0.0
    %5375 = vmatpush1.msra.mxu0 0.0
    %5376 = vmatprep.subr.mxu0 0.0
    %5377 = vmatpush1.msra.mxu0 0.0
    %5378 = vmatprep.subr.mxu0 0.0
    %5379 = vmatpush1.msra.mxu0 0.0
    %5380 = vmatprep.subr.mxu0 0.0
    %5381 = vmatpush1.msra.mxu0 0.0
    %5382 = vmatprep.subr.mxu0 0.0
    %5383 = vmatpush1.msra.mxu0 0.0
    %5384 = vmatprep.subr.mxu0 0.0
    %5385 = vmatpush1.msra.mxu0 0.0
    %5386 = vmatprep.subr.mxu0 0.0
    %5387 = vmatpush1.msra.mxu0 0.0
    %5388 = vmatprep.subr.mxu0 0.0
    %5389 = vmatpush1.msra.mxu0 0.0
    %5390 = vmatprep.subr.mxu0 0.0
    %5391 = vmatpush1.msra.mxu0 0.0
    %5392 = vmatprep.subr.mxu0 0.0
    %5393 = vmatpush1.msra.mxu0 0.0
    %5394 = vmatprep.subr.mxu0 0.0
    %5395 = vmatpush1.msra.mxu0 0.0
    %5396 = vmatprep.subr.mxu0 0.0
    %5397 = vmatpush1.msra.mxu0 0.0
    %5398 = vmatprep.subr.mxu0 0.0
    %5399 = vmatpush1.msra.mxu0 0.0
    %5400 = vmatprep.subr.mxu0 0.0
    %5401 = vmatpush1.msra.mxu0 0.0
    %5402 = vmatprep.subr.mxu0 0.0
    %5403 = vmatpush1.msra.mxu0 0.0
    %5404 = vmatprep.subr.mxu0 0.0
    %5405 = vmatpush1.msra.mxu0 0.0
    %5406 = vmatprep.subr.mxu0 0.0
    %5407 = vmatpush1.msra.mxu0 0.0
    %5408 = vmatprep.subr.mxu0 0.0
    %5409 = vmatpush1.msra.mxu0 0.0
    %5410 = vmatprep.subr.mxu0 0.0
    %5411 = vmatpush1.msra.mxu0 0.0
    %5412 = vmatprep.subr.mxu0 0.0
    %5413 = vmatpush1.msra.mxu0 0.0
    %5414 = vmatprep.subr.mxu0 0.0
    %5415 = vmatpush1.msra.mxu0 0.0
    %5416 = vmatprep.subr.mxu0 0.0
    %5417 = vmatpush1.msra.mxu0 0.0
    %5418 = vmatprep.subr.mxu0 0.0
    %5419 = vmatpush1.msra.mxu0 0.0
    %5420 = vmatprep.subr.mxu0 0.0
    %5421 = vmatpush1.msra.mxu0 0.0
    %5422 = vmatprep.mubr.f32.mxu0 0.0
    %v5423 = vand.u32 %v5352, 4294901760
    %v5424 = vsub.f32 %v5352, %v5423
    %v5425 = vand.u32 %v5424, 4294901760
    %v5426 = vsub.f32 %v5424, %v5425
    %v5427 = vand.u32 %v5426, 4294901760
    %5428 = vmatmul.mubr.f32.gmra.mrb[0].mxu0 %v5427
    %v5429 = vpop.f32.mrb[0].mxu0
    %v5430 = vadd.f32 %v4860, %v5429
    %v5431 = vpop.f32.mrb[0].mxu0
    %5432 = vdwg.mxu0
    %5433 = vmatprep.subr.mxu0 0.0
    %v5434 = vand.u32 %v51, 4294901760
    %v5435 = vsub.f32 %v51, %v5434
    %v5436 = vand.u32 %v5435, 4294901760
    %v5437 = vsub.f32 %v5435, %v5436
    %v5438 = vand.u32 %v5437, 4294901760
    %5439 = vmatpush1.msra.mxu0 %v5438
    %5440 = vmatprep.subr.mxu0 0.0
    %v5441 = vand.u32 %v52, 4294901760
    %v5442 = vsub.f32 %v52, %v5441
    %v5443 = vand.u32 %v5442, 4294901760
    %v5444 = vsub.f32 %v5442, %v5443
    %v5445 = vand.u32 %v5444, 4294901760
    %5446 = vmatpush1.msra.mxu0 %v5445
    %5447 = vmatprep.subr.mxu0 0.0
    %v5448 = vand.u32 %v53, 4294901760
    %v5449 = vsub.f32 %v53, %v5448
    %v5450 = vand.u32 %v5449, 4294901760
    %v5451 = vsub.f32 %v5449, %v5450
    %v5452 = vand.u32 %v5451, 4294901760
    %5453 = vmatpush1.msra.mxu0 %v5452
    %5454 = vmatprep.subr.mxu0 0.0
    %v5455 = vand.u32 %v54, 4294901760
    %v5456 = vsub.f32 %v54, %v5455
    %v5457 = vand.u32 %v5456, 4294901760
    %v5458 = vsub.f32 %v5456, %v5457
    %v5459 = vand.u32 %v5458, 4294901760
    %5460 = vmatpush1.msra.mxu0 %v5459
    %5461 = vmatprep.subr.mxu0 0.0
    %5462 = vmatpush1.msra.mxu0 0.0
    %5463 = vmatprep.subr.mxu0 0.0
    %5464 = vmatpush1.msra.mxu0 0.0
    %5465 = vmatprep.subr.mxu0 0.0
    %5466 = vmatpush1.msra.mxu0 0.0
    %5467 = vmatprep.subr.mxu0 0.0
    %5468 = vmatpush1.msra.mxu0 0.0
    %5469 = vmatprep.subr.mxu0 0.0
    %5470 = vmatpush1.msra.mxu0 0.0
    %5471 = vmatprep.subr.mxu0 0.0
    %5472 = vmatpush1.msra.mxu0 0.0
    %5473 = vmatprep.subr.mxu0 0.0
    %5474 = vmatpush1.msra.mxu0 0.0
    %5475 = vmatprep.subr.mxu0 0.0
    %5476 = vmatpush1.msra.mxu0 0.0
    %5477 = vmatprep.subr.mxu0 0.0
    %5478 = vmatpush1.msra.mxu0 0.0
    %5479 = vmatprep.subr.mxu0 0.0
    %5480 = vmatpush1.msra.mxu0 0.0
    %5481 = vmatprep.subr.mxu0 0.0
    %5482 = vmatpush1.msra.mxu0 0.0
    %5483 = vmatprep.subr.mxu0 0.0
    %5484 = vmatpush1.msra.mxu0 0.0
    %5485 = vmatprep.subr.mxu0 0.0
    %5486 = vmatpush1.msra.mxu0 0.0
    %5487 = vmatprep.subr.mxu0 0.0
    %5488 = vmatpush1.msra.mxu0 0.0
    %5489 = vmatprep.subr.mxu0 0.0
    %5490 = vmatpush1.msra.mxu0 0.0
    %5491 = vmatprep.subr.mxu0 0.0
    %5492 = vmatpush1.msra.mxu0 0.0
    %5493 = vmatprep.subr.mxu0 0.0
    %5494 = vmatpush1.msra.mxu0 0.0
    %5495 = vmatprep.subr.mxu0 0.0
    %5496 = vmatpush1.msra.mxu0 0.0
    %5497 = vmatprep.subr.mxu0 0.0
    %5498 = vmatpush1.msra.mxu0 0.0
    %5499 = vmatprep.subr.mxu0 0.0
    %5500 = vmatpush1.msra.mxu0 0.0
    %5501 = vmatprep.subr.mxu0 0.0
    %5502 = vmatpush1.msra.mxu0 0.0
    %5503 = vmatprep.subr.mxu0 0.0
    %5504 = vmatpush1.msra.mxu0 0.0
    %5505 = vmatprep.subr.mxu0 0.0
    %5506 = vmatpush1.msra.mxu0 0.0
    %5507 = vmatprep.subr.mxu0 0.0
    %5508 = vmatpush1.msra.mxu0 0.0
    %5509 = vmatprep.subr.mxu0 0.0
    %5510 = vmatpush1.msra.mxu0 0.0
    %5511 = vmatprep.subr.mxu0 0.0
    %5512 = vmatpush1.msra.mxu0 0.0
    %5513 = vmatprep.subr.mxu0 0.0
    %5514 = vmatpush1.msra.mxu0 0.0
    %5515 = vmatprep.subr.mxu0 0.0
    %5516 = vmatpush1.msra.mxu0 0.0
    %5517 = vmatprep.mubr.f32.mxu0 0.0
    %v5518 = vand.u32 %v5352, 4294901760
    %5519 = vmatmul.mubr.f32.gmra.mrb[0].mxu0 %v5518
    %v5520 = vpop.f32.mrb[0].mxu0
    %v5521 = vadd.f32 %v5430, %v5520
    %v5522 = vpop.f32.mrb[0].mxu0
    %5523 = vdwg.mxu0
    %5524 = vmatprep.subr.mxu0 0.0
    %v5525 = vand.u32 %v51, 4294901760
    %v5526 = vsub.f32 %v51, %v5525
    %5527 = vmatpush1.msra.mxu0 %v5526
    %5528 = vmatprep.subr.mxu0 0.0
    %v5529 = vand.u32 %v52, 4294901760
    %v5530 = vsub.f32 %v52, %v5529
    %5531 = vmatpush1.msra.mxu0 %v5530
    %5532 = vmatprep.subr.mxu0 0.0
    %v5533 = vand.u32 %v53, 4294901760
    %v5534 = vsub.f32 %v53, %v5533
    %5535 = vmatpush1.msra.mxu0 %v5534
    %5536 = vmatprep.subr.mxu0 0.0
    %v5537 = vand.u32 %v54, 4294901760
    %v5538 = vsub.f32 %v54, %v5537
    %5539 = vmatpush1.msra.mxu0 %v5538
    %5540 = vmatprep.subr.mxu0 0.0
    %5541 = vmatpush1.msra.mxu0 0.0
    %5542 = vmatprep.subr.mxu0 0.0
    %5543 = vmatpush1.msra.mxu0 0.0
    %5544 = vmatprep.subr.mxu0 0.0
    %5545 = vmatpush1.msra.mxu0 0.0
    %5546 = vmatprep.subr.mxu0 0.0
    %5547 = vmatpush1.msra.mxu0 0.0
    %5548 = vmatprep.subr.mxu0 0.0
    %5549 = vmatpush1.msra.mxu0 0.0
    %5550 = vmatprep.subr.mxu0 0.0
    %5551 = vmatpush1.msra.mxu0 0.0
    %5552 = vmatprep.subr.mxu0 0.0
    %5553 = vmatpush1.msra.mxu0 0.0
    %5554 = vmatprep.subr.mxu0 0.0
    %5555 = vmatpush1.msra.mxu0 0.0
    %5556 = vmatprep.subr.mxu0 0.0
    %5557 = vmatpush1.msra.mxu0 0.0
    %5558 = vmatprep.subr.mxu0 0.0
    %5559 = vmatpush1.msra.mxu0 0.0
    %5560 = vmatprep.subr.mxu0 0.0
    %5561 = vmatpush1.msra.mxu0 0.0
    %5562 = vmatprep.subr.mxu0 0.0
    %5563 = vmatpush1.msra.mxu0 0.0
    %5564 = vmatprep.subr.mxu0 0.0
    %5565 = vmatpush1.msra.mxu0 0.0
    %5566 = vmatprep.subr.mxu0 0.0
    %5567 = vmatpush1.msra.mxu0 0.0
    %5568 = vmatprep.subr.mxu0 0.0
    %5569 = vmatpush1.msra.mxu0 0.0
    %5570 = vmatprep.subr.mxu0 0.0
    %5571 = vmatpush1.msra.mxu0 0.0
    %5572 = vmatprep.subr.mxu0 0.0
    %5573 = vmatpush1.msra.mxu0 0.0
    %5574 = vmatprep.subr.mxu0 0.0
    %5575 = vmatpush1.msra.mxu0 0.0
    %5576 = vmatprep.subr.mxu0 0.0
    %5577 = vmatpush1.msra.mxu0 0.0
    %5578 = vmatprep.subr.mxu0 0.0
    %5579 = vmatpush1.msra.mxu0 0.0
    %5580 = vmatprep.subr.mxu0 0.0
    %5581 = vmatpush1.msra.mxu0 0.0
    %5582 = vmatprep.subr.mxu0 0.0
    %5583 = vmatpush1.msra.mxu0 0.0
    %5584 = vmatprep.subr.mxu0 0.0
    %5585 = vmatpush1.msra.mxu0 0.0
    %5586 = vmatprep.subr.mxu0 0.0
    %5587 = vmatpush1.msra.mxu0 0.0
    %5588 = vmatprep.subr.mxu0 0.0
    %5589 = vmatpush1.msra.mxu0 0.0
    %5590 = vmatprep.subr.mxu0 0.0
    %5591 = vmatpush1.msra.mxu0 0.0
    %5592 = vmatprep.subr.mxu0 0.0
    %5593 = vmatpush1.msra.mxu0 0.0
    %5594 = vmatprep.subr.mxu0 0.0
    %5595 = vmatpush1.msra.mxu0 0.0
    %5596 = vmatprep.mubr.f32.mxu0 0.0
    %v5597 = vand.u32 %v5352, 4294901760
    %v5598 = vsub.f32 %v5352, %v5597
    %5599 = vmatmul.mubr.f32.gmra.mrb[0].mxu0 %v5598
    %v5600 = vpop.f32.mrb[0].mxu0
    %v5601 = vadd.f32 %v5521, %v5600
    %v5602 = vpop.f32.mrb[0].mxu0
    %5603 = vdwg.mxu0
    %5604 = vmatprep.subr.mxu0 0.0
    %v5605 = vand.u32 %v51, 4294901760
    %5606 = vmatpush1.msra.mxu0 %v5605
    %5607 = vmatprep.subr.mxu0 0.0
    %v5608 = vand.u32 %v52, 4294901760
    %5609 = vmatpush1.msra.mxu0 %v5608
    %5610 = vmatprep.subr.mxu0 0.0
    %v5611 = vand.u32 %v53, 4294901760
    %5612 = vmatpush1.msra.mxu0 %v5611
    %5613 = vmatprep.subr.mxu0 0.0
    %v5614 = vand.u32 %v54, 4294901760
    %5615 = vmatpush1.msra.mxu0 %v5614
    %5616 = vmatprep.subr.mxu0 0.0
    %5617 = vmatpush1.msra.mxu0 0.0
    %5618 = vmatprep.subr.mxu0 0.0
    %5619 = vmatpush1.msra.mxu0 0.0
    %5620 = vmatprep.subr.mxu0 0.0
    %5621 = vmatpush1.msra.mxu0 0.0
    %5622 = vmatprep.subr.mxu0 0.0
    %5623 = vmatpush1.msra.mxu0 0.0
    %5624 = vmatprep.subr.mxu0 0.0
    %5625 = vmatpush1.msra.mxu0 0.0
    %5626 = vmatprep.subr.mxu0 0.0
    %5627 = vmatpush1.msra.mxu0 0.0
    %5628 = vmatprep.subr.mxu0 0.0
    %5629 = vmatpush1.msra.mxu0 0.0
    %5630 = vmatprep.subr.mxu0 0.0
    %5631 = vmatpush1.msra.mxu0 0.0
    %5632 = vmatprep.subr.mxu0 0.0
    %5633 = vmatpush1.msra.mxu0 0.0
    %5634 = vmatprep.subr.mxu0 0.0
    %5635 = vmatpush1.msra.mxu0 0.0
    %5636 = vmatprep.subr.mxu0 0.0
    %5637 = vmatpush1.msra.mxu0 0.0
    %5638 = vmatprep.subr.mxu0 0.0
    %5639 = vmatpush1.msra.mxu0 0.0
    %5640 = vmatprep.subr.mxu0 0.0
    %5641 = vmatpush1.msra.mxu0 0.0
    %5642 = vmatprep.subr.mxu0 0.0
    %5643 = vmatpush1.msra.mxu0 0.0
    %5644 = vmatprep.subr.mxu0 0.0
    %5645 = vmatpush1.msra.mxu0 0.0
    %5646 = vmatprep.subr.mxu0 0.0
    %5647 = vmatpush1.msra.mxu0 0.0
    %5648 = vmatprep.subr.mxu0 0.0
    %5649 = vmatpush1.msra.mxu0 0.0
    %5650 = vmatprep.subr.mxu0 0.0
    %5651 = vmatpush1.msra.mxu0 0.0
    %5652 = vmatprep.subr.mxu0 0.0
    %5653 = vmatpush1.msra.mxu0 0.0
    %5654 = vmatprep.subr.mxu0 0.0
    %5655 = vmatpush1.msra.mxu0 0.0
    %5656 = vmatprep.subr.mxu0 0.0
    %5657 = vmatpush1.msra.mxu0 0.0
    %5658 = vmatprep.subr.mxu0 0.0
    %5659 = vmatpush1.msra.mxu0 0.0
    %5660 = vmatprep.subr.mxu0 0.0
    %5661 = vmatpush1.msra.mxu0 0.0
    %5662 = vmatprep.subr.mxu0 0.0
    %5663 = vmatpush1.msra.mxu0 0.0
    %5664 = vmatprep.subr.mxu0 0.0
    %5665 = vmatpush1.msra.mxu0 0.0
    %5666 = vmatprep.subr.mxu0 0.0
    %5667 = vmatpush1.msra.mxu0 0.0
    %5668 = vmatprep.subr.mxu0 0.0
    %5669 = vmatpush1.msra.mxu0 0.0
    %5670 = vmatprep.subr.mxu0 0.0
    %5671 = vmatpush1.msra.mxu0 0.0
    %5672 = vmatprep.mubr.f32.mxu0 0.0
    %v5673 = vand.u32 %v5352, 4294901760
    %v5674 = vsub.f32 %v5352, %v5673
    %v5675 = vand.u32 %v5674, 4294901760
    %5676 = vmatmul.mubr.f32.gmra.mrb[0].mxu0 %v5675
    %v5677 = vpop.f32.mrb[0].mxu0
    %v5678 = vadd.f32 %v5601, %v5677
    %v5679 = vpop.f32.mrb[0].mxu0
    %5680 = vdwg.mxu0
    %5681 = vmatprep.subr.mxu0 0.0
    %v5682 = vand.u32 %v51, 4294901760
    %v5683 = vsub.f32 %v51, %v5682
    %v5684 = vand.u32 %v5683, 4294901760
    %5685 = vmatpush1.msra.mxu0 %v5684
    %5686 = vmatprep.subr.mxu0 0.0
    %v5687 = vand.u32 %v52, 4294901760
    %v5688 = vsub.f32 %v52, %v5687
    %v5689 = vand.u32 %v5688, 4294901760
    %5690 = vmatpush1.msra.mxu0 %v5689
    %5691 = vmatprep.subr.mxu0 0.0
    %v5692 = vand.u32 %v53, 4294901760
    %v5693 = vsub.f32 %v53, %v5692
    %v5694 = vand.u32 %v5693, 4294901760
    %5695 = vmatpush1.msra.mxu0 %v5694
    %5696 = vmatprep.subr.mxu0 0.0
    %v5697 = vand.u32 %v54, 4294901760
    %v5698 = vsub.f32 %v54, %v5697
    %v5699 = vand.u32 %v5698, 4294901760
    %5700 = vmatpush1.msra.mxu0 %v5699
    %5701 = vmatprep.subr.mxu0 0.0
    %5702 = vmatpush1.msra.mxu0 0.0
    %5703 = vmatprep.subr.mxu0 0.0
    %5704 = vmatpush1.msra.mxu0 0.0
    %5705 = vmatprep.subr.mxu0 0.0
    %5706 = vmatpush1.msra.mxu0 0.0
    %5707 = vmatprep.subr.mxu0 0.0
    %5708 = vmatpush1.msra.mxu0 0.0
    %5709 = vmatprep.subr.mxu0 0.0
    %5710 = vmatpush1.msra.mxu0 0.0
    %5711 = vmatprep.subr.mxu0 0.0
    %5712 = vmatpush1.msra.mxu0 0.0
    %5713 = vmatprep.subr.mxu0 0.0
    %5714 = vmatpush1.msra.mxu0 0.0
    %5715 = vmatprep.subr.mxu0 0.0
    %5716 = vmatpush1.msra.mxu0 0.0
    %5717 = vmatprep.subr.mxu0 0.0
    %5718 = vmatpush1.msra.mxu0 0.0
    %5719 = vmatprep.subr.mxu0 0.0
    %5720 = vmatpush1.msra.mxu0 0.0
    %5721 = vmatprep.subr.mxu0 0.0
    %5722 = vmatpush1.msra.mxu0 0.0
    %5723 = vmatprep.subr.mxu0 0.0
    %5724 = vmatpush1.msra.mxu0 0.0
    %5725 = vmatprep.subr.mxu0 0.0
    %5726 = vmatpush1.msra.mxu0 0.0
    %5727 = vmatprep.subr.mxu0 0.0
    %5728 = vmatpush1.msra.mxu0 0.0
    %5729 = vmatprep.subr.mxu0 0.0
    %5730 = vmatpush1.msra.mxu0 0.0
    %5731 = vmatprep.subr.mxu0 0.0
    %5732 = vmatpush1.msra.mxu0 0.0
    %5733 = vmatprep.subr.mxu0 0.0
    %5734 = vmatpush1.msra.mxu0 0.0
    %5735 = vmatprep.subr.mxu0 0.0
    %5736 = vmatpush1.msra.mxu0 0.0
    %5737 = vmatprep.subr.mxu0 0.0
    %5738 = vmatpush1.msra.mxu0 0.0
    %5739 = vmatprep.subr.mxu0 0.0
    %5740 = vmatpush1.msra.mxu0 0.0
    %5741 = vmatprep.subr.mxu0 0.0
    %5742 = vmatpush1.msra.mxu0 0.0
    %5743 = vmatprep.subr.mxu0 0.0
    %5744 = vmatpush1.msra.mxu0 0.0
    %5745 = vmatprep.subr.mxu0 0.0
    %5746 = vmatpush1.msra.mxu0 0.0
    %5747 = vmatprep.subr.mxu0 0.0
    %5748 = vmatpush1.msra.mxu0 0.0
    %5749 = vmatprep.subr.mxu0 0.0
    %5750 = vmatpush1.msra.mxu0 0.0
    %5751 = vmatprep.subr.mxu0 0.0
    %5752 = vmatpush1.msra.mxu0 0.0
    %5753 = vmatprep.subr.mxu0 0.0
    %5754 = vmatpush1.msra.mxu0 0.0
    %5755 = vmatprep.subr.mxu0 0.0
    %5756 = vmatpush1.msra.mxu0 0.0
    %5757 = vmatprep.mubr.f32.mxu0 0.0
    %v5758 = vand.u32 %v5352, 4294901760
    %5759 = vmatmul.mubr.f32.gmra.mrb[0].mxu0 %v5758
    %v5760 = vpop.f32.mrb[0].mxu0
    %v5761 = vadd.f32 %v5678, %v5760
    %v5762 = vpop.f32.mrb[0].mxu0
    %5763 = vdwg.mxu0
    %5764 = vmatprep.subr.mxu0 0.0
    %v5765 = vand.u32 %v51, 4294901760
    %5766 = vmatpush1.msra.mxu0 %v5765
    %5767 = vmatprep.subr.mxu0 0.0
    %v5768 = vand.u32 %v52, 4294901760
    %5769 = vmatpush1.msra.mxu0 %v5768
    %5770 = vmatprep.subr.mxu0 0.0
    %v5771 = vand.u32 %v53, 4294901760
    %5772 = vmatpush1.msra.mxu0 %v5771
    %5773 = vmatprep.subr.mxu0 0.0
    %v5774 = vand.u32 %v54, 4294901760
    %5775 = vmatpush1.msra.mxu0 %v5774
    %5776 = vmatprep.subr.mxu0 0.0
    %5777 = vmatpush1.msra.mxu0 0.0
    %5778 = vmatprep.subr.mxu0 0.0
    %5779 = vmatpush1.msra.mxu0 0.0
    %5780 = vmatprep.subr.mxu0 0.0
    %5781 = vmatpush1.msra.mxu0 0.0
    %5782 = vmatprep.subr.mxu0 0.0
    %5783 = vmatpush1.msra.mxu0 0.0
    %5784 = vmatprep.subr.mxu0 0.0
    %5785 = vmatpush1.msra.mxu0 0.0
    %5786 = vmatprep.subr.mxu0 0.0
    %5787 = vmatpush1.msra.mxu0 0.0
    %5788 = vmatprep.subr.mxu0 0.0
    %5789 = vmatpush1.msra.mxu0 0.0
    %5790 = vmatprep.subr.mxu0 0.0
    %5791 = vmatpush1.msra.mxu0 0.0
    %5792 = vmatprep.subr.mxu0 0.0
    %5793 = vmatpush1.msra.mxu0 0.0
    %5794 = vmatprep.subr.mxu0 0.0
    %5795 = vmatpush1.msra.mxu0 0.0
    %5796 = vmatprep.subr.mxu0 0.0
    %5797 = vmatpush1.msra.mxu0 0.0
    %5798 = vmatprep.subr.mxu0 0.0
    %5799 = vmatpush1.msra.mxu0 0.0
    %5800 = vmatprep.subr.mxu0 0.0
    %5801 = vmatpush1.msra.mxu0 0.0
    %5802 = vmatprep.subr.mxu0 0.0
    %5803 = vmatpush1.msra.mxu0 0.0
    %5804 = vmatprep.subr.mxu0 0.0
    %5805 = vmatpush1.msra.mxu0 0.0
    %5806 = vmatprep.subr.mxu0 0.0
    %5807 = vmatpush1.msra.mxu0 0.0
    %5808 = vmatprep.subr.mxu0 0.0
    %5809 = vmatpush1.msra.mxu0 0.0
    %5810 = vmatprep.subr.mxu0 0.0
    %5811 = vmatpush1.msra.mxu0 0.0
    %5812 = vmatprep.subr.mxu0 0.0
    %5813 = vmatpush1.msra.mxu0 0.0
    %5814 = vmatprep.subr.mxu0 0.0
    %5815 = vmatpush1.msra.mxu0 0.0
    %5816 = vmatprep.subr.mxu0 0.0
    %5817 = vmatpush1.msra.mxu0 0.0
    %5818 = vmatprep.subr.mxu0 0.0
    %5819 = vmatpush1.msra.mxu0 0.0
    %5820 = vmatprep.subr.mxu0 0.0
    %5821 = vmatpush1.msra.mxu0 0.0
    %5822 = vmatprep.subr.mxu0 0.0
    %5823 = vmatpush1.msra.mxu0 0.0
    %5824 = vmatprep.subr.mxu0 0.0
    %5825 = vmatpush1.msra.mxu0 0.0
    %5826 = vmatprep.subr.mxu0 0.0
    %5827 = vmatpush1.msra.mxu0 0.0
    %5828 = vmatprep.subr.mxu0 0.0
    %5829 = vmatpush1.msra.mxu0 0.0
    %5830 = vmatprep.subr.mxu0 0.0
    %5831 = vmatpush1.msra.mxu0 0.0
    %5832 = vmatprep.mubr.f32.mxu0 0.0
    %v5833 = vand.u32 %v5352, 4294901760
    %5834 = vmatmul.mubr.f32.gmra.mrb[0].mxu0 %v5833
    %v5835 = vpop.f32.mrb[0].mxu0
    %v5836 = vadd.f32 %v5761, %v5835
    %v5837 = vpop.f32.mrb[0].mxu0
    %5838 = vdwg.mxu0
    %v5839 = vlaneseq
    %v5840 = vshrl.u32 %v5839, 7
    %v5841 = vsub.s32 0, %v5840
    %v5842 = vrot.slane %v57, %v5841
    %v5843 = vadd.f32 %v5348, %v5842
    %v5844 = vadd.f32 %v5836, %v5842
    %v5845 = vlaneseq
    %v5846 = vshrl.u32 %v5845, 7
    %v5847 = vsub.s32 %v2320, %v5846
    %v5848 = vrot.slane %v2724, %v5847
    %v5849 = vadd.s32 %v2315, 4294967280
    %v5850 = vlaneseq
    %v5851 = vshrl.u32 %v5850, 7
    %v5852 = vsub.s32 %v5849, %v5851
    %v5853 = vrot.slane %v2727, %v5852
    %vm5854 = vcmask 195712
    %v5855 = vsel %vm5854, %v5853, %v5848
    %v5856 = vlaneseq
    %v5857 = vshrl.u32 %v5856, 7
    %v5858 = vsub.s32 %v2320, %v5857
    %v5859 = vrot.slane %v2730, %v5858
    %v5860 = vlaneseq
    %v5861 = vshrl.u32 %v5860, 7
    %v5862 = vsub.s32 %v5849, %v5861
    %v5863 = vrot.slane %v2733, %v5862
    %v5864 = vsel %vm5854, %v5863, %v5859
    %v5865 = vlaneseq
    %v5866 = vshrl.u32 %v5865, 7
    %v5867 = vsub.s32 %v2320, %v5866
    %v5868 = vrot.slane %v2736, %v5867
    %v5869 = vlaneseq
    %v5870 = vshrl.u32 %v5869, 7
    %v5871 = vsub.s32 %v5849, %v5870
    %v5872 = vrot.slane %v2739, %v5871
    %v5873 = vsel %vm5854, %v5872, %v5868
    %v5874 = vlaneseq
    %v5875 = vshrl.u32 %v5874, 7
    %v5876 = vsub.s32 %v2320, %v5875
    %v5877 = vrot.slane %v2742, %v5876
    %v5878 = vlaneseq
    %v5879 = vshrl.u32 %v5878, 7
    %v5880 = vsub.s32 %v5849, %v5879
    %v5881 = vrot.slane %v2745, %v5880
    %v5882 = vsel %vm5854, %v5881, %v5877
    %v5883 = vlaneseq
    %v5884 = vshrl.u32 %v5883, 7
    %v5885 = vsub.s32 %v2320, %v5884
    %v5886 = vrot.slane %v3260, %v5885
    %v5887 = vlaneseq
    %v5888 = vshrl.u32 %v5887, 7
    %v5889 = vsub.s32 %v5849, %v5888
    %v5890 = vrot.slane %v3263, %v5889
    %v5891 = vsel %vm5854, %v5890, %v5886
    %v5892 = vlaneseq
    %v5893 = vshrl.u32 %v5892, 7
    %v5894 = vsub.s32 %v2320, %v5893
    %v5895 = vrot.slane %v3266, %v5894
    %v5896 = vlaneseq
    %v5897 = vshrl.u32 %v5896, 7
    %v5898 = vsub.s32 %v5849, %v5897
    %v5899 = vrot.slane %v3269, %v5898
    %v5900 = vsel %vm5854, %v5899, %v5895
    %v5901 = vlaneseq
    %v5902 = vshrl.u32 %v5901, 7
    %v5903 = vsub.s32 %v2320, %v5902
    %v5904 = vrot.slane %v3272, %v5903
    %v5905 = vlaneseq
    %v5906 = vshrl.u32 %v5905, 7
    %v5907 = vsub.s32 %v5849, %v5906
    %v5908 = vrot.slane %v3275, %v5907
    %v5909 = vsel %vm5854, %v5908, %v5904
    %v5910 = vlaneseq
    %v5911 = vshrl.u32 %v5910, 7
    %v5912 = vsub.s32 %v2320, %v5911
    %v5913 = vrot.slane %v3278, %v5912
    %v5914 = vlaneseq
    %v5915 = vshrl.u32 %v5914, 7
    %v5916 = vsub.s32 %v5849, %v5915
    %v5917 = vrot.slane %v3281, %v5916
    %v5918 = vsel %vm5854, %v5917, %v5913
    %v5919 = vsel %vm2390, %v5864, %v5855
    %v5920 = vsel %vm2392, %v5873, %v5919
    %v5921 = vsel %vm2394, %v5882, %v5920
    %v5922 = vsel %vm2390, %v5900, %v5891
    %v5923 = vsel %vm2392, %v5909, %v5922
    %v5924 = vsel %vm2394, %v5918, %v5923
    %vm5927 = vcmask 64512
    %v5928 = vsel %vm5927, %v5843, %v5921
    %v5929 = vsel %vm5927, %v5844, %v5924
    %vm5930 = vcmask 171008
    %v5931 = vsel %vm5930, %v5928, 0.0
    %v5932 = vsel %vm5930, %v5929, 0.0
    %5933 = vst [vmem:[#allocation5] sm:$0xf] %v5931
    %5934 = vst [vmem:[#allocation5 + $0x4] sm:$0xf] %v5932
    // Predicated region
    $region18: #{tpu_custom_call.1} parent=1 // pred_check
      _
    $region19: #{tpu_custom_call.1} parent=1 // pred_check_branch
      %5936 = sbr.rel (0) target = $region21
    $region20: #{tpu_custom_call.1} parent=1 // pred_region
      %s5938 = ssub.s32 128, 128
      %5939 = vsyncadd [#allocation4], %s5938
      %s5940 = sshll.u32 [#allocation5], 4
      %s5941 = int_to_ptr.vmem [resolvable:$true] %s5940
      %5946 = dma.vmem_to_hbm [thread:$0]  %s5941, 128, %s3, [#allocation4], 64, 64, 4
    $region21: #{tpu_custom_call.1} parent=1 // pred_fallthru
      _
    // Predicated region
    $region22: #{tpu_custom_call.1} parent=1 // pred_check
      _
    $region23: #{tpu_custom_call.1} parent=1 // pred_check_branch
      %5948 = sbr.rel (0) target = $region25
    $region24: #{tpu_custom_call.1} parent=1 // pred_region
      %5949 = dma.done [#allocation4], 128
    $region25: #{tpu_custom_call.1} parent=1 // pred_fallthru
      _
    %5950 = vsyncpa [#allocation3], 1
    %5951 = vsyncpa [#allocation4], 1

</llo_original>
